<compile_context>
chip_gen: v5e
topology: v5e:2x2
jax: 0.10.0
libtpu: 0.0.40
codegen_flags: <defaults>
</compile_context>

<pallas_src>
import functools

import jax
import jax.numpy as jnp
from jax import lax
from jax.experimental import pallas as pl
from jax.experimental.pallas import tpu as pltpu


_TILE_BYTE_BUDGET = 2 * 1024 * 1024  # target f32 bytes for one input row-tile


def _pick_tile(total, target, multiple_of=1):
    """Largest divisor of `total` that is <= target and a multiple of `multiple_of`."""
    best = None
    for d in range(1, total + 1):
        if total % d or d % multiple_of:
            continue
        if d <= target:
            best = d
        else:
            if best is None:
                best = d  # smallest legal divisor if nothing fits the target
            break
    return best if best is not None else total


def _row_tile(height, width, channels, multiple_of=1):
    target = max(multiple_of, _TILE_BYTE_BUDGET // max(1, 4 * width * channels))
    return _pick_tile(height, target, multiple_of)


# ----------------------------------------------------------------------------
# Kernel 1: ConvTranspose2d(k=2, s=2) as a row-tiled matmul.
# ----------------------------------------------------------------------------
def _deconv2x2_kernel(x_ref, w_ref, b_ref, o_ref):
    # x_ref: (1, TH, W, Cin); w_ref: (Cin, 4*Ch); b_ref: (1, 4*Ch); o_ref: (1, TH, W, 4*Ch)
    _, th, w, cin = x_ref.shape
    n_out = w_ref.shape[1]
    x = x_ref[0].reshape(th * w, cin)
    acc = jnp.dot(x, w_ref[...], preferred_element_type=jnp.float32) + b_ref[...]
    o_ref[0] = acc.reshape(th, w, n_out).astype(o_ref.dtype)


def conv_transpose_2x2(x_nhwc, w_t, b_t):
    """ConvTranspose2d(Cin, Ch, kernel_size=2, stride=2) on an NHWC input."""
    n, h, w, cin = x_nhwc.shape
    ch = w_t.shape[1]
    # PyTorch weight layout (Cin, Ch, kH, kW) -> (Cin, kH*kW*Ch)
    w_flat = jnp.transpose(w_t, (0, 2, 3, 1)).reshape(cin, 4 * ch)
    b_flat = jnp.tile(b_t[None, None, :], (2, 2, 1)).reshape(1, 4 * ch)
    th = _row_tile(h, w, cin)
    out = pl.pallas_call(
        _deconv2x2_kernel,
        grid=(n, h // th),
        out_shape=jax.ShapeDtypeStruct((n, h, w, 4 * ch), jnp.float32),
        in_specs=[
            pl.BlockSpec((1, th, w, cin), lambda i, s: (i, s, 0, 0)),
            pl.BlockSpec((cin, 4 * ch), lambda i, s: (0, 0)),
            pl.BlockSpec((1, 4 * ch), lambda i, s: (0, 0)),
        ],
        out_specs=pl.BlockSpec((1, th, w, 4 * ch), lambda i, s: (i, s, 0, 0)),
        compiler_params=pltpu.CompilerParams(
            dimension_semantics=("parallel", "parallel")),
        cost_estimate=pl.CostEstimate(
            flops=2 * n * h * w * cin * 4 * ch,
            bytes_accessed=4 * (n * h * w * (cin + 4 * ch) + cin * 4 * ch),
            transcendentals=0),
    )(x_nhwc, w_flat, b_flat)
    # 2x2 spatial de-interleave of the (smallest) tensor in the pipeline.
    # TODO(synk): fold this de-interleave into the kernel's out_spec (interleaved stores)
    # to save one more HBM pass; kept in XLA for lowering robustness.
    out = out.reshape(n, h, w, 2, 2, ch)
    return jnp.transpose(out, (0, 1, 3, 2, 4, 5)).reshape(n, 2 * h, 2 * w, ch)


# ----------------------------------------------------------------------------
# Shared helpers for the row-tiled 3x3 conv kernels.
# ----------------------------------------------------------------------------
def _accum_taps(acc, x, w_ref, rows_out, cols_out):
    """acc += 3x3 conv of padded tile x: (rows_out+2, cols_out+2, C) with w_ref (3, 3C, Cout).

    The three dx taps are merged along channels so each dy is a single MXU dot with K=3C.
    """
    c = x.shape[-1]
    for dy in range(3):  # unrolled at trace time
        rows = x[dy:dy + rows_out]                                         # (rows, cols+2, C)
        patch = jnp.concatenate(
            [rows[:, dx:dx + cols_out, :] for dx in range(3)], axis=-1)    # (rows, cols, 3C)
        acc = acc + jnp.dot(patch.reshape(rows_out * cols_out, 3 * c), w_ref[dy],
                            preferred_element_type=jnp.float32)
    return acc


def _write_out_and_stats(acc, y_ref, stats_ref, rows_out, cols_out, cout):
    y_ref[0] = acc.reshape(rows_out, cols_out, cout).astype(y_ref.dtype)
    s1 = jnp.sum(acc, axis=0, keepdims=True)          # (1, Cout) partial sum
    s2 = jnp.sum(acc * acc, axis=0, keepdims=True)    # (1, Cout) partial sum of squares
    stats_ref[...] = jnp.concatenate([s1, s2], axis=0).reshape(1, 2, cout)


def _halo_specs(tile_rows, padded_cols, channels):
    """Main + 2-row-halo BlockSpecs over a row-padded NHWC array (tile_rows must be even)."""
    half = tile_rows // 2
    main = pl.BlockSpec((1, tile_rows, padded_cols, channels),
                        lambda i, s: (i, s, 0, 0))
    halo = pl.BlockSpec((1, 2, padded_cols, channels),
                        lambda i, s: (i, (s + 1) * half, 0, 0))
    return main, halo


# ----------------------------------------------------------------------------
# Kernel 2: conv3x3 (pad=1) over two channel-split sources (the folded concat),
#           emitting the raw output + per-tile partial BN statistics.
# ----------------------------------------------------------------------------
def _conv1_kernel(am_ref, ah_ref, bm_ref, bh_ref, wa_ref, wb_ref, bias_ref,
                  y_ref, stats_ref, *, rows, cols):
    cout = bias_ref.shape[-1]
    xa = jnp.concatenate([am_ref[0], ah_ref[0]], axis=0)   # (rows+2, cols+2, Ca)
    xb = jnp.concatenate([bm_ref[0], bh_ref[0]], axis=0)   # (rows+2, cols+2, Cb)
    acc = jnp.zeros((rows * cols, cout), jnp.float32)
    acc = _accum_taps(acc, xa, wa_ref, rows, cols)
    acc = _accum_taps(acc, xb, wb_ref, rows, cols)
    acc = acc + bias_ref[...]
    _write_out_and_stats(acc, y_ref, stats_ref, rows, cols, cout)


def conv3x3_dual_input(xa, xb, w_oihw, bias):
    """3x3 conv (padding=1) of channel-concat([xa, xb]) without materialising the concat."""
    n, h, w, ca = xa.shape
    cb = xb.shape[-1]
    cout = w_oihw.shape[0]
    assert h % 2 == 0, "spatial height must be even (2x upsampled UNet feature map)"
    w_hwio = jnp.transpose(w_oihw, (2, 3, 1, 0))                   # (3, 3, Cin, Cout)
    wa = w_hwio[:, :, :ca, :].reshape(3, 3 * ca, cout)
    wb = w_hwio[:, :, ca:, :].reshape(3, 3 * cb, cout)
    xa_p = jnp.pad(xa, ((0, 0), (1, 1), (1, 1), (0, 0)))
    xb_p = jnp.pad(xb, ((0, 0), (1, 1), (1, 1), (0, 0)))
    wp = w + 2
    tr = _row_tile(h, wp, ca + cb, multiple_of=2)
    t = h // tr
    a_main, a_halo = _halo_specs(tr, wp, ca)
    b_main, b_halo = _halo_specs(tr, wp, cb)
    kernel = functools.partial(_conv1_kernel, rows=tr, cols=w)
    y, stats = pl.pallas_call(
        kernel,
        grid=(n, t),
        out_shape=(
            jax.ShapeDtypeStruct((n, h, w, cout), jnp.float32),
            jax.ShapeDtypeStruct((n * t, 2, cout), jnp.float32),
        ),
        in_specs=[
            a_main, a_halo, b_main, b_halo,
            pl.BlockSpec((3, 3 * ca, cout), lambda i, s: (0, 0, 0)),
            pl.BlockSpec((3, 3 * cb, cout), lambda i, s: (0, 0, 0)),
            pl.BlockSpec((1, cout), lambda i, s: (0, 0)),
        ],
        out_specs=(
            pl.BlockSpec((1, tr, w, cout), lambda i, s: (i, s, 0, 0)),
            pl.BlockSpec((1, 2, cout), lambda i, s: (i * t + s, 0, 0)),
        ),
        compiler_params=pltpu.CompilerParams(
            dimension_semantics=("parallel", "parallel")),
        cost_estimate=pl.CostEstimate(
            flops=2 * n * h * w * 9 * (ca + cb) * cout,
            bytes_accessed=4 * (n * (h + 2) * wp * (ca + cb)
                                + n * h * w * cout + 9 * (ca + cb) * cout),
            transcendentals=0),
    )(xa_p, xa_p, xb_p, xb_p, wa, wb, bias.reshape(1, cout))
    return y, stats


# ----------------------------------------------------------------------------
# Kernel 3: conv3x3 (pad=1) with the previous stage's BN + ReLU fused into the
#           *input* path, emitting raw output + per-tile partial BN statistics.
# ----------------------------------------------------------------------------
def _conv2_kernel(xm_ref, xh_ref, sc_ref, sh_ref, w_ref, bias_ref,
                  y_ref, stats_ref, *, rows, cols, padded_h):
    t = pl.program_id(1)
    cout = bias_ref.shape[-1]
    cin = xm_ref.shape[-1]
    x = jnp.concatenate([xm_ref[0], xh_ref[0]], axis=0)    # raw conv1 tile, (rows+2, cols+2, Cin)
    # Fused BatchNorm(prev conv) + ReLU applied to the loaded tile.
    act = jnp.maximum(
        x * sc_ref[...].reshape(1, 1, cin) + sh_ref[...].reshape(1, 1, cin), 0.0)
    # Conv zero padding must be zero AFTER the activation -> re-zero the padded border.
    row = lax.broadcasted_iota(jnp.int32, act.shape, 0) + t * rows
    col = lax.broadcasted_iota(jnp.int32, act.shape, 1)
    interior = (row >= 1) & (row <= padded_h - 2) & (col >= 1) & (col <= cols)
    act = jnp.where(interior, act, 0.0)
    acc = jnp.zeros((rows * cols, cout), jnp.float32)
    acc = _accum_taps(acc, act, w_ref, rows, cols)
    acc = acc + bias_ref[...]
    _write_out_and_stats(acc, y_ref, stats_ref, rows, cols, cout)


def conv3x3_fused_bn_relu_input(x_raw, scale, shift, w_oihw, bias):
    """3x3 conv (padding=1) applied to relu(x_raw*scale + shift) without materialising it."""
    n, h, w, cin = x_raw.shape
    cout = w_oihw.shape[0]
    assert h % 2 == 0, "spatial height must be even (2x upsampled UNet feature map)"
    w_k = jnp.transpose(w_oihw, (2, 3, 1, 0)).reshape(3, 3 * cin, cout)
    x_p = jnp.pad(x_raw, ((0, 0), (1, 1), (1, 1), (0, 0)))
    wp = w + 2
    tr = _row_tile(h, wp, cin, multiple_of=2)
    t = h // tr
    x_main, x_halo = _halo_specs(tr, wp, cin)
    kernel = functools.partial(_conv2_kernel, rows=tr, cols=w, padded_h=h + 2)
    y, stats = pl.pallas_call(
        kernel,
        grid=(n, t),
        out_shape=(
            jax.ShapeDtypeStruct((n, h, w, cout), jnp.float32),
            jax.ShapeDtypeStruct((n * t, 2, cout), jnp.float32),
        ),
        in_specs=[
            x_main, x_halo,
            pl.BlockSpec((1, cin), lambda i, s: (0, 0)),
            pl.BlockSpec((1, cin), lambda i, s: (0, 0)),
            pl.BlockSpec((3, 3 * cin, cout), lambda i, s: (0, 0, 0)),
            pl.BlockSpec((1, cout), lambda i, s: (0, 0)),
        ],
        out_specs=(
            pl.BlockSpec((1, tr, w, cout), lambda i, s: (i, s, 0, 0)),
            pl.BlockSpec((1, 2, cout), lambda i, s: (i * t + s, 0, 0)),
        ),
        compiler_params=pltpu.CompilerParams(
            dimension_semantics=("parallel", "parallel")),
        cost_estimate=pl.CostEstimate(
            flops=2 * n * h * w * 9 * cin * cout,
            bytes_accessed=4 * (n * (h + 2) * wp * cin + n * h * w * cout + 9 * cin * cout),
            transcendentals=0),
    )(x_p, x_p, scale.reshape(1, cin), shift.reshape(1, cin), w_k, bias.reshape(1, cout))
    return y, stats


# ----------------------------------------------------------------------------
# Kernel 4: final BatchNorm affine (precomputed scale/shift) + ReLU, row-tiled.
# ----------------------------------------------------------------------------
def _bn_relu_kernel(x_ref, sc_ref, sh_ref, o_ref):
    c = sc_ref.shape[-1]
    scale = sc_ref[...].reshape(1, 1, 1, c)
    shift = sh_ref[...].reshape(1, 1, 1, c)
    o_ref[...] = jnp.maximum(x_ref[...] * scale + shift, 0.0).astype(o_ref.dtype)


def bn_relu(x, scale, shift):
    n, h, w, c = x.shape
    tr = _row_tile(h, w, c)
    return pl.pallas_call(
        _bn_relu_kernel,
        grid=(n, h // tr),
        out_shape=jax.ShapeDtypeStruct((n, h, w, c), jnp.float32),
        in_specs=[
            pl.BlockSpec((1, tr, w, c), lambda i, s: (i, s, 0, 0)),
            pl.BlockSpec((1, c), lambda i, s: (0, 0)),
            pl.BlockSpec((1, c), lambda i, s: (0, 0)),
        ],
        out_specs=pl.BlockSpec((1, tr, w, c), lambda i, s: (i, s, 0, 0)),
        compiler_params=pltpu.CompilerParams(
            dimension_semantics=("parallel", "parallel")),
    )(x, scale.reshape(1, c), shift.reshape(1, c))


# ----------------------------------------------------------------------------
# BN (training-mode) scale/shift from the per-tile partial statistics.
# ----------------------------------------------------------------------------
def _bn_affine(stats, count, gamma, beta, eps):
    s = jnp.sum(stats[:, 0, :], axis=0)
    ssq = jnp.sum(stats[:, 1, :], axis=0)
    mean = s / count
    var = jnp.maximum(ssq / count - mean * mean, 0.0)   # guard E[x^2]-E[x]^2 cancellation
    scale = gamma / jnp.sqrt(var + eps)
    shift = beta - mean * scale
    return scale, shift


# ----------------------------------------------------------------------------
# Up.forward
# ----------------------------------------------------------------------------
def up_forward(x1_nchw, x2_nchw, params, eps=1e-5):
    x1 = jnp.transpose(x1_nchw, (0, 2, 3, 1))   # NCHW -> NHWC
    x2 = jnp.transpose(x2_nchw, (0, 2, 3, 1))

    # self.up(x1): ConvTranspose2d(Cin, Cin//2, kernel_size=2, stride=2)
    x1_up = conv_transpose_2x2(x1, params["up_w"], params["up_b"])

    # conv1 of DoubleConv on cat([x2, x1_up], channel) -- concat folded into split-K.
    y1, st1 = conv3x3_dual_input(x2, x1_up, params["conv1_w"], params["conv1_b"])
    n, h, w, _ = y1.shape
    count = n * h * w
    sc1, sh1 = _bn_affine(st1, count, params["bn1_gamma"], params["bn1_beta"], eps)

    # conv2 of DoubleConv, with BN1 + ReLU fused into its input path.
    y2, st2 = conv3x3_fused_bn_relu_input(y1, sc1, sh1,
                                          params["conv2_w"], params["conv2_b"])
    sc2, sh2 = _bn_affine(st2, count, params["bn2_gamma"], params["bn2_beta"], eps)

    out = bn_relu(y2, sc2, sh2)                 # final BN2 + ReLU
    return jnp.transpose(out, (0, 3, 1, 2))     # NHWC -> NCHW


# ----------------------------------------------------------------------------
# Pure-JAX reference (PyTorch semantics) for a correctness check.
# ----------------------------------------------------------------------------
def _reference_up(x1, x2, params, eps=1e-5):
    n, cin, h, w = x1.shape
    ch = cin // 2
    up = jnp.einsum("nchw,cokl->nohkwl", x1, params["up_w"]).reshape(n, ch, 2 * h, 2 * w)
    up = up + params["up_b"][None, :, None, None]
    x = jnp.concatenate([x2, up], axis=1)

    def conv_bn_relu(x, wgt, b, gamma, beta):
        y = lax.conv_general_dilated(
            x, wgt, window_strides=(1, 1), padding=((1, 1), (1, 1)),
            dimension_numbers=("NCHW", "OIHW", "NCHW"))
        y = y + b[None, :, None, None]
        mean = jnp.mean(y, axis=(0, 2, 3), keepdims=True)
        var = jnp.mean(jnp.square(y - mean), axis=(0, 2, 3), keepdims=True)
        yn = (y - mean) / jnp.sqrt(var + eps)
        return jnp.maximum(yn * gamma[None, :, None, None] + beta[None, :, None, None], 0.0)

    hmid = conv_bn_relu(x, params["conv1_w"], params["conv1_b"],
                        params["bn1_gamma"], params["bn1_beta"])
    return conv_bn_relu(hmid, params["conv2_w"], params["conv2_b"],
                        params["bn2_gamma"], params["bn2_beta"])


if __name__ == "__main__":
    key = jax.random.PRNGKey(0)
    ks = jax.random.split(key, 8)

    in_ch, out_ch = 4, 4
    n, h, w = 2, 8, 8                                     # x1 spatial; x2 is 2x larger

    x1 = jax.random.normal(ks[0], (n, in_ch, h, w), jnp.float32)
    x2 = jax.random.normal(ks[1], (n, in_ch // 2, 2 * h, 2 * w), jnp.float32)

    params = {
        "up_w": 0.1 * jax.random.normal(ks[2], (in_ch, in_ch // 2, 2, 2), jnp.float32),
        "up_b": 0.1 * jax.random.normal(ks[3], (in_ch // 2,), jnp.float32),
        "conv1_w": 0.1 * jax.random.normal(ks[4], (out_ch, in_ch, 3, 3), jnp.float32),
        "conv1_b": 0.1 * jax.random.normal(ks[5], (out_ch,), jnp.float32),
        "bn1_gamma": jnp.ones((out_ch,), jnp.float32),
        "bn1_beta": jnp.zeros((out_ch,), jnp.float32),
        "conv2_w": 0.1 * jax.random.normal(ks[6], (out_ch, out_ch, 3, 3), jnp.float32),
        "conv2_b": 0.1 * jax.random.normal(ks[7], (out_ch,), jnp.float32),
        "bn2_gamma": jnp.ones((out_ch,), jnp.float32),
        "bn2_beta": jnp.zeros((out_ch,), jnp.float32),
    }

    out = jax.jit(up_forward)(x1, x2, params)
    jax.block_until_ready(out)
    assert out.shape == (n, out_ch, 2 * h, 2 * w), out.shape

    ref = _reference_up(x1, x2, params)
    max_err = float(jnp.max(jnp.abs(out - ref)))
    assert max_err < 2e-3, f"mismatch vs reference: {max_err}"
    print("KERNEL_OK")
</pallas_src>

<mosaic_0001>
module attributes {stable_mosaic.version = 11 : i64} {
  func.func @_deconv2x2_kernel(%arg0: i32, %arg1: i32, %arg2: memref<1x8x8x4xf32, #tpu.memory_space<vmem>>, %arg3: memref<4x8xf32, #tpu.memory_space<vmem>>, %arg4: memref<1x8xf32, #tpu.memory_space<vmem>>, %arg5: memref<1x8x8x8xf32, #tpu.memory_space<vmem>>) attributes {dimension_semantics = [#tpu.dimension_semantics<parallel>, #tpu.dimension_semantics<parallel>], iteration_bounds = array<i64: 2, 1>, scalar_prefetch = 0 : i64, scratch_operands = 0 : i64, tpu.core_type = #tpu.core_type<tc>, window_params = [{transform_indices = @transform_0, window_bounds = array<i64: 1, 8, 8, 4>}, {pipeline_mode = #tpu.pipeline_mode<synchronous>, transform_indices = @transform_1, window_bounds = array<i64: 4, 8>}, {pipeline_mode = #tpu.pipeline_mode<synchronous>, transform_indices = @transform_2, window_bounds = array<i64: 1, 8>}, {transform_indices = @transform_3, window_bounds = array<i64: 1, 8, 8, 8>}]} {
    %c0 = arith.constant 0 : index
    %c0_0 = arith.constant 0 : index
    %c0_1 = arith.constant 0 : index
    %c0_2 = arith.constant 0 : index
    %0 = vector.load %arg2[%c0, %c0_0, %c0_1, %c0_2] : memref<1x8x8x4xf32, #tpu.memory_space<vmem>>, vector<1x8x8x4xf32>
    %1 = vector.shape_cast %0 : vector<1x8x8x4xf32> to vector<8x8x4xf32>
    %2 = vector.shape_cast %1 : vector<8x8x4xf32> to vector<64x4xf32>
    %c0_3 = arith.constant 0 : index
    %c0_4 = arith.constant 0 : index
    %3 = vector.load %arg3[%c0_3, %c0_4] : memref<4x8xf32, #tpu.memory_space<vmem>>, vector<4x8xf32>
    %cst = arith.constant dense<0.000000e+00> : vector<64x8xf32>
    %4 = tpu.matmul %2, %3, %cst {dimension_numbers = #tpu.dot_dimension_numbers<[1], [0], [0], [1], [0, 0, 1, 1], [], []>} : vector<64x4xf32>, vector<4x8xf32>, vector<64x8xf32> -> vector<64x8xf32>
    %c0_5 = arith.constant 0 : index
    %c0_6 = arith.constant 0 : index
    %5 = vector.load %arg4[%c0_5, %c0_6] : memref<1x8xf32, #tpu.memory_space<vmem>>, vector<1x8xf32>
    %6 = vector.broadcast %5 : vector<1x8xf32> to vector<64x8xf32>
    %7 = arith.addf %4, %6 : vector<64x8xf32>
    %8 = vector.shape_cast %7 : vector<64x8xf32> to vector<8x8x8xf32>
    %c0_7 = arith.constant 0 : index
    %c0_8 = arith.constant 0 : index
    %c0_9 = arith.constant 0 : index
    %c0_10 = arith.constant 0 : index
    %9 = vector.load %arg5[%c0_7, %c0_8, %c0_9, %c0_10] : memref<1x8x8x8xf32, #tpu.memory_space<vmem>>, vector<1x8x8x8xf32>
    %10 = vector.shape_cast %9 : vector<1x8x8x8xf32> to vector<8x8x8xf32>
    %11 = vector.shape_cast %8 : vector<8x8x8xf32> to vector<1x8x8x8xf32>
    tpu.vector_store %arg5[%c0_7, %c0_8, %c0_9, %c0_10], %11 {strides = array<i32>} : memref<1x8x8x8xf32, #tpu.memory_space<vmem>>, vector<1x8x8x8xf32>,
    return
  }
  func.func @transform_0(%arg0: i32, %arg1: i32) -> (i32, i32, i32, i32) {
    %c0_i32 = arith.constant 0 : i32
    %c0_i32_0 = arith.constant 0 : i32
    %c0_i32_1 = arith.constant 0 : i32
    return %arg0, %arg1, %c0_i32, %c0_i32_0 : i32, i32, i32, i32
  }
  func.func @transform_1(%arg0: i32, %arg1: i32) -> (i32, i32) {
    %c0_i32 = arith.constant 0 : i32
    %c0_i32_0 = arith.constant 0 : i32
    %c0_i32_1 = arith.constant 0 : i32
    return %c0_i32, %c0_i32_0 : i32, i32
  }
  func.func @transform_2(%arg0: i32, %arg1: i32) -> (i32, i32) {
    %c0_i32 = arith.constant 0 : i32
    %c0_i32_0 = arith.constant 0 : i32
    %c0_i32_1 = arith.constant 0 : i32
    return %c0_i32, %c0_i32_0 : i32, i32
  }
  func.func @transform_3(%arg0: i32, %arg1: i32) -> (i32, i32, i32, i32) {
    %c0_i32 = arith.constant 0 : i32
    %c0_i32_0 = arith.constant 0 : i32
    %c0_i32_1 = arith.constant 0 : i32
    return %arg0, %arg1, %c0_i32, %c0_i32_0 : i32, i32, i32, i32
  }
}

module attributes {stable_mosaic.version = 11 : i64} {
  func.func @_conv1_kernel(%arg0: i32, %arg1: i32, %arg2: memref<1x16x18x2xf32, #tpu.memory_space<vmem>>, %arg3: memref<1x2x18x2xf32, #tpu.memory_space<vmem>>, %arg4: memref<1x16x18x2xf32, #tpu.memory_space<vmem>>, %arg5: memref<1x2x18x2xf32, #tpu.memory_space<vmem>>, %arg6: memref<3x6x4xf32, #tpu.memory_space<vmem>>, %arg7: memref<3x6x4xf32, #tpu.memory_space<vmem>>, %arg8: memref<1x4xf32, #tpu.memory_space<vmem>>, %arg9: memref<1x16x16x4xf32, #tpu.memory_space<vmem>>, %arg10: memref<1x2x4xf32, #tpu.memory_space<vmem>>) attributes {dimension_semantics = [#tpu.dimension_semantics<parallel>, #tpu.dimension_semantics<parallel>], iteration_bounds = array<i64: 2, 1>, scalar_prefetch = 0 : i64, scratch_operands = 0 : i64, tpu.core_type = #tpu.core_type<tc>, window_params = [{transform_indices = @transform_0, window_bounds = array<i64: 1, 16, 18, 2>}, {transform_indices = @transform_1, window_bounds = array<i64: 1, 2, 18, 2>}, {transform_indices = @transform_2, window_bounds = array<i64: 1, 16, 18, 2>}, {transform_indices = @transform_3, window_bounds = array<i64: 1, 2, 18, 2>}, {pipeline_mode = #tpu.pipeline_mode<synchronous>, transform_indices = @transform_4, window_bounds = array<i64: 3, 6, 4>}, {pipeline_mode = #tpu.pipeline_mode<synchronous>, transform_indices = @transform_5, window_bounds = array<i64: 3, 6, 4>}, {pipeline_mode = #tpu.pipeline_mode<synchronous>, transform_indices = @transform_6, window_bounds = array<i64: 1, 4>}, {transform_indices = @transform_7, window_bounds = array<i64: 1, 16, 16, 4>}, {transform_indices = @transform_8, window_bounds = array<i64: 1, 2, 4>}]} {
    %c0 = arith.constant 0 : index
    %c0_0 = arith.constant 0 : index
    %c0_1 = arith.constant 0 : index
    %c0_2 = arith.constant 0 : index
    %0 = vector.load %arg2[%c0, %c0_0, %c0_1, %c0_2] : memref<1x16x18x2xf32, #tpu.memory_space<vmem>>, vector<1x16x18x2xf32>
    %1 = vector.shape_cast %0 : vector<1x16x18x2xf32> to vector<16x18x2xf32>
    %c0_3 = arith.constant 0 : index
    %c0_4 = arith.constant 0 : index
    %c0_5 = arith.constant 0 : index
    %c0_6 = arith.constant 0 : index
    %2 = vector.load %arg3[%c0_3, %c0_4, %c0_5, %c0_6] : memref<1x2x18x2xf32, #tpu.memory_space<vmem>>, vector<1x2x18x2xf32>
    %3 = vector.shape_cast %2 : vector<1x2x18x2xf32> to vector<2x18x2xf32>
    %4 = tpu.concatenate %1, %3 in 0 : vector<16x18x2xf32>, vector<2x18x2xf32> -> vector<18x18x2xf32>
    %c0_7 = arith.constant 0 : index
    %c0_8 = arith.constant 0 : index
    %c0_9 = arith.constant 0 : index
    %c0_10 = arith.constant 0 : index
    %5 = vector.load %arg4[%c0_7, %c0_8, %c0_9, %c0_10] : memref<1x16x18x2xf32, #tpu.memory_space<vmem>>, vector<1x16x18x2xf32>
    %6 = vector.shape_cast %5 : vector<1x16x18x2xf32> to vector<16x18x2xf32>
    %c0_11 = arith.constant 0 : index
    %c0_12 = arith.constant 0 : index
    %c0_13 = arith.constant 0 : index
    %c0_14 = arith.constant 0 : index
    %7 = vector.load %arg5[%c0_11, %c0_12, %c0_13, %c0_14] : memref<1x2x18x2xf32, #tpu.memory_space<vmem>>, vector<1x2x18x2xf32>
    %8 = vector.shape_cast %7 : vector<1x2x18x2xf32> to vector<2x18x2xf32>
    %9 = tpu.concatenate %6, %8 in 0 : vector<16x18x2xf32>, vector<2x18x2xf32> -> vector<18x18x2xf32>
    %cst = arith.constant 0.000000e+00 : f32
    %10 = vector.broadcast %cst : f32 to vector<256x4xf32>
    %11 = vector.extract_strided_slice %4 {offsets = [0, 0, 0], sizes = [16, 18, 2], strides = [1, 1, 1]} : vector<18x18x2xf32> to vector<16x18x2xf32>
    %12 = vector.extract_strided_slice %11 {offsets = [0, 0, 0], sizes = [16, 16, 2], strides = [1, 1, 1]} : vector<16x18x2xf32> to vector<16x16x2xf32>
    %13 = vector.extract_strided_slice %11 {offsets = [0, 1, 0], sizes = [16, 16, 2], strides = [1, 1, 1]} : vector<16x18x2xf32> to vector<16x16x2xf32>
    %14 = vector.extract_strided_slice %11 {offsets = [0, 2, 0], sizes = [16, 16, 2], strides = [1, 1, 1]} : vector<16x18x2xf32> to vector<16x16x2xf32>
    %15 = tpu.concatenate %12, %13, %14 in 2 : vector<16x16x2xf32>, vector<16x16x2xf32>, vector<16x16x2xf32> -> vector<16x16x6xf32>
    %16 = vector.shape_cast %15 : vector<16x16x6xf32> to vector<256x6xf32>
    %c0_15 = arith.constant 0 : index
    %c0_16 = arith.constant 0 : index
    %c0_17 = arith.constant 0 : index
    %17 = vector.load %arg6[%c0_15, %c0_16, %c0_17] : memref<3x6x4xf32, #tpu.memory_space<vmem>>, vector<1x6x4xf32>
    %18 = vector.shape_cast %17 : vector<1x6x4xf32> to vector<6x4xf32>
    %cst_18 = arith.constant dense<0.000000e+00> : vector<256x4xf32>
    %19 = tpu.matmul %16, %18, %cst_18 {dimension_numbers = #tpu.dot_dimension_numbers<[1], [0], [0], [1], [0, 0, 1, 1], [], []>} : vector<256x6xf32>, vector<6x4xf32>, vector<256x4xf32> -> vector<256x4xf32>
    %20 = arith.addf %10, %19 : vector<256x4xf32>
    %21 = vector.extract_strided_slice %4 {offsets = [1, 0, 0], sizes = [16, 18, 2], strides = [1, 1, 1]} : vector<18x18x2xf32> to vector<16x18x2xf32>
    %22 = vector.extract_strided_slice %21 {offsets = [0, 0, 0], sizes = [16, 16, 2], strides = [1, 1, 1]} : vector<16x18x2xf32> to vector<16x16x2xf32>
    %23 = vector.extract_strided_slice %21 {offsets = [0, 1, 0], sizes = [16, 16, 2], strides = [1, 1, 1]} : vector<16x18x2xf32> to vector<16x16x2xf32>
    %24 = vector.extract_strided_slice %21 {offsets = [0, 2, 0], sizes = [16, 16, 2], strides = [1, 1, 1]} : vector<16x18x2xf32> to vector<16x16x2xf32>
    %25 = tpu.concatenate %22, %23, %24 in 2 : vector<16x16x2xf32>, vector<16x16x2xf32>, vector<16x16x2xf32> -> vector<16x16x6xf32>
    %26 = vector.shape_cast %25 : vector<16x16x6xf32> to vector<256x6xf32>
    %c1 = arith.constant 1 : index
    %c0_19 = arith.constant 0 : index
    %c0_20 = arith.constant 0 : index
    %27 = vector.load %arg6[%c1, %c0_19, %c0_20] : memref<3x6x4xf32, #tpu.memory_space<vmem>>, vector<1x6x4xf32>
    %28 = vector.shape_cast %27 : vector<1x6x4xf32> to vector<6x4xf32>
    %cst_21 = arith.constant dense<0.000000e+00> : vector<256x4xf32>
    %29 = tpu.matmul %26, %28, %cst_21 {dimension_numbers = #tpu.dot_dimension_numbers<[1], [0], [0], [1], [0, 0, 1, 1], [], []>} : vector<256x6xf32>, vector<6x4xf32>, vector<256x4xf32> -> vector<256x4xf32>
    %30 = arith.addf %20, %29 : vector<256x4xf32>
    %31 = vector.extract_strided_slice %4 {offsets = [2, 0, 0], sizes = [16, 18, 2], strides = [1, 1, 1]} : vector<18x18x2xf32> to vector<16x18x2xf32>
    %32 = vector.extract_strided_slice %31 {offsets = [0, 0, 0], sizes = [16, 16, 2], strides = [1, 1, 1]} : vector<16x18x2xf32> to vector<16x16x2xf32>
    %33 = vector.extract_strided_slice %31 {offsets = [0, 1, 0], sizes = [16, 16, 2], strides = [1, 1, 1]} : vector<16x18x2xf32> to vector<16x16x2xf32>
    %34 = vector.extract_strided_slice %31 {offsets = [0, 2, 0], sizes = [16, 16, 2], strides = [1, 1, 1]} : vector<16x18x2xf32> to vector<16x16x2xf32>
    %35 = tpu.concatenate %32, %33, %34 in 2 : vector<16x16x2xf32>, vector<16x16x2xf32>, vector<16x16x2xf32> -> vector<16x16x6xf32>
    %36 = vector.shape_cast %35 : vector<16x16x6xf32> to vector<256x6xf32>
    %c2 = arith.constant 2 : index
    %c0_22 = arith.constant 0 : index
    %c0_23 = arith.constant 0 : index
    %37 = vector.load %arg6[%c2, %c0_22, %c0_23] : memref<3x6x4xf32, #tpu.memory_space<vmem>>, vector<1x6x4xf32>
    %38 = vector.shape_cast %37 : vector<1x6x4xf32> to vector<6x4xf32>
    %cst_24 = arith.constant dense<0.000000e+00> : vector<256x4xf32>
    %39 = tpu.matmul %36, %38, %cst_24 {dimension_numbers = #tpu.dot_dimension_numbers<[1], [0], [0], [1], [0, 0, 1, 1], [], []>} : vector<256x6xf32>, vector<6x4xf32>, vector<256x4xf32> -> vector<256x4xf32>
    %40 = arith.addf %30, %39 : vector<256x4xf32>
    %41 = vector.extract_strided_slice %9 {offsets = [0, 0, 0], sizes = [16, 18, 2], strides = [1, 1, 1]} : vector<18x18x2xf32> to vector<16x18x2xf32>
    %42 = vector.extract_strided_slice %41 {offsets = [0, 0, 0], sizes = [16, 16, 2], strides = [1, 1, 1]} : vector<16x18x2xf32> to vector<16x16x2xf32>
    %43 = vector.extract_strided_slice %41 {offsets = [0, 1, 0], sizes = [16, 16, 2], strides = [1, 1, 1]} : vector<16x18x2xf32> to vector<16x16x2xf32>
    %44 = vector.extract_strided_slice %41 {offsets = [0, 2, 0], sizes = [16, 16, 2], strides = [1, 1, 1]} : vector<16x18x2xf32> to vector<16x16x2xf32>
    %45 = tpu.concatenate %42, %43, %44 in 2 : vector<16x16x2xf32>, vector<16x16x2xf32>, vector<16x16x2xf32> -> vector<16x16x6xf32>
    %46 = vector.shape_cast %45 : vector<16x16x6xf32> to vector<256x6xf32>
    %c0_25 = arith.constant 0 : index
    %c0_26 = arith.constant 0 : index
    %c0_27 = arith.constant 0 : index
    %47 = vector.load %arg7[%c0_25, %c0_26, %c0_27] : memref<3x6x4xf32, #tpu.memory_space<vmem>>, vector<1x6x4xf32>
    %48 = vector.shape_cast %47 : vector<1x6x4xf32> to vector<6x4xf32>
    %cst_28 = arith.constant dense<0.000000e+00> : vector<256x4xf32>
    %49 = tpu.matmul %46, %48, %cst_28 {dimension_numbers = #tpu.dot_dimension_numbers<[1], [0], [0], [1], [0, 0, 1, 1], [], []>} : vector<256x6xf32>, vector<6x4xf32>, vector<256x4xf32> -> vector<256x4xf32>
    %50 = arith.addf %40, %49 : vector<256x4xf32>
    %51 = vector.extract_strided_slice %9 {offsets = [1, 0, 0], sizes = [16, 18, 2], strides = [1, 1, 1]} : vector<18x18x2xf32> to vector<16x18x2xf32>
    %52 = vector.extract_strided_slice %51 {offsets = [0, 0, 0], sizes = [16, 16, 2], strides = [1, 1, 1]} : vector<16x18x2xf32> to vector<16x16x2xf32>
    %53 = vector.extract_strided_slice %51 {offsets = [0, 1, 0], sizes = [16, 16, 2], strides = [1, 1, 1]} : vector<16x18x2xf32> to vector<16x16x2xf32>
    %54 = vector.extract_strided_slice %51 {offsets = [0, 2, 0], sizes = [16, 16, 2], strides = [1, 1, 1]} : vector<16x18x2xf32> to vector<16x16x2xf32>
    %55 = tpu.concatenate %52, %53, %54 in 2 : vector<16x16x2xf32>, vector<16x16x2xf32>, vector<16x16x2xf32> -> vector<16x16x6xf32>
    %56 = vector.shape_cast %55 : vector<16x16x6xf32> to vector<256x6xf32>
    %c1_29 = arith.constant 1 : index
    %c0_30 = arith.constant 0 : index
    %c0_31 = arith.constant 0 : index
    %57 = vector.load %arg7[%c1_29, %c0_30, %c0_31] : memref<3x6x4xf32, #tpu.memory_space<vmem>>, vector<1x6x4xf32>
    %58 = vector.shape_cast %57 : vector<1x6x4xf32> to vector<6x4xf32>
    %cst_32 = arith.constant dense<0.000000e+00> : vector<256x4xf32>
    %59 = tpu.matmul %56, %58, %cst_32 {dimension_numbers = #tpu.dot_dimension_numbers<[1], [0], [0], [1], [0, 0, 1, 1], [], []>} : vector<256x6xf32>, vector<6x4xf32>, vector<256x4xf32> -> vector<256x4xf32>
    %60 = arith.addf %50, %59 : vector<256x4xf32>
    %61 = vector.extract_strided_slice %9 {offsets = [2, 0, 0], sizes = [16, 18, 2], strides = [1, 1, 1]} : vector<18x18x2xf32> to vector<16x18x2xf32>
    %62 = vector.extract_strided_slice %61 {offsets = [0, 0, 0], sizes = [16, 16, 2], strides = [1, 1, 1]} : vector<16x18x2xf32> to vector<16x16x2xf32>
    %63 = vector.extract_strided_slice %61 {offsets = [0, 1, 0], sizes = [16, 16, 2], strides = [1, 1, 1]} : vector<16x18x2xf32> to vector<16x16x2xf32>
    %64 = vector.extract_strided_slice %61 {offsets = [0, 2, 0], sizes = [16, 16, 2], strides = [1, 1, 1]} : vector<16x18x2xf32> to vector<16x16x2xf32>
    %65 = tpu.concatenate %62, %63, %64 in 2 : vector<16x16x2xf32>, vector<16x16x2xf32>, vector<16x16x2xf32> -> vector<16x16x6xf32>
    %66 = vector.shape_cast %65 : vector<16x16x6xf32> to vector<256x6xf32>
    %c2_33 = arith.constant 2 : index
    %c0_34 = arith.constant 0 : index
    %c0_35 = arith.constant 0 : index
    %67 = vector.load %arg7[%c2_33, %c0_34, %c0_35] : memref<3x6x4xf32, #tpu.memory_space<vmem>>, vector<1x6x4xf32>
    %68 = vector.shape_cast %67 : vector<1x6x4xf32> to vector<6x4xf32>
    %cst_36 = arith.constant dense<0.000000e+00> : vector<256x4xf32>
    %69 = tpu.matmul %66, %68, %cst_36 {dimension_numbers = #tpu.dot_dimension_numbers<[1], [0], [0], [1], [0, 0, 1, 1], [], []>} : vector<256x6xf32>, vector<6x4xf32>, vector<256x4xf32> -> vector<256x4xf32>
    %70 = arith.addf %60, %69 : vector<256x4xf32>
    %c0_37 = arith.constant 0 : index
    %c0_38 = arith.constant 0 : index
    %71 = vector.load %arg8[%c0_37, %c0_38] : memref<1x4xf32, #tpu.memory_space<vmem>>, vector<1x4xf32>
    %72 = vector.broadcast %71 : vector<1x4xf32> to vector<256x4xf32>
    %73 = arith.addf %70, %72 : vector<256x4xf32>
    %74 = vector.shape_cast %73 : vector<256x4xf32> to vector<16x16x4xf32>
    %c0_39 = arith.constant 0 : index
    %c0_40 = arith.constant 0 : index
    %c0_41 = arith.constant 0 : index
    %c0_42 = arith.constant 0 : index
    %75 = vector.load %arg9[%c0_39, %c0_40, %c0_41, %c0_42] : memref<1x16x16x4xf32, #tpu.memory_space<vmem>>, vector<1x16x16x4xf32>
    %76 = vector.shape_cast %75 : vector<1x16x16x4xf32> to vector<16x16x4xf32>
    %77 = vector.shape_cast %74 : vector<16x16x4xf32> to vector<1x16x16x4xf32>
    tpu.vector_store %arg9[%c0_39, %c0_40, %c0_41, %c0_42], %77 {strides = array<i32>} : memref<1x16x16x4xf32, #tpu.memory_space<vmem>>, vector<1x16x16x4xf32>,
    %cst_43 = arith.constant dense<0.000000e+00> : vector<4xf32>
    %78 = vector.multi_reduction <add>, %73, %cst_43 [0] : vector<256x4xf32> to vector<4xf32>
    %79 = vector.shape_cast %78 : vector<4xf32> to vector<1x4xf32>
    %80 = arith.mulf %73, %73 : vector<256x4xf32>
    %cst_44 = arith.constant dense<0.000000e+00> : vector<4xf32>
    %81 = vector.multi_reduction <add>, %80, %cst_44 [0] : vector<256x4xf32> to vector<4xf32>
    %82 = vector.shape_cast %81 : vector<4xf32> to vector<1x4xf32>
    %83 = tpu.concatenate %79, %82 in 0 : vector<1x4xf32>, vector<1x4xf32> -> vector<2x4xf32>
    %84 = vector.shape_cast %83 : vector<2x4xf32> to vector<1x2x4xf32>
    %c0_45 = arith.constant 0 : index
    %c0_46 = arith.constant 0 : index
    %c0_47 = arith.constant 0 : index
    %85 = vector.load %arg10[%c0_45, %c0_46, %c0_47] : memref<1x2x4xf32, #tpu.memory_space<vmem>>, vector<1x2x4xf32>
    tpu.vector_store %arg10[%c0_45, %c0_46, %c0_47], %84 {strides = array<i32>} : memref<1x2x4xf32, #tpu.memory_space<vmem>>, vector<1x2x4xf32>,
    return
  }
  func.func @transform_0(%arg0: i32, %arg1: i32) -> (i32, i32, i32, i32) {
    %c0_i32 = arith.constant 0 : i32
    %c0_i32_0 = arith.constant 0 : i32
    %c0_i32_1 = arith.constant 0 : i32
    return %arg0, %arg1, %c0_i32, %c0_i32_0 : i32, i32, i32, i32
  }
  func.func @transform_1(%arg0: i32, %arg1: i32) -> (i32, i32, i32, i32) {
    %c1_i32 = arith.constant 1 : i32
    %0 = arith.addi %arg1, %c1_i32 : i32
    %c8_i32 = arith.constant 8 : i32
    %1 = arith.muli %0, %c8_i32 : i32
    %c0_i32 = arith.constant 0 : i32
    %c0_i32_0 = arith.constant 0 : i32
    %c0_i32_1 = arith.constant 0 : i32
    return %arg0, %1, %c0_i32, %c0_i32_0 : i32, i32, i32, i32
  }
  func.func @transform_2(%arg0: i32, %arg1: i32) -> (i32, i32, i32, i32) {
    %c0_i32 = arith.constant 0 : i32
    %c0_i32_0 = arith.constant 0 : i32
    %c0_i32_1 = arith.constant 0 : i32
    return %arg0, %arg1, %c0_i32, %c0_i32_0 : i32, i32, i32, i32
  }
  func.func @transform_3(%arg0: i32, %arg1: i32) -> (i32, i32, i32, i32) {
    %c1_i32 = arith.constant 1 : i32
    %0 = arith.addi %arg1, %c1_i32 : i32
    %c8_i32 = arith.constant 8 : i32
    %1 = arith.muli %0, %c8_i32 : i32
    %c0_i32 = arith.constant 0 : i32
    %c0_i32_0 = arith.constant 0 : i32
    %c0_i32_1 = arith.constant 0 : i32
    return %arg0, %1, %c0_i32, %c0_i32_0 : i32, i32, i32, i32
  }
  func.func @transform_4(%arg0: i32, %arg1: i32) -> (i32, i32, i32) {
    %c0_i32 = arith.constant 0 : i32
    %c0_i32_0 = arith.constant 0 : i32
    %c0_i32_1 = arith.constant 0 : i32
    %c0_i32_2 = arith.constant 0 : i32
    return %c0_i32, %c0_i32_0, %c0_i32_1 : i32, i32, i32
  }
  func.func @transform_5(%arg0: i32, %arg1: i32) -> (i32, i32, i32) {
    %c0_i32 = arith.constant 0 : i32
    %c0_i32_0 = arith.constant 0 : i32
    %c0_i32_1 = arith.constant 0 : i32
    %c0_i32_2 = arith.constant 0 : i32
    return %c0_i32, %c0_i32_0, %c0_i32_1 : i32, i32, i32
  }
  func.func @transform_6(%arg0: i32, %arg1: i32) -> (i32, i32) {
    %c0_i32 = arith.constant 0 : i32
    %c0_i32_0 = arith.constant 0 : i32
    %c0_i32_1 = arith.constant 0 : i32
    return %c0_i32, %c0_i32_0 : i32, i32
  }
  func.func @transform_7(%arg0: i32, %arg1: i32) -> (i32, i32, i32, i32) {
    %c0_i32 = arith.constant 0 : i32
    %c0_i32_0 = arith.constant 0 : i32
    %c0_i32_1 = arith.constant 0 : i32
    return %arg0, %arg1, %c0_i32, %c0_i32_0 : i32, i32, i32, i32
  }
  func.func @transform_8(%arg0: i32, %arg1: i32) -> (i32, i32, i32) {
    %c1_i32 = arith.constant 1 : i32
    %0 = arith.muli %arg0, %c1_i32 : i32
    %1 = arith.addi %0, %arg1 : i32
    %c0_i32 = arith.constant 0 : i32
    %c0_i32_0 = arith.constant 0 : i32
    %c0_i32_1 = arith.constant 0 : i32
    return %1, %c0_i32, %c0_i32_0 : i32, i32, i32
  }
}

module attributes {stable_mosaic.version = 11 : i64} {
  func.func @_conv2_kernel(%arg0: i32, %arg1: i32, %arg2: memref<1x16x18x4xf32, #tpu.memory_space<vmem>>, %arg3: memref<1x2x18x4xf32, #tpu.memory_space<vmem>>, %arg4: memref<1x4xf32, #tpu.memory_space<vmem>>, %arg5: memref<1x4xf32, #tpu.memory_space<vmem>>, %arg6: memref<3x12x4xf32, #tpu.memory_space<vmem>>, %arg7: memref<1x4xf32, #tpu.memory_space<vmem>>, %arg8: memref<1x16x16x4xf32, #tpu.memory_space<vmem>>, %arg9: memref<1x2x4xf32, #tpu.memory_space<vmem>>) attributes {dimension_semantics = [#tpu.dimension_semantics<parallel>, #tpu.dimension_semantics<parallel>], iteration_bounds = array<i64: 2, 1>, scalar_prefetch = 0 : i64, scratch_operands = 0 : i64, tpu.core_type = #tpu.core_type<tc>, window_params = [{transform_indices = @transform_0, window_bounds = array<i64: 1, 16, 18, 4>}, {transform_indices = @transform_1, window_bounds = array<i64: 1, 2, 18, 4>}, {pipeline_mode = #tpu.pipeline_mode<synchronous>, transform_indices = @transform_2, window_bounds = array<i64: 1, 4>}, {pipeline_mode = #tpu.pipeline_mode<synchronous>, transform_indices = @transform_3, window_bounds = array<i64: 1, 4>}, {pipeline_mode = #tpu.pipeline_mode<synchronous>, transform_indices = @transform_4, window_bounds = array<i64: 3, 12, 4>}, {pipeline_mode = #tpu.pipeline_mode<synchronous>, transform_indices = @transform_5, window_bounds = array<i64: 1, 4>}, {transform_indices = @transform_6, window_bounds = array<i64: 1, 16, 16, 4>}, {transform_indices = @transform_7, window_bounds = array<i64: 1, 2, 4>}]} {
    %c0 = arith.constant 0 : index
    %c0_0 = arith.constant 0 : index
    %c0_1 = arith.constant 0 : index
    %c0_2 = arith.constant 0 : index
    %0 = vector.load %arg2[%c0, %c0_0, %c0_1, %c0_2] : memref<1x16x18x4xf32, #tpu.memory_space<vmem>>, vector<1x16x18x4xf32>
    %1 = vector.shape_cast %0 : vector<1x16x18x4xf32> to vector<16x18x4xf32>
    %c0_3 = arith.constant 0 : index
    %c0_4 = arith.constant 0 : index
    %c0_5 = arith.constant 0 : index
    %c0_6 = arith.constant 0 : index
    %2 = vector.load %arg3[%c0_3, %c0_4, %c0_5, %c0_6] : memref<1x2x18x4xf32, #tpu.memory_space<vmem>>, vector<1x2x18x4xf32>
    %3 = vector.shape_cast %2 : vector<1x2x18x4xf32> to vector<2x18x4xf32>
    %4 = tpu.concatenate %1, %3 in 0 : vector<16x18x4xf32>, vector<2x18x4xf32> -> vector<18x18x4xf32>
    %c0_7 = arith.constant 0 : index
    %c0_8 = arith.constant 0 : index
    %5 = vector.load %arg4[%c0_7, %c0_8] : memref<1x4xf32, #tpu.memory_space<vmem>>, vector<1x4xf32>
    %6 = vector.shape_cast %5 : vector<1x4xf32> to vector<1x1x4xf32>
    %7 = vector.broadcast %6 : vector<1x1x4xf32> to vector<18x18x4xf32>
    %8 = arith.mulf %4, %7 : vector<18x18x4xf32>
    %c0_9 = arith.constant 0 : index
    %c0_10 = arith.constant 0 : index
    %9 = vector.load %arg5[%c0_9, %c0_10] : memref<1x4xf32, #tpu.memory_space<vmem>>, vector<1x4xf32>
    %10 = vector.shape_cast %9 : vector<1x4xf32> to vector<1x1x4xf32>
    %11 = vector.broadcast %10 : vector<1x1x4xf32> to vector<18x18x4xf32>
    %12 = arith.addf %8, %11 : vector<18x18x4xf32>
    %cst = arith.constant 0.000000e+00 : f32
    %13 = vector.broadcast %cst : f32 to vector<18x18x4xf32>
    %14 = arith.maximumf %12, %13 : vector<18x18x4xf32>
    %15 = tpu.iota {dimensions = array<i32: 0>} : vector<18x18x4xi32>
    %c16_i32 = arith.constant 16 : i32
    %16 = arith.muli %arg1, %c16_i32 : i32
    %17 = vector.broadcast %16 : i32 to vector<18x18x4xi32>
    %18 = arith.addi %15, %17 : vector<18x18x4xi32>
    %19 = tpu.iota {dimensions = array<i32: 1>} : vector<18x18x4xi32>
    %c1_i32 = arith.constant 1 : i32
    %20 = vector.broadcast %c1_i32 : i32 to vector<18x18x4xi32>
    %21 = arith.cmpi sge, %18, %20 : vector<18x18x4xi32>
    %c16_i32_11 = arith.constant 16 : i32
    %22 = vector.broadcast %c16_i32_11 : i32 to vector<18x18x4xi32>
    %23 = arith.cmpi sle, %18, %22 : vector<18x18x4xi32>
    %24 = arith.andi %21, %23 : vector<18x18x4xi1>
    %c1_i32_12 = arith.constant 1 : i32
    %25 = vector.broadcast %c1_i32_12 : i32 to vector<18x18x4xi32>
    %26 = arith.cmpi sge, %19, %25 : vector<18x18x4xi32>
    %27 = arith.andi %24, %26 : vector<18x18x4xi1>
    %c16_i32_13 = arith.constant 16 : i32
    %28 = vector.broadcast %c16_i32_13 : i32 to vector<18x18x4xi32>
    %29 = arith.cmpi sle, %19, %28 : vector<18x18x4xi32>
    %30 = arith.andi %27, %29 : vector<18x18x4xi1>
    %cst_14 = arith.constant 0.000000e+00 : f32
    %31 = vector.broadcast %cst_14 : f32 to vector<18x18x4xf32>
    %32 = arith.select %30, %14, %31 : vector<18x18x4xi1>, vector<18x18x4xf32>
    %cst_15 = arith.constant 0.000000e+00 : f32
    %33 = vector.broadcast %cst_15 : f32 to vector<256x4xf32>
    %34 = vector.extract_strided_slice %32 {offsets = [0, 0, 0], sizes = [16, 18, 4], strides = [1, 1, 1]} : vector<18x18x4xf32> to vector<16x18x4xf32>
    %35 = vector.extract_strided_slice %34 {offsets = [0, 0, 0], sizes = [16, 16, 4], strides = [1, 1, 1]} : vector<16x18x4xf32> to vector<16x16x4xf32>
    %36 = vector.extract_strided_slice %34 {offsets = [0, 1, 0], sizes = [16, 16, 4], strides = [1, 1, 1]} : vector<16x18x4xf32> to vector<16x16x4xf32>
    %37 = vector.extract_strided_slice %34 {offsets = [0, 2, 0], sizes = [16, 16, 4], strides = [1, 1, 1]} : vector<16x18x4xf32> to vector<16x16x4xf32>
    %38 = tpu.concatenate %35, %36, %37 in 2 : vector<16x16x4xf32>, vector<16x16x4xf32>, vector<16x16x4xf32> -> vector<16x16x12xf32>
    %39 = vector.shape_cast %38 : vector<16x16x12xf32> to vector<256x12xf32>
    %c0_16 = arith.constant 0 : index
    %c0_17 = arith.constant 0 : index
    %c0_18 = arith.constant 0 : index
    %40 = vector.load %arg6[%c0_16, %c0_17, %c0_18] : memref<3x12x4xf32, #tpu.memory_space<vmem>>, vector<1x12x4xf32>
    %41 = vector.shape_cast %40 : vector<1x12x4xf32> to vector<12x4xf32>
    %cst_19 = arith.constant dense<0.000000e+00> : vector<256x4xf32>
    %42 = tpu.matmul %39, %41, %cst_19 {dimension_numbers = #tpu.dot_dimension_numbers<[1], [0], [0], [1], [0, 0, 1, 1], [], []>} : vector<256x12xf32>, vector<12x4xf32>, vector<256x4xf32> -> vector<256x4xf32>
    %43 = arith.addf %33, %42 : vector<256x4xf32>
    %44 = vector.extract_strided_slice %32 {offsets = [1, 0, 0], sizes = [16, 18, 4], strides = [1, 1, 1]} : vector<18x18x4xf32> to vector<16x18x4xf32>
    %45 = vector.extract_strided_slice %44 {offsets = [0, 0, 0], sizes = [16, 16, 4], strides = [1, 1, 1]} : vector<16x18x4xf32> to vector<16x16x4xf32>
    %46 = vector.extract_strided_slice %44 {offsets = [0, 1, 0], sizes = [16, 16, 4], strides = [1, 1, 1]} : vector<16x18x4xf32> to vector<16x16x4xf32>
    %47 = vector.extract_strided_slice %44 {offsets = [0, 2, 0], sizes = [16, 16, 4], strides = [1, 1, 1]} : vector<16x18x4xf32> to vector<16x16x4xf32>
    %48 = tpu.concatenate %45, %46, %47 in 2 : vector<16x16x4xf32>, vector<16x16x4xf32>, vector<16x16x4xf32> -> vector<16x16x12xf32>
    %49 = vector.shape_cast %48 : vector<16x16x12xf32> to vector<256x12xf32>
    %c1 = arith.constant 1 : index
    %c0_20 = arith.constant 0 : index
    %c0_21 = arith.constant 0 : index
    %50 = vector.load %arg6[%c1, %c0_20, %c0_21] : memref<3x12x4xf32, #tpu.memory_space<vmem>>, vector<1x12x4xf32>
    %51 = vector.shape_cast %50 : vector<1x12x4xf32> to vector<12x4xf32>
    %cst_22 = arith.constant dense<0.000000e+00> : vector<256x4xf32>
    %52 = tpu.matmul %49, %51, %cst_22 {dimension_numbers = #tpu.dot_dimension_numbers<[1], [0], [0], [1], [0, 0, 1, 1], [], []>} : vector<256x12xf32>, vector<12x4xf32>, vector<256x4xf32> -> vector<256x4xf32>
    %53 = arith.addf %43, %52 : vector<256x4xf32>
    %54 = vector.extract_strided_slice %32 {offsets = [2, 0, 0], sizes = [16, 18, 4], strides = [1, 1, 1]} : vector<18x18x4xf32> to vector<16x18x4xf32>
    %55 = vector.extract_strided_slice %54 {offsets = [0, 0, 0], sizes = [16, 16, 4], strides = [1, 1, 1]} : vector<16x18x4xf32> to vector<16x16x4xf32>
    %56 = vector.extract_strided_slice %54 {offsets = [0, 1, 0], sizes = [16, 16, 4], strides = [1, 1, 1]} : vector<16x18x4xf32> to vector<16x16x4xf32>
    %57 = vector.extract_strided_slice %54 {offsets = [0, 2, 0], sizes = [16, 16, 4], strides = [1, 1, 1]} : vector<16x18x4xf32> to vector<16x16x4xf32>
    %58 = tpu.concatenate %55, %56, %57 in 2 : vector<16x16x4xf32>, vector<16x16x4xf32>, vector<16x16x4xf32> -> vector<16x16x12xf32>
    %59 = vector.shape_cast %58 : vector<16x16x12xf32> to vector<256x12xf32>
    %c2 = arith.constant 2 : index
    %c0_23 = arith.constant 0 : index
    %c0_24 = arith.constant 0 : index
    %60 = vector.load %arg6[%c2, %c0_23, %c0_24] : memref<3x12x4xf32, #tpu.memory_space<vmem>>, vector<1x12x4xf32>
    %61 = vector.shape_cast %60 : vector<1x12x4xf32> to vector<12x4xf32>
    %cst_25 = arith.constant dense<0.000000e+00> : vector<256x4xf32>
    %62 = tpu.matmul %59, %61, %cst_25 {dimension_numbers = #tpu.dot_dimension_numbers<[1], [0], [0], [1], [0, 0, 1, 1], [], []>} : vector<256x12xf32>, vector<12x4xf32>, vector<256x4xf32> -> vector<256x4xf32>
    %63 = arith.addf %53, %62 : vector<256x4xf32>
    %c0_26 = arith.constant 0 : index
    %c0_27 = arith.constant 0 : index
    %64 = vector.load %arg7[%c0_26, %c0_27] : memref<1x4xf32, #tpu.memory_space<vmem>>, vector<1x4xf32>
    %65 = vector.broadcast %64 : vector<1x4xf32> to vector<256x4xf32>
    %66 = arith.addf %63, %65 : vector<256x4xf32>
    %67 = vector.shape_cast %66 : vector<256x4xf32> to vector<16x16x4xf32>
    %c0_28 = arith.constant 0 : index
    %c0_29 = arith.constant 0 : index
    %c0_30 = arith.constant 0 : index
    %c0_31 = arith.constant 0 : index
    %68 = vector.load %arg8[%c0_28, %c0_29, %c0_30, %c0_31] : memref<1x16x16x4xf32, #tpu.memory_space<vmem>>, vector<1x16x16x4xf32>
    %69 = vector.shape_cast %68 : vector<1x16x16x4xf32> to vector<16x16x4xf32>
    %70 = vector.shape_cast %67 : vector<16x16x4xf32> to vector<1x16x16x4xf32>
    tpu.vector_store %arg8[%c0_28, %c0_29, %c0_30, %c0_31], %70 {strides = array<i32>} : memref<1x16x16x4xf32, #tpu.memory_space<vmem>>, vector<1x16x16x4xf32>,
    %cst_32 = arith.constant dense<0.000000e+00> : vector<4xf32>
    %71 = vector.multi_reduction <add>, %66, %cst_32 [0] : vector<256x4xf32> to vector<4xf32>
    %72 = vector.shape_cast %71 : vector<4xf32> to vector<1x4xf32>
    %73 = arith.mulf %66, %66 : vector<256x4xf32>
    %cst_33 = arith.constant dense<0.000000e+00> : vector<4xf32>
    %74 = vector.multi_reduction <add>, %73, %cst_33 [0] : vector<256x4xf32> to vector<4xf32>
    %75 = vector.shape_cast %74 : vector<4xf32> to vector<1x4xf32>
    %76 = tpu.concatenate %72, %75 in 0 : vector<1x4xf32>, vector<1x4xf32> -> vector<2x4xf32>
    %77 = vector.shape_cast %76 : vector<2x4xf32> to vector<1x2x4xf32>
    %c0_34 = arith.constant 0 : index
    %c0_35 = arith.constant 0 : index
    %c0_36 = arith.constant 0 : index
    %78 = vector.load %arg9[%c0_34, %c0_35, %c0_36] : memref<1x2x4xf32, #tpu.memory_space<vmem>>, vector<1x2x4xf32>
    tpu.vector_store %arg9[%c0_34, %c0_35, %c0_36], %77 {strides = array<i32>} : memref<1x2x4xf32, #tpu.memory_space<vmem>>, vector<1x2x4xf32>,
    return
  }
  func.func @transform_0(%arg0: i32, %arg1: i32) -> (i32, i32, i32, i32) {
    %c0_i32 = arith.constant 0 : i32
    %c0_i32_0 = arith.constant 0 : i32
    %c0_i32_1 = arith.constant 0 : i32
    return %arg0, %arg1, %c0_i32, %c0_i32_0 : i32, i32, i32, i32
  }
  func.func @transform_1(%arg0: i32, %arg1: i32) -> (i32, i32, i32, i32) {
    %c1_i32 = arith.constant 1 : i32
    %0 = arith.addi %arg1, %c1_i32 : i32
    %c8_i32 = arith.constant 8 : i32
    %1 = arith.muli %0, %c8_i32 : i32
    %c0_i32 = arith.constant 0 : i32
    %c0_i32_0 = arith.constant 0 : i32
    %c0_i32_1 = arith.constant 0 : i32
    return %arg0, %1, %c0_i32, %c0_i32_0 : i32, i32, i32, i32
  }
  func.func @transform_2(%arg0: i32, %arg1: i32) -> (i32, i32) {
    %c0_i32 = arith.constant 0 : i32
    %c0_i32_0 = arith.constant 0 : i32
    %c0_i32_1 = arith.constant 0 : i32
    return %c0_i32, %c0_i32_0 : i32, i32
  }
  func.func @transform_3(%arg0: i32, %arg1: i32) -> (i32, i32) {
    %c0_i32 = arith.constant 0 : i32
    %c0_i32_0 = arith.constant 0 : i32
    %c0_i32_1 = arith.constant 0 : i32
    return %c0_i32, %c0_i32_0 : i32, i32
  }
  func.func @transform_4(%arg0: i32, %arg1: i32) -> (i32, i32, i32) {
    %c0_i32 = arith.constant 0 : i32
    %c0_i32_0 = arith.constant 0 : i32
    %c0_i32_1 = arith.constant 0 : i32
    %c0_i32_2 = arith.constant 0 : i32
    return %c0_i32, %c0_i32_0, %c0_i32_1 : i32, i32, i32
  }
  func.func @transform_5(%arg0: i32, %arg1: i32) -> (i32, i32) {
    %c0_i32 = arith.constant 0 : i32
    %c0_i32_0 = arith.constant 0 : i32
    %c0_i32_1 = arith.constant 0 : i32
    return %c0_i32, %c0_i32_0 : i32, i32
  }
  func.func @transform_6(%arg0: i32, %arg1: i32) -> (i32, i32, i32, i32) {
    %c0_i32 = arith.constant 0 : i32
    %c0_i32_0 = arith.constant 0 : i32
    %c0_i32_1 = arith.constant 0 : i32
    return %arg0, %arg1, %c0_i32, %c0_i32_0 : i32, i32, i32, i32
  }
  func.func @transform_7(%arg0: i32, %arg1: i32) -> (i32, i32, i32) {
    %c1_i32 = arith.constant 1 : i32
    %0 = arith.muli %arg0, %c1_i32 : i32
    %1 = arith.addi %0, %arg1 : i32
    %c0_i32 = arith.constant 0 : i32
    %c0_i32_0 = arith.constant 0 : i32
    %c0_i32_1 = arith.constant 0 : i32
    return %1, %c0_i32, %c0_i32_0 : i32, i32, i32
  }
}

module attributes {stable_mosaic.version = 11 : i64} {
  func.func @_bn_relu_kernel(%arg0: i32, %arg1: i32, %arg2: memref<1x16x16x4xf32, #tpu.memory_space<vmem>>, %arg3: memref<1x4xf32, #tpu.memory_space<vmem>>, %arg4: memref<1x4xf32, #tpu.memory_space<vmem>>, %arg5: memref<1x16x16x4xf32, #tpu.memory_space<vmem>>) attributes {dimension_semantics = [#tpu.dimension_semantics<parallel>, #tpu.dimension_semantics<parallel>], iteration_bounds = array<i64: 2, 1>, scalar_prefetch = 0 : i64, scratch_operands = 0 : i64, tpu.core_type = #tpu.core_type<tc>, window_params = [{transform_indices = @transform_0, window_bounds = array<i64: 1, 16, 16, 4>}, {pipeline_mode = #tpu.pipeline_mode<synchronous>, transform_indices = @transform_1, window_bounds = array<i64: 1, 4>}, {pipeline_mode = #tpu.pipeline_mode<synchronous>, transform_indices = @transform_2, window_bounds = array<i64: 1, 4>}, {transform_indices = @transform_3, window_bounds = array<i64: 1, 16, 16, 4>}]} {
    %c0 = arith.constant 0 : index
    %c0_0 = arith.constant 0 : index
    %0 = vector.load %arg3[%c0, %c0_0] : memref<1x4xf32, #tpu.memory_space<vmem>>, vector<1x4xf32>
    %1 = vector.shape_cast %0 : vector<1x4xf32> to vector<1x1x1x4xf32>
    %c0_1 = arith.constant 0 : index
    %c0_2 = arith.constant 0 : index
    %2 = vector.load %arg4[%c0_1, %c0_2] : memref<1x4xf32, #tpu.memory_space<vmem>>, vector<1x4xf32>
    %3 = vector.shape_cast %2 : vector<1x4xf32> to vector<1x1x1x4xf32>
    %c0_3 = arith.constant 0 : index
    %c0_4 = arith.constant 0 : index
    %c0_5 = arith.constant 0 : index
    %c0_6 = arith.constant 0 : index
    %4 = vector.load %arg2[%c0_3, %c0_4, %c0_5, %c0_6] : memref<1x16x16x4xf32, #tpu.memory_space<vmem>>, vector<1x16x16x4xf32>
    %5 = vector.broadcast %1 : vector<1x1x1x4xf32> to vector<1x16x16x4xf32>
    %6 = arith.mulf %4, %5 : vector<1x16x16x4xf32>
    %7 = vector.broadcast %3 : vector<1x1x1x4xf32> to vector<1x16x16x4xf32>
    %8 = arith.addf %6, %7 : vector<1x16x16x4xf32>
    %cst = arith.constant 0.000000e+00 : f32
    %9 = vector.broadcast %cst : f32 to vector<1x16x16x4xf32>
    %10 = arith.maximumf %8, %9 : vector<1x16x16x4xf32>
    %c0_7 = arith.constant 0 : index
    %c0_8 = arith.constant 0 : index
    %c0_9 = arith.constant 0 : index
    %c0_10 = arith.constant 0 : index
    %11 = vector.load %arg5[%c0_7, %c0_8, %c0_9, %c0_10] : memref<1x16x16x4xf32, #tpu.memory_space<vmem>>, vector<1x16x16x4xf32>
    tpu.vector_store %arg5[%c0_7, %c0_8, %c0_9, %c0_10], %10 {strides = array<i32>} : memref<1x16x16x4xf32, #tpu.memory_space<vmem>>, vector<1x16x16x4xf32>,
    return
  }
  func.func @transform_0(%arg0: i32, %arg1: i32) -> (i32, i32, i32, i32) {
    %c0_i32 = arith.constant 0 : i32
    %c0_i32_0 = arith.constant 0 : i32
    %c0_i32_1 = arith.constant 0 : i32
    return %arg0, %arg1, %c0_i32, %c0_i32_0 : i32, i32, i32, i32
  }
  func.func @transform_1(%arg0: i32, %arg1: i32) -> (i32, i32) {
    %c0_i32 = arith.constant 0 : i32
    %c0_i32_0 = arith.constant 0 : i32
    %c0_i32_1 = arith.constant 0 : i32
    return %c0_i32, %c0_i32_0 : i32, i32
  }
  func.func @transform_2(%arg0: i32, %arg1: i32) -> (i32, i32) {
    %c0_i32 = arith.constant 0 : i32
    %c0_i32_0 = arith.constant 0 : i32
    %c0_i32_1 = arith.constant 0 : i32
    return %c0_i32, %c0_i32_0 : i32, i32
  }
  func.func @transform_3(%arg0: i32, %arg1: i32) -> (i32, i32, i32, i32) {
    %c0_i32 = arith.constant 0 : i32
    %c0_i32_0 = arith.constant 0 : i32
    %c0_i32_1 = arith.constant 0 : i32
    return %arg0, %arg1, %c0_i32, %c0_i32_0 : i32, i32, i32, i32
  }
}

</mosaic_0001>

<llo_original>
// kernel: tile.6
$region0: #{tile.6}
  #allocation0 [shape = 's32[1]{0}', space=sflag, size = 0x4, scoped, tag = 'scoped memory for tile.6']
  %s0 = inlined_call_operand.vmem [shape: f32[2], index: 0, kind: input, shape index: {}]
  %s1 = inlined_call_operand.vmem [shape: f32[2,1,2,1,1,2], index: 1, kind: output, shape index: {}]
  // Predicated region
  $region2: #{tile.6} parent=0 // pred_check
    _
  $region3: #{tile.6} parent=0 // pred_check_branch
    %3 = sbr.rel (0) target = $region5
  $region4: #{tile.6} parent=0 // pred_region
    _
  $region5: #{tile.6} parent=0 // pred_fallthru
    _
  %v4 = vld [vmem:[%s0] ss:$0 sm:$0xff]
  %5 = vst [vmem:[%s1] sm:$0x3] %v4
  %s6 = scalar_lea.vmem %s1, 2
  %7 = vst [vmem:[%s6] sm:$0x3] %v4

// kernel: tile.7
$region0: #{tile.7}
  %s0 = inlined_call_operand.vmem [shape: f32[2,1,2,1,1,2], index: 0, kind: input, shape index: {}]
  %s1 = inlined_call_operand.vmem [shape: f32[1,8], index: 1, kind: output, shape index: {}]
  $region1: #{tile.7} parent=0
    #allocation0 [shape = 'u8[4096]{0}', space=vmem, size = 0x1000, scoped, tag = 'scoped mem for output reshape']
    #allocation1 [shape = 'u8[8192]{0}', space=vmem, size = 0x2000, scoped, tag = 'scoped mem for input reshape']
    %s3 = ssub.s32 4, 1
    %s4 = scalar_lea.vmem %s0, 2
    %v5 = vld [vmem:[%s4] sm:%s3]
    %s6 = scalar_lea.vmem [#allocation1], 8
    %7 = vst [vmem:[%s6] sm:%s3] %v5
    %v8 = vld [vmem:[%s0] sm:%s3]
    %9 = vst [vmem:[#allocation1] sm:%s3] %v8
    %v10 = vld [vmem:[#allocation1] sm:$0x1]
    %vm11 = vcmask 15360
    %12 = vst.msk [vmem:[#allocation0] sm:$0x1] %vm11, %v10
    %s13 = scalar_lea.vmem [#allocation1], 9
    %v14 = vld [vmem:[%s13] sm:$0x1]
    %15 = vrot.lane.b32.xlu0 %v14, 6
    %v16 = vpop.permute.xlu0 %15
    %vm17 = vcmask 64560
    %18 = vst.msk [vmem:[#allocation0] sm:$0x1] %vm17, %v16
    %s19 = scalar_lea.vmem [#allocation1], 8
    %v20 = vld [vmem:[%s19] sm:$0x1]
    %21 = vrot.lane.b32.xlu0 %v20, 4
    %v22 = vpop.permute.xlu0 %21
    %vm23 = vcmask 48160
    %24 = vst.msk [vmem:[#allocation0] sm:$0x1] %vm23, %v22
    %s25 = scalar_lea.vmem [#allocation1], 1
    %v26 = vld [vmem:[%s25] sm:$0x1]
    %27 = vrot.lane.b32.xlu0 %v26, 2
    %v28 = vpop.permute.xlu0 %27
    %vm29 = vcmask 31760
    %30 = vst.msk [vmem:[#allocation0] sm:$0x1] %vm29, %v28
    %s32 = ssub.s32 2, 1
    %v33 = vld [vmem:[#allocation0] sm:%s32]
    %s35 = ssub.s32 2, 1
    %36 = vst [vmem:[%s1] sm:%s35] %v33

// kernel: up_forward.4
$region0: #{up_forward.4}
  #allocation0 [shape = 'u32[]', space=smem, size = 0x4, offset = 0x4, fixed_abs, tag = 'smem constant byte address 0x4 - core index']
  #allocation1 [shape = 'u32[72,128]{1,0:T(1,128)}', space=vmem, size = 0x9000, scoped, tag = 'internal scratch']
  %s0 = inlined_call_operand.vmem [shape: f32[2,8,8,4], index: 0, kind: input, shape index: {}]
  %s1 = inlined_call_operand.vmem [shape: f32[4,8], index: 1, kind: input, shape index: {}]
  %s2 = inlined_call_operand.vmem [shape: f32[1,8], index: 2, kind: input, shape index: {}]
  %s3 = inlined_call_operand.vmem [shape: f32[2,8,8,8], index: 3, kind: output, shape index: {}]
  %s4 = sld [smem:[#allocation0]]
  $region45: #{up_forward.4} parent=0
    _
  %s6 = ssub.s32 1, %s4
  %s7 = scalar_select 0, %s6, %s4
  loop: start=0, step=1, limit=4
  $region2: #{up_forward.4} parent=0 // loop_pre_header
    _
  $region3: #{up_forward.4} parent=0 // loop_header
    %s9 = sphi 0, %s13
    %p10 = scmp.ge.s32.totalorder %s9, 4
    %s16 = sphi 0, %s28
    %s17 = sphi 0, %s24
    %s18 = sphi 0, %s16
    %s19 = sphi 0, %s17
    %s20 = sphi 0, %s18
    %s21 = sphi 0, %s19
    %s33 = sphi 0, %s35
    %s36 = sphi 0, %s33
    %s37 = sphi 0, %s36
    %s53 = sphi 0, %s37
    %s57 = sphi 0, %s57
    %s59 = sphi 0, %s57
    %s60 = sphi 0, %s59
    %s74 = sphi 0, %s60
    %s78 = sphi 0, %s78
    %s80 = sphi 0, %s78
    %s81 = sphi 0, %s80
    %s95 = sphi 0, %s81
    %s103 = sphi 0, %s105
    %s106 = sphi 0, %s103
    %s107 = sphi 0, %s106
    %s123 = sphi 0, %s107
  $region4: #{up_forward.4} parent=0 // loop_header_branch
    %12 = sbr.rel (%p10) target = $region8
  $region5: #{up_forward.4} parent=0 // loop_body
    %s14 = ssub.s32 %s9, 1
    %s15 = ssub.s32 %s9, 2
    %s22 = sadd.s32 1, %s17
    %p23 = scmp.ge.s32.totalorder %s22, 1
    %s24 = scalar_select %p23, 0, %s22
    %s25 = sadd.s32 1, %s16
    %s26 = scalar_select %p23, %s25, %s16
    %p27 = scmp.ge.s32.totalorder %s26, 2
    %s28 = scalar_select %p27, 0, %s26
    %s29 = ssub.s32 %s16, %s28
    %s30 = ssub.s32 %s17, %s24
    %s31 = sor.u32 %s29, %s30
    %p32 = scmp.eq.s32.totalorder %s31, 0
    %s34 = sadd.s32 %s33, 1
    %s35 = scalar_select %p32, %s33, %s34
    %p38 = pneg %p32
    %p39 = scmp.eq.s32.totalorder %s9, 1
    %p40 = por %p38, %p39
    %p41 = scmp.ne.s32.totalorder %s33, %s36
    %p42 = scmp.eq.s32.totalorder %s9, 0
    %p43 = por %p41, %p42
    %p44 = scmp.ne.s32.totalorder %s33, %s36
    %p45 = scmp.eq.s32.totalorder %s14, 1
    %p46 = por %p44, %p45
    %p47 = scmp.ne.s32.totalorder %s36, %s37
    %p48 = scmp.eq.s32.totalorder %s14, 0
    %p49 = por %p47, %p48
    %p50 = scmp.ne.s32.totalorder %s36, %s37
    %p51 = scmp.eq.s32.totalorder %s15, 1
    %p52 = por %p50, %p51
    %p54 = scmp.ne.s32.totalorder %s37, %s53
    %p55 = scmp.eq.s32.totalorder %s15, 0
    %p56 = por %p54, %p55
    %s58 = sadd.s32 %s57, 1
    %p61 = scmp.eq.s32.totalorder %s9, 1
    %p62 = scmp.ne.s32.totalorder %s57, %s59
    %p63 = scmp.eq.s32.totalorder %s9, 0
    %p64 = por %p62, %p63
    %p65 = scmp.ne.s32.totalorder %s57, %s59
    %p66 = scmp.eq.s32.totalorder %s14, 1
    %p67 = por %p65, %p66
    %p68 = scmp.ne.s32.totalorder %s59, %s60
    %p69 = scmp.eq.s32.totalorder %s14, 0
    %p70 = por %p68, %p69
    %p71 = scmp.ne.s32.totalorder %s59, %s60
    %p72 = scmp.eq.s32.totalorder %s15, 1
    %p73 = por %p71, %p72
    %p75 = scmp.ne.s32.totalorder %s60, %s74
    %p76 = scmp.eq.s32.totalorder %s15, 0
    %p77 = por %p75, %p76
    %s79 = sadd.s32 %s78, 1
    %p82 = scmp.eq.s32.totalorder %s9, 1
    %p83 = scmp.ne.s32.totalorder %s78, %s80
    %p84 = scmp.eq.s32.totalorder %s9, 0
    %p85 = por %p83, %p84
    %p86 = scmp.ne.s32.totalorder %s78, %s80
    %p87 = scmp.eq.s32.totalorder %s14, 1
    %p88 = por %p86, %p87
    %p89 = scmp.ne.s32.totalorder %s80, %s81
    %p90 = scmp.eq.s32.totalorder %s14, 0
    %p91 = por %p89, %p90
    %p92 = scmp.ne.s32.totalorder %s80, %s81
    %p93 = scmp.eq.s32.totalorder %s15, 1
    %p94 = por %p92, %p93
    %p96 = scmp.ne.s32.totalorder %s81, %s95
    %p97 = scmp.eq.s32.totalorder %s15, 0
    %p98 = por %p96, %p97
    %s99 = ssub.s32 %s16, %s28
    %s100 = ssub.s32 %s17, %s24
    %s101 = sor.u32 %s99, %s100
    %p102 = scmp.eq.s32.totalorder %s101, 0
    %s104 = sadd.s32 %s103, 1
    %s105 = scalar_select %p102, %s103, %s104
    %p108 = pneg %p102
    %p109 = scmp.eq.s32.totalorder %s9, 1
    %p110 = por %p108, %p109
    %p111 = scmp.ne.s32.totalorder %s103, %s106
    %p112 = scmp.eq.s32.totalorder %s9, 0
    %p113 = por %p111, %p112
    %p114 = scmp.ne.s32.totalorder %s103, %s106
    %p115 = scmp.eq.s32.totalorder %s14, 1
    %p116 = por %p114, %p115
    %p117 = scmp.ne.s32.totalorder %s106, %s107
    %p118 = scmp.eq.s32.totalorder %s14, 0
    %p119 = por %p117, %p118
    %p120 = scmp.ne.s32.totalorder %s106, %s107
    %p121 = scmp.eq.s32.totalorder %s15, 1
    %p122 = por %p120, %p121
    %p124 = scmp.ne.s32.totalorder %s107, %s123
    %p125 = scmp.eq.s32.totalorder %s15, 0
    %p126 = por %p124, %p125
    %p127 = scmp.le.s32.totalorder 1, %s9
    %p128 = scmp.lt.s32.totalorder %s9, 3
    %p129 = pnand %p127, %p128
    %p130 = pneg %p129
    // Predicated region
    $region9: #{up_forward.4} parent=5 // pred_check
      _
    $region10: #{up_forward.4} parent=5 // pred_check_branch
      %132 = sbr.rel (%p129) target = $region12
    $region11: #{up_forward.4} parent=5 // pred_region
      %s133 = ssub.s32 %s9, 1
      // Predicated region
      $region13: #{up_forward.4} parent=11 // pred_check
        %p134 = pneg %p70
      $region14: #{up_forward.4} parent=11 // pred_check_branch
        %136 = sbr.rel (%p134) target = $region16
      $region15: #{up_forward.4} parent=11 // pred_region
        _
      $region16: #{up_forward.4} parent=11 // pred_fallthru
        _
      // Predicated region
      $region17: #{up_forward.4} parent=11 // pred_check
        %p137 = pneg %p91
      $region18: #{up_forward.4} parent=11 // pred_check_branch
        %139 = sbr.rel (%p137) target = $region20
      $region19: #{up_forward.4} parent=11 // pred_region
        _
      $region20: #{up_forward.4} parent=11 // pred_fallthru
        _
    $region12: #{up_forward.4} parent=5 // pred_fallthru
      _
    %p140 = scmp.lt.s32.totalorder %s9, 2
    // Predicated region
    $region21: #{up_forward.4} parent=5 // pred_check
      %p141 = pneg %p140
    $region22: #{up_forward.4} parent=5 // pred_check_branch
      %143 = sbr.rel (%p141) target = $region24
    $region23: #{up_forward.4} parent=5 // pred_region
      // Predicated region
      $region25: #{up_forward.4} parent=23 // pred_check
        %p144 = pneg %p43
      $region26: #{up_forward.4} parent=23 // pred_check_branch
        %146 = sbr.rel (%p144) target = $region28
      $region27: #{up_forward.4} parent=23 // pred_region
        %s147 = smul.u32 8, %s17
        %p148 = scmp.lt.s32.totalorder %s16, 1
        %s149 = scalar_select %p148, %s16, 1
        %p150 = scmp.lt.s32.totalorder %s147, 7
        %s151 = scalar_select %p150, %s147, 7
        %s152 = smul.addr %s149, 8
        %s153 = sadd.s32 %s151, %s152
        %s154 = smul.addr %s153, 8
        %s155 = scalar_lea.vmem %s0, %s154
        %s156 = smul.u32 8, %s17
      $region28: #{up_forward.4} parent=23 // pred_fallthru
        _
    $region24: #{up_forward.4} parent=5 // pred_fallthru
      _
    %p157 = scmp.le.s32.totalorder 1, %s9
    %p158 = scmp.lt.s32.totalorder %s9, 3
    %p159 = pnand %p157, %p158
    %p160 = pneg %p159
    // Predicated region
    $region29: #{up_forward.4} parent=5 // pred_check
      _
    $region30: #{up_forward.4} parent=5 // pred_check_branch
      %162 = sbr.rel (%p159) target = $region32
    $region31: #{up_forward.4} parent=5 // pred_region
      %s163 = ssub.s32 %s9, 1
      %s164 = smul.u32 8, %s19
      %p165 = scmp.lt.s32.totalorder %s18, 1
      %s166 = scalar_select %p165, %s18, 1
      %p167 = scmp.lt.s32.totalorder %s164, 7
      %s168 = scalar_select %p167, %s164, 7
      %s169 = smul.addr %s166, 8
      %s170 = sadd.s32 %s168, %s169
      %s171 = smul.addr %s170, 8
      %s172 = scalar_lea.vmem %s0, %s171
      %p173 = pneg %p49
      %p174 = pneg %p46
      %p175 = pneg %p70
      %p176 = pneg %p67
      %p177 = pneg %p91
      %p178 = pneg %p88
      %p179 = pneg %p119
      %p180 = pneg %p116
      %s181 = smul.u32 8, %s19
      %p182 = scmp.lt.s32.totalorder %s18, 1
      %s183 = scalar_select %p182, %s18, 1
      %p184 = scmp.lt.s32.totalorder %s181, 7
      %s185 = scalar_select %p184, %s181, 7
      %s186 = smul.addr %s183, 8
      %s187 = sadd.s32 %s185, %s186
      %s188 = smul.addr %s187, 8
      %s189 = scalar_lea.vmem %s3, %s188
      %s190 = smul.u32 8, %s19
      %p191 = scmp.lt.s32.totalorder %s18, 1
      %s192 = scalar_select %p191, %s18, 1
      %p193 = scmp.lt.s32.totalorder %s190, 7
      %s194 = scalar_select %p193, %s190, 7
      %s195 = smul.addr %s192, 8
      %s196 = sadd.s32 %s194, %s195
      %s197 = smul.addr %s196, 8
      %s198 = scalar_lea.vmem %s0, %s197
      %s199 = smul.u32 8, %s19
      %s200 = smul.u32 8, %s19
      %p201 = scmp.lt.s32.totalorder %s18, 1
      %s202 = scalar_select %p201, %s18, 1
      %p203 = scmp.lt.s32.totalorder %s200, 7
      %s204 = scalar_select %p203, %s200, 7
      %s205 = smul.addr %s202, 8
      %s206 = sadd.s32 %s204, %s205
      %s207 = smul.addr %s206, 8
      %s208 = scalar_lea.vmem %s3, %s207
      %s209 = smul.u32 8, %s19
      %v210 = vld [vmem:[%s198] sm:$0xff]
      %v211 = vld [vmem:[%s198 + $0x8] sm:$0xff]
      %v212 = vld [vmem:[%s198 + $0x10] sm:$0xff]
      %v213 = vld [vmem:[%s198 + $0x18] sm:$0xff]
      %v214 = vld [vmem:[%s198 + $0x20] sm:$0xff]
      %v215 = vld [vmem:[%s198 + $0x28] sm:$0xff]
      %v216 = vld [vmem:[%s198 + $0x30] sm:$0xff]
      %v217 = vld [vmem:[%s198 + $0x38] sm:$0xff]
      %v218 = vld [vmem:[%s1] sm:$0xf]
      %v219 = vld [vmem:[%s2] sm:$0x1]
      %v221 = vperm.slane %v219, 0
      %vm223 = vcmask 31744
      %v225 = vsel %vm223, %v210, 0
      %v228 = vsel %vm223, %v211, 0
      %v231 = vsel %vm223, %v212, 0
      %v234 = vsel %vm223, %v213, 0
      %v237 = vsel %vm223, %v214, 0
      %v240 = vsel %vm223, %v215, 0
      %v243 = vsel %vm223, %v216, 0
      %v246 = vsel %vm223, %v217, 0
      %vm248 = vcmask 1043456
      %v250 = vsel %vm248, %v218, 0
      %252 = vmatpush.msra.mxu0 0.0
      %253 = vmatpush.msra.mxu0 0.0
      %254 = vmatpush.msra.mxu0 0.0
      %255 = vmatpush.msra.mxu0 0.0
      %256 = vmatpush.msra.mxu0 0.0
      %257 = vmatpush.msra.mxu0 0.0
      %258 = vmatpush.msra.mxu0 0.0
      %259 = vmatpush.msra.mxu0 0.0
      %260 = vmatpush.msra.mxu0 0.0
      %261 = vmatpush.msra.mxu0 0.0
      %262 = vmatpush.msra.mxu0 0.0
      %263 = vmatpush.msra.mxu0 0.0
      %264 = vmatpush.msra.mxu0 0.0
      %265 = vmatpush.msra.mxu0 0.0
      %266 = vmatpush.msra.mxu0 0.0
      %267 = vmatpush.msra.mxu0 %v250
      %268 = vmatmul.f32.gmra.mxu0 %v225
      %v269 = vpop.f32.mrf.mxu0
      %v270 = vadd.f32 %v221, %v269
      %271 = vmatmul.f32.gmra.mxu0 %v228
      %v272 = vpop.f32.mrf.mxu0
      %v273 = vadd.f32 %v221, %v272
      %274 = vmatmul.f32.gmra.mxu0 %v231
      %v275 = vpop.f32.mrf.mxu0
      %v276 = vadd.f32 %v221, %v275
      %277 = vmatmul.f32.gmra.mxu0 %v234
      %v278 = vpop.f32.mrf.mxu0
      %v279 = vadd.f32 %v221, %v278
      %280 = vmatmul.f32.gmra.mxu0 %v237
      %v281 = vpop.f32.mrf.mxu0
      %v282 = vadd.f32 %v221, %v281
      %283 = vmatmul.f32.gmra.mxu0 %v240
      %v284 = vpop.f32.mrf.mxu0
      %v285 = vadd.f32 %v221, %v284
      %286 = vmatmul.f32.gmra.mxu0 %v243
      %v287 = vpop.f32.mrf.mxu0
      %v288 = vadd.f32 %v221, %v287
      %289 = vmatmul.f32.gmra.mxu0 %v246
      %v290 = vpop.f32.mrf.mxu0
      %v291 = vadd.f32 %v221, %v290
      %292 = vdwg.mxu0
      %vm293 = vcmask 64512
      %294 = vst.msk [vmem:[%s208] sm:$0xff] %vm293, %v270
      %295 = vst.msk [vmem:[%s208 + $0x8] sm:$0xff] %vm293, %v273
      %296 = vst.msk [vmem:[%s208 + $0x10] sm:$0xff] %vm293, %v276
      %297 = vst.msk [vmem:[%s208 + $0x18] sm:$0xff] %vm293, %v279
      %298 = vst.msk [vmem:[%s208 + $0x20] sm:$0xff] %vm293, %v282
      %299 = vst.msk [vmem:[%s208 + $0x28] sm:$0xff] %vm293, %v285
      %300 = vst.msk [vmem:[%s208 + $0x30] sm:$0xff] %vm293, %v288
      %301 = vst.msk [vmem:[%s208 + $0x38] sm:$0xff] %vm293, %v291
      %s302 = smul.u32 8, %s19
      %p303 = scmp.lt.s32.totalorder %s18, 1
      %s304 = scalar_select %p303, %s18, 1
      %p305 = scmp.lt.s32.totalorder %s302, 7
      %s306 = scalar_select %p305, %s302, 7
      %s307 = smul.addr %s304, 8
      %s308 = sadd.s32 %s306, %s307
      %s309 = smul.addr %s308, 8
      %s310 = scalar_lea.vmem %s3, %s309
      // Predicated region
      $region33: #{up_forward.4} parent=31 // pred_check
        %p311 = pneg %p116
      $region34: #{up_forward.4} parent=31 // pred_check_branch
        %313 = sbr.rel (%p311) target = $region36
      $region35: #{up_forward.4} parent=31 // pred_region
        %s314 = smul.u32 8, %s19
      $region36: #{up_forward.4} parent=31 // pred_fallthru
        _
    $region32: #{up_forward.4} parent=5 // pred_fallthru
      _
    %p315 = scmp.le.s32.totalorder 2, %s9
    // Predicated region
    $region37: #{up_forward.4} parent=5 // pred_check
      %p316 = pneg %p315
    $region38: #{up_forward.4} parent=5 // pred_check_branch
      %318 = sbr.rel (%p316) target = $region40
    $region39: #{up_forward.4} parent=5 // pred_region
      %s319 = ssub.s32 %s9, 2
      // Predicated region
      $region41: #{up_forward.4} parent=39 // pred_check
        %p320 = pneg %p122
      $region42: #{up_forward.4} parent=39 // pred_check_branch
        %322 = sbr.rel (%p320) target = $region44
      $region43: #{up_forward.4} parent=39 // pred_region
        %s323 = smul.u32 8, %s21
        %p324 = scmp.lt.s32.totalorder %s20, 1
        %s325 = scalar_select %p324, %s20, 1
        %p326 = scmp.lt.s32.totalorder %s323, 7
        %s327 = scalar_select %p326, %s323, 7
        %s328 = smul.addr %s325, 8
        %s329 = sadd.s32 %s327, %s328
        %s330 = smul.addr %s329, 8
        %s331 = scalar_lea.vmem %s3, %s330
      $region44: #{up_forward.4} parent=39 // pred_fallthru
        _
    $region40: #{up_forward.4} parent=5 // pred_fallthru
      _
  $region6: #{up_forward.4} parent=0 // loop_footer
    %s13 = sadd.s32 1, %s9
  $region7: #{up_forward.4} parent=0 // loop_footer_branch
    %8 = sbr.rel target = $region3
  $region8: #{up_forward.4} parent=0 // loop_exit
    _

// kernel: up_forward.7
$region0: #{up_forward.7}
  #allocation0 [shape = 'u32[]', space=smem, size = 0x4, offset = 0x4, fixed_abs, tag = 'smem constant byte address 0x4 - core index']
  #allocation1 [shape = 'u32[72,128]{1,0:T(1,128)}', space=vmem, size = 0x9000, scoped, tag = 'internal scratch']
  %s0 = inlined_call_operand.vmem [shape: f32[2,16,16,4], index: 0, kind: input, shape index: {}]
  %s1 = inlined_call_operand.vmem [shape: f32[1,4], index: 1, kind: input, shape index: {}]
  %s2 = inlined_call_operand.vmem [shape: f32[1,4], index: 2, kind: input, shape index: {}]
  %s3 = inlined_call_operand.vmem [shape: f32[2,16,16,4], index: 3, kind: output, shape index: {}]
  %s4 = sld [smem:[#allocation0]]
  $region45: #{up_forward.7} parent=0
    _
  %s6 = ssub.s32 1, %s4
  %s7 = scalar_select 0, %s6, %s4
  loop: start=0, step=1, limit=4
  $region2: #{up_forward.7} parent=0 // loop_pre_header
    _
  $region3: #{up_forward.7} parent=0 // loop_header
    %s9 = sphi 0, %s13
    %p10 = scmp.ge.s32.totalorder %s9, 4
    %s16 = sphi 0, %s28
    %s17 = sphi 0, %s24
    %s18 = sphi 0, %s16
    %s19 = sphi 0, %s17
    %s20 = sphi 0, %s18
    %s21 = sphi 0, %s19
    %s33 = sphi 0, %s35
    %s36 = sphi 0, %s33
    %s37 = sphi 0, %s36
    %s53 = sphi 0, %s37
    %s57 = sphi 0, %s57
    %s59 = sphi 0, %s57
    %s60 = sphi 0, %s59
    %s74 = sphi 0, %s60
    %s78 = sphi 0, %s78
    %s80 = sphi 0, %s78
    %s81 = sphi 0, %s80
    %s95 = sphi 0, %s81
    %s103 = sphi 0, %s105
    %s106 = sphi 0, %s103
    %s107 = sphi 0, %s106
    %s123 = sphi 0, %s107
  $region4: #{up_forward.7} parent=0 // loop_header_branch
    %12 = sbr.rel (%p10) target = $region8
  $region5: #{up_forward.7} parent=0 // loop_body
    %s14 = ssub.s32 %s9, 1
    %s15 = ssub.s32 %s9, 2
    %s22 = sadd.s32 1, %s17
    %p23 = scmp.ge.s32.totalorder %s22, 1
    %s24 = scalar_select %p23, 0, %s22
    %s25 = sadd.s32 1, %s16
    %s26 = scalar_select %p23, %s25, %s16
    %p27 = scmp.ge.s32.totalorder %s26, 2
    %s28 = scalar_select %p27, 0, %s26
    %s29 = ssub.s32 %s16, %s28
    %s30 = ssub.s32 %s17, %s24
    %s31 = sor.u32 %s29, %s30
    %p32 = scmp.eq.s32.totalorder %s31, 0
    %s34 = sadd.s32 %s33, 1
    %s35 = scalar_select %p32, %s33, %s34
    %p38 = pneg %p32
    %p39 = scmp.eq.s32.totalorder %s9, 1
    %p40 = por %p38, %p39
    %p41 = scmp.ne.s32.totalorder %s33, %s36
    %p42 = scmp.eq.s32.totalorder %s9, 0
    %p43 = por %p41, %p42
    %p44 = scmp.ne.s32.totalorder %s33, %s36
    %p45 = scmp.eq.s32.totalorder %s14, 1
    %p46 = por %p44, %p45
    %p47 = scmp.ne.s32.totalorder %s36, %s37
    %p48 = scmp.eq.s32.totalorder %s14, 0
    %p49 = por %p47, %p48
    %p50 = scmp.ne.s32.totalorder %s36, %s37
    %p51 = scmp.eq.s32.totalorder %s15, 1
    %p52 = por %p50, %p51
    %p54 = scmp.ne.s32.totalorder %s37, %s53
    %p55 = scmp.eq.s32.totalorder %s15, 0
    %p56 = por %p54, %p55
    %s58 = sadd.s32 %s57, 1
    %p61 = scmp.eq.s32.totalorder %s9, 1
    %p62 = scmp.ne.s32.totalorder %s57, %s59
    %p63 = scmp.eq.s32.totalorder %s9, 0
    %p64 = por %p62, %p63
    %p65 = scmp.ne.s32.totalorder %s57, %s59
    %p66 = scmp.eq.s32.totalorder %s14, 1
    %p67 = por %p65, %p66
    %p68 = scmp.ne.s32.totalorder %s59, %s60
    %p69 = scmp.eq.s32.totalorder %s14, 0
    %p70 = por %p68, %p69
    %p71 = scmp.ne.s32.totalorder %s59, %s60
    %p72 = scmp.eq.s32.totalorder %s15, 1
    %p73 = por %p71, %p72
    %p75 = scmp.ne.s32.totalorder %s60, %s74
    %p76 = scmp.eq.s32.totalorder %s15, 0
    %p77 = por %p75, %p76
    %s79 = sadd.s32 %s78, 1
    %p82 = scmp.eq.s32.totalorder %s9, 1
    %p83 = scmp.ne.s32.totalorder %s78, %s80
    %p84 = scmp.eq.s32.totalorder %s9, 0
    %p85 = por %p83, %p84
    %p86 = scmp.ne.s32.totalorder %s78, %s80
    %p87 = scmp.eq.s32.totalorder %s14, 1
    %p88 = por %p86, %p87
    %p89 = scmp.ne.s32.totalorder %s80, %s81
    %p90 = scmp.eq.s32.totalorder %s14, 0
    %p91 = por %p89, %p90
    %p92 = scmp.ne.s32.totalorder %s80, %s81
    %p93 = scmp.eq.s32.totalorder %s15, 1
    %p94 = por %p92, %p93
    %p96 = scmp.ne.s32.totalorder %s81, %s95
    %p97 = scmp.eq.s32.totalorder %s15, 0
    %p98 = por %p96, %p97
    %s99 = ssub.s32 %s16, %s28
    %s100 = ssub.s32 %s17, %s24
    %s101 = sor.u32 %s99, %s100
    %p102 = scmp.eq.s32.totalorder %s101, 0
    %s104 = sadd.s32 %s103, 1
    %s105 = scalar_select %p102, %s103, %s104
    %p108 = pneg %p102
    %p109 = scmp.eq.s32.totalorder %s9, 1
    %p110 = por %p108, %p109
    %p111 = scmp.ne.s32.totalorder %s103, %s106
    %p112 = scmp.eq.s32.totalorder %s9, 0
    %p113 = por %p111, %p112
    %p114 = scmp.ne.s32.totalorder %s103, %s106
    %p115 = scmp.eq.s32.totalorder %s14, 1
    %p116 = por %p114, %p115
    %p117 = scmp.ne.s32.totalorder %s106, %s107
    %p118 = scmp.eq.s32.totalorder %s14, 0
    %p119 = por %p117, %p118
    %p120 = scmp.ne.s32.totalorder %s106, %s107
    %p121 = scmp.eq.s32.totalorder %s15, 1
    %p122 = por %p120, %p121
    %p124 = scmp.ne.s32.totalorder %s107, %s123
    %p125 = scmp.eq.s32.totalorder %s15, 0
    %p126 = por %p124, %p125
    %p127 = scmp.le.s32.totalorder 1, %s9
    %p128 = scmp.lt.s32.totalorder %s9, 3
    %p129 = pnand %p127, %p128
    %p130 = pneg %p129
    // Predicated region
    $region9: #{up_forward.7} parent=5 // pred_check
      _
    $region10: #{up_forward.7} parent=5 // pred_check_branch
      %132 = sbr.rel (%p129) target = $region12
    $region11: #{up_forward.7} parent=5 // pred_region
      %s133 = ssub.s32 %s9, 1
      // Predicated region
      $region13: #{up_forward.7} parent=11 // pred_check
        %p134 = pneg %p70
      $region14: #{up_forward.7} parent=11 // pred_check_branch
        %136 = sbr.rel (%p134) target = $region16
      $region15: #{up_forward.7} parent=11 // pred_region
        _
      $region16: #{up_forward.7} parent=11 // pred_fallthru
        _
      // Predicated region
      $region17: #{up_forward.7} parent=11 // pred_check
        %p137 = pneg %p91
      $region18: #{up_forward.7} parent=11 // pred_check_branch
        %139 = sbr.rel (%p137) target = $region20
      $region19: #{up_forward.7} parent=11 // pred_region
        _
      $region20: #{up_forward.7} parent=11 // pred_fallthru
        _
    $region12: #{up_forward.7} parent=5 // pred_fallthru
      _
    %p140 = scmp.lt.s32.totalorder %s9, 2
    // Predicated region
    $region21: #{up_forward.7} parent=5 // pred_check
      %p141 = pneg %p140
    $region22: #{up_forward.7} parent=5 // pred_check_branch
      %143 = sbr.rel (%p141) target = $region24
    $region23: #{up_forward.7} parent=5 // pred_region
      // Predicated region
      $region25: #{up_forward.7} parent=23 // pred_check
        %p144 = pneg %p43
      $region26: #{up_forward.7} parent=23 // pred_check_branch
        %146 = sbr.rel (%p144) target = $region28
      $region27: #{up_forward.7} parent=23 // pred_region
        %s147 = smul.u32 16, %s17
        %p148 = scmp.lt.s32.totalorder %s16, 1
        %s149 = scalar_select %p148, %s16, 1
        %p150 = scmp.lt.s32.totalorder %s147, 15
        %s151 = scalar_select %p150, %s147, 15
        %s152 = smul.addr %s151, 2
        %s153 = smul.addr %s149, 32
        %s154 = sadd.s32 %s152, %s153
        %s155 = smul.addr %s154, 8
        %s156 = scalar_lea.vmem %s0, %s155
        %s157 = smul.u32 16, %s17
      $region28: #{up_forward.7} parent=23 // pred_fallthru
        _
    $region24: #{up_forward.7} parent=5 // pred_fallthru
      _
    %p158 = scmp.le.s32.totalorder 1, %s9
    %p159 = scmp.lt.s32.totalorder %s9, 3
    %p160 = pnand %p158, %p159
    %p161 = pneg %p160
    // Predicated region
    $region29: #{up_forward.7} parent=5 // pred_check
      _
    $region30: #{up_forward.7} parent=5 // pred_check_branch
      %163 = sbr.rel (%p160) target = $region32
    $region31: #{up_forward.7} parent=5 // pred_region
      %s164 = ssub.s32 %s9, 1
      %s165 = smul.u32 16, %s19
      %p166 = scmp.lt.s32.totalorder %s18, 1
      %s167 = scalar_select %p166, %s18, 1
      %p168 = scmp.lt.s32.totalorder %s165, 15
      %s169 = scalar_select %p168, %s165, 15
      %s170 = smul.addr %s169, 2
      %s171 = smul.addr %s167, 32
      %s172 = sadd.s32 %s170, %s171
      %s173 = smul.addr %s172, 8
      %s174 = scalar_lea.vmem %s0, %s173
      %p175 = pneg %p49
      %p176 = pneg %p46
      %p177 = pneg %p70
      %p178 = pneg %p67
      %p179 = pneg %p91
      %p180 = pneg %p88
      %p181 = pneg %p119
      %p182 = pneg %p116
      %s183 = smul.u32 16, %s19
      %p184 = scmp.lt.s32.totalorder %s18, 1
      %s185 = scalar_select %p184, %s18, 1
      %p186 = scmp.lt.s32.totalorder %s183, 15
      %s187 = scalar_select %p186, %s183, 15
      %s188 = smul.addr %s187, 2
      %s189 = smul.addr %s185, 32
      %s190 = sadd.s32 %s188, %s189
      %s191 = smul.addr %s190, 8
      %s192 = scalar_lea.vmem %s3, %s191
      %s193 = smul.u32 16, %s19
      %p194 = scmp.lt.s32.totalorder %s18, 1
      %s195 = scalar_select %p194, %s18, 1
      %p196 = scmp.lt.s32.totalorder %s193, 15
      %s197 = scalar_select %p196, %s193, 15
      %s198 = smul.addr %s197, 2
      %s199 = smul.addr %s195, 32
      %s200 = sadd.s32 %s198, %s199
      %s201 = smul.addr %s200, 8
      %s202 = scalar_lea.vmem %s0, %s201
      %s203 = smul.u32 16, %s19
      %s204 = smul.u32 16, %s19
      %p205 = scmp.lt.s32.totalorder %s18, 1
      %s206 = scalar_select %p205, %s18, 1
      %p207 = scmp.lt.s32.totalorder %s204, 15
      %s208 = scalar_select %p207, %s204, 15
      %s209 = smul.addr %s208, 2
      %s210 = smul.addr %s206, 32
      %s211 = sadd.s32 %s209, %s210
      %s212 = smul.addr %s211, 8
      %s213 = scalar_lea.vmem %s3, %s212
      %s214 = smul.u32 16, %s19
      %v215 = vld [vmem:[%s1] sm:$0x1]
      %v216 = vld [vmem:[%s2] sm:$0x1]
      %v217 = vld [vmem:[%s202] sm:$0xff]
      %v218 = vld [vmem:[%s202 + $0x8] sm:$0xff]
      %v219 = vld [vmem:[%s202 + $0x10] sm:$0xff]
      %v220 = vld [vmem:[%s202 + $0x18] sm:$0xff]
      %v221 = vld [vmem:[%s202 + $0x20] sm:$0xff]
      %v222 = vld [vmem:[%s202 + $0x28] sm:$0xff]
      %v223 = vld [vmem:[%s202 + $0x30] sm:$0xff]
      %v224 = vld [vmem:[%s202 + $0x38] sm:$0xff]
      %v225 = vld [vmem:[%s202 + $0x40] sm:$0xff]
      %v226 = vld [vmem:[%s202 + $0x48] sm:$0xff]
      %v227 = vld [vmem:[%s202 + $0x50] sm:$0xff]
      %v228 = vld [vmem:[%s202 + $0x58] sm:$0xff]
      %v229 = vld [vmem:[%s202 + $0x60] sm:$0xff]
      %v230 = vld [vmem:[%s202 + $0x68] sm:$0xff]
      %v231 = vld [vmem:[%s202 + $0x70] sm:$0xff]
      %v232 = vld [vmem:[%s202 + $0x78] sm:$0xff]
      %v233 = vld [vmem:[%s202 + $0x80] sm:$0xff]
      %v234 = vld [vmem:[%s202 + $0x88] sm:$0xff]
      %v235 = vld [vmem:[%s202 + $0x90] sm:$0xff]
      %v236 = vld [vmem:[%s202 + $0x98] sm:$0xff]
      %v237 = vld [vmem:[%s202 + $0xa0] sm:$0xff]
      %v238 = vld [vmem:[%s202 + $0xa8] sm:$0xff]
      %v239 = vld [vmem:[%s202 + $0xb0] sm:$0xff]
      %v240 = vld [vmem:[%s202 + $0xb8] sm:$0xff]
      %v241 = vld [vmem:[%s202 + $0xc0] sm:$0xff]
      %v242 = vld [vmem:[%s202 + $0xc8] sm:$0xff]
      %v243 = vld [vmem:[%s202 + $0xd0] sm:$0xff]
      %v244 = vld [vmem:[%s202 + $0xd8] sm:$0xff]
      %v245 = vld [vmem:[%s202 + $0xe0] sm:$0xff]
      %v246 = vld [vmem:[%s202 + $0xe8] sm:$0xff]
      %v247 = vld [vmem:[%s202 + $0xf0] sm:$0xff]
      %v248 = vld [vmem:[%s202 + $0xf8] sm:$0xff]
      %v250 = vperm.slane %v215, 0
      %v252 = vmul.f32 %v217, %v250
      %v253 = vmul.f32 %v218, %v250
      %v254 = vmul.f32 %v219, %v250
      %v255 = vmul.f32 %v220, %v250
      %v256 = vmul.f32 %v221, %v250
      %v257 = vmul.f32 %v222, %v250
      %v258 = vmul.f32 %v223, %v250
      %v259 = vmul.f32 %v224, %v250
      %v260 = vmul.f32 %v225, %v250
      %v261 = vmul.f32 %v226, %v250
      %v262 = vmul.f32 %v227, %v250
      %v263 = vmul.f32 %v228, %v250
      %v264 = vmul.f32 %v229, %v250
      %v265 = vmul.f32 %v230, %v250
      %v266 = vmul.f32 %v231, %v250
      %v267 = vmul.f32 %v232, %v250
      %v268 = vmul.f32 %v233, %v250
      %v269 = vmul.f32 %v234, %v250
      %v270 = vmul.f32 %v235, %v250
      %v271 = vmul.f32 %v236, %v250
      %v272 = vmul.f32 %v237, %v250
      %v273 = vmul.f32 %v238, %v250
      %v274 = vmul.f32 %v239, %v250
      %v275 = vmul.f32 %v240, %v250
      %v276 = vmul.f32 %v241, %v250
      %v277 = vmul.f32 %v242, %v250
      %v278 = vmul.f32 %v243, %v250
      %v279 = vmul.f32 %v244, %v250
      %v280 = vmul.f32 %v245, %v250
      %v281 = vmul.f32 %v246, %v250
      %v282 = vmul.f32 %v247, %v250
      %v283 = vmul.f32 %v248, %v250
      %v285 = vperm.slane %v216, 0
      %v287 = vadd.f32 %v252, %v285
      %v288 = vadd.f32 %v253, %v285
      %v289 = vadd.f32 %v254, %v285
      %v290 = vadd.f32 %v255, %v285
      %v291 = vadd.f32 %v256, %v285
      %v292 = vadd.f32 %v257, %v285
      %v293 = vadd.f32 %v258, %v285
      %v294 = vadd.f32 %v259, %v285
      %v295 = vadd.f32 %v260, %v285
      %v296 = vadd.f32 %v261, %v285
      %v297 = vadd.f32 %v262, %v285
      %v298 = vadd.f32 %v263, %v285
      %v299 = vadd.f32 %v264, %v285
      %v300 = vadd.f32 %v265, %v285
      %v301 = vadd.f32 %v266, %v285
      %v302 = vadd.f32 %v267, %v285
      %v303 = vadd.f32 %v268, %v285
      %v304 = vadd.f32 %v269, %v285
      %v305 = vadd.f32 %v270, %v285
      %v306 = vadd.f32 %v271, %v285
      %v307 = vadd.f32 %v272, %v285
      %v308 = vadd.f32 %v273, %v285
      %v309 = vadd.f32 %v274, %v285
      %v310 = vadd.f32 %v275, %v285
      %v311 = vadd.f32 %v276, %v285
      %v312 = vadd.f32 %v277, %v285
      %v313 = vadd.f32 %v278, %v285
      %v314 = vadd.f32 %v279, %v285
      %v315 = vadd.f32 %v280, %v285
      %v316 = vadd.f32 %v281, %v285
      %v317 = vadd.f32 %v282, %v285
      %v318 = vadd.f32 %v283, %v285
      %v319 = vmax.f32 %v287, 0.0
      %v320 = vmax.f32 %v288, 0.0
      %v321 = vmax.f32 %v289, 0.0
      %v322 = vmax.f32 %v290, 0.0
      %v323 = vmax.f32 %v291, 0.0
      %v324 = vmax.f32 %v292, 0.0
      %v325 = vmax.f32 %v293, 0.0
      %v326 = vmax.f32 %v294, 0.0
      %v327 = vmax.f32 %v295, 0.0
      %v328 = vmax.f32 %v296, 0.0
      %v329 = vmax.f32 %v297, 0.0
      %v330 = vmax.f32 %v298, 0.0
      %v331 = vmax.f32 %v299, 0.0
      %v332 = vmax.f32 %v300, 0.0
      %v333 = vmax.f32 %v301, 0.0
      %v334 = vmax.f32 %v302, 0.0
      %v335 = vmax.f32 %v303, 0.0
      %v336 = vmax.f32 %v304, 0.0
      %v337 = vmax.f32 %v305, 0.0
      %v338 = vmax.f32 %v306, 0.0
      %v339 = vmax.f32 %v307, 0.0
      %v340 = vmax.f32 %v308, 0.0
      %v341 = vmax.f32 %v309, 0.0
      %v342 = vmax.f32 %v310, 0.0
      %v343 = vmax.f32 %v311, 0.0
      %v344 = vmax.f32 %v312, 0.0
      %v345 = vmax.f32 %v313, 0.0
      %v346 = vmax.f32 %v314, 0.0
      %v347 = vmax.f32 %v315, 0.0
      %v348 = vmax.f32 %v316, 0.0
      %v349 = vmax.f32 %v317, 0.0
      %v350 = vmax.f32 %v318, 0.0
      %vm351 = vcmask 31744
      %352 = vst.msk [vmem:[%s213] sm:$0xff] %vm351, %v319
      %353 = vst.msk [vmem:[%s213 + $0x8] sm:$0xff] %vm351, %v320
      %354 = vst.msk [vmem:[%s213 + $0x10] sm:$0xff] %vm351, %v321
      %355 = vst.msk [vmem:[%s213 + $0x18] sm:$0xff] %vm351, %v322
      %356 = vst.msk [vmem:[%s213 + $0x20] sm:$0xff] %vm351, %v323
      %357 = vst.msk [vmem:[%s213 + $0x28] sm:$0xff] %vm351, %v324
      %358 = vst.msk [vmem:[%s213 + $0x30] sm:$0xff] %vm351, %v325
      %359 = vst.msk [vmem:[%s213 + $0x38] sm:$0xff] %vm351, %v326
      %360 = vst.msk [vmem:[%s213 + $0x40] sm:$0xff] %vm351, %v327
      %361 = vst.msk [vmem:[%s213 + $0x48] sm:$0xff] %vm351, %v328
      %362 = vst.msk [vmem:[%s213 + $0x50] sm:$0xff] %vm351, %v329
      %363 = vst.msk [vmem:[%s213 + $0x58] sm:$0xff] %vm351, %v330
      %364 = vst.msk [vmem:[%s213 + $0x60] sm:$0xff] %vm351, %v331
      %365 = vst.msk [vmem:[%s213 + $0x68] sm:$0xff] %vm351, %v332
      %366 = vst.msk [vmem:[%s213 + $0x70] sm:$0xff] %vm351, %v333
      %367 = vst.msk [vmem:[%s213 + $0x78] sm:$0xff] %vm351, %v334
      %368 = vst.msk [vmem:[%s213 + $0x80] sm:$0xff] %vm351, %v335
      %369 = vst.msk [vmem:[%s213 + $0x88] sm:$0xff] %vm351, %v336
      %370 = vst.msk [vmem:[%s213 + $0x90] sm:$0xff] %vm351, %v337
      %371 = vst.msk [vmem:[%s213 + $0x98] sm:$0xff] %vm351, %v338
      %372 = vst.msk [vmem:[%s213 + $0xa0] sm:$0xff] %vm351, %v339
      %373 = vst.msk [vmem:[%s213 + $0xa8] sm:$0xff] %vm351, %v340
      %374 = vst.msk [vmem:[%s213 + $0xb0] sm:$0xff] %vm351, %v341
      %375 = vst.msk [vmem:[%s213 + $0xb8] sm:$0xff] %vm351, %v342
      %376 = vst.msk [vmem:[%s213 + $0xc0] sm:$0xff] %vm351, %v343
      %377 = vst.msk [vmem:[%s213 + $0xc8] sm:$0xff] %vm351, %v344
      %378 = vst.msk [vmem:[%s213 + $0xd0] sm:$0xff] %vm351, %v345
      %379 = vst.msk [vmem:[%s213 + $0xd8] sm:$0xff] %vm351, %v346
      %380 = vst.msk [vmem:[%s213 + $0xe0] sm:$0xff] %vm351, %v347
      %381 = vst.msk [vmem:[%s213 + $0xe8] sm:$0xff] %vm351, %v348
      %382 = vst.msk [vmem:[%s213 + $0xf0] sm:$0xff] %vm351, %v349
      %383 = vst.msk [vmem:[%s213 + $0xf8] sm:$0xff] %vm351, %v350
      %s384 = smul.u32 16, %s19
      %p385 = scmp.lt.s32.totalorder %s18, 1
      %s386 = scalar_select %p385, %s18, 1
      %p387 = scmp.lt.s32.totalorder %s384, 15
      %s388 = scalar_select %p387, %s384, 15
      %s389 = smul.addr %s388, 2
      %s390 = smul.addr %s386, 32
      %s391 = sadd.s32 %s389, %s390
      %s392 = smul.addr %s391, 8
      %s393 = scalar_lea.vmem %s3, %s392
      // Predicated region
      $region33: #{up_forward.7} parent=31 // pred_check
        %p394 = pneg %p116
      $region34: #{up_forward.7} parent=31 // pred_check_branch
        %396 = sbr.rel (%p394) target = $region36
      $region35: #{up_forward.7} parent=31 // pred_region
        %s397 = smul.u32 16, %s19
      $region36: #{up_forward.7} parent=31 // pred_fallthru
        _
    $region32: #{up_forward.7} parent=5 // pred_fallthru
      _
    %p398 = scmp.le.s32.totalorder 2, %s9
    // Predicated region
    $region37: #{up_forward.7} parent=5 // pred_check
      %p399 = pneg %p398
    $region38: #{up_forward.7} parent=5 // pred_check_branch
      %401 = sbr.rel (%p399) target = $region40
    $region39: #{up_forward.7} parent=5 // pred_region
      %s402 = ssub.s32 %s9, 2
      // Predicated region
      $region41: #{up_forward.7} parent=39 // pred_check
        %p403 = pneg %p122
      $region42: #{up_forward.7} parent=39 // pred_check_branch
        %405 = sbr.rel (%p403) target = $region44
      $region43: #{up_forward.7} parent=39 // pred_region
        %s406 = smul.u32 16, %s21
        %p407 = scmp.lt.s32.totalorder %s20, 1
        %s408 = scalar_select %p407, %s20, 1
        %p409 = scmp.lt.s32.totalorder %s406, 15
        %s410 = scalar_select %p409, %s406, 15
        %s411 = smul.addr %s410, 2
        %s412 = smul.addr %s408, 32
        %s413 = sadd.s32 %s411, %s412
        %s414 = smul.addr %s413, 8
        %s415 = scalar_lea.vmem %s3, %s414
      $region44: #{up_forward.7} parent=39 // pred_fallthru
        _
    $region40: #{up_forward.7} parent=5 // pred_fallthru
      _
  $region6: #{up_forward.7} parent=0 // loop_footer
    %s13 = sadd.s32 1, %s9
  $region7: #{up_forward.7} parent=0 // loop_footer_branch
    %8 = sbr.rel target = $region3
  $region8: #{up_forward.7} parent=0 // loop_exit
    _

// kernel: up_forward.6
$region0: #{up_forward.6}
  #allocation0 [shape = 'u32[]', space=smem, size = 0x4, offset = 0x4, fixed_abs, tag = 'smem constant byte address 0x4 - core index']
  #allocation1 [shape = 'u32[72,128]{1,0:T(1,128)}', space=vmem, size = 0x9000, scoped, tag = 'internal scratch']
  %s0 = inlined_call_operand.vmem [shape: f32[2,18,18,4], index: 0, kind: input, shape index: {}, may-alias: {0,1}]
  %s1 = inlined_call_operand.vmem [shape: f32[2,18,18,4], index: 1, kind: input, shape index: {}, may-alias: {0,1}]
  %s2 = inlined_call_operand.vmem [shape: f32[1,4], index: 2, kind: input, shape index: {}]
  %s3 = inlined_call_operand.vmem [shape: f32[1,4], index: 3, kind: input, shape index: {}]
  %s4 = inlined_call_operand.vmem [shape: f32[3,12,4], index: 4, kind: input, shape index: {}]
  %s5 = inlined_call_operand.vmem [shape: f32[1,4], index: 5, kind: input, shape index: {}]
  %s6 = inlined_call_operand.vmem [shape: f32[2,16,16,4], index: 6, kind: output, shape index: {0}]
  %s7 = inlined_call_operand.vmem [shape: f32[2,2,4], index: 7, kind: output, shape index: {1}]
  %8 = xla_tuple %s6, %s7
  %s9 = sld [smem:[#allocation0]]
  $region65: #{up_forward.6} parent=0
    _
  %s11 = ssub.s32 1, %s9
  %s12 = scalar_select 0, %s11, %s9
  loop: start=0, step=1, limit=4
  $region2: #{up_forward.6} parent=0 // loop_pre_header
    _
  $region3: #{up_forward.6} parent=0 // loop_header
    %s14 = sphi 0, %s18
    %p15 = scmp.ge.s32.totalorder %s14, 4
    %s21 = sphi 0, %s33
    %s22 = sphi 0, %s29
    %s23 = sphi 0, %s21
    %s24 = sphi 0, %s22
    %s25 = sphi 0, %s23
    %s26 = sphi 0, %s24
    %s38 = sphi 0, %s40
    %s41 = sphi 0, %s38
    %s42 = sphi 0, %s41
    %s58 = sphi 0, %s42
    %s70 = sphi 0, %s72
    %s73 = sphi 0, %s70
    %s74 = sphi 0, %s73
    %s90 = sphi 0, %s74
    %s94 = sphi 0, %s94
    %s96 = sphi 0, %s94
    %s97 = sphi 0, %s96
    %s111 = sphi 0, %s97
    %s115 = sphi 0, %s115
    %s117 = sphi 0, %s115
    %s118 = sphi 0, %s117
    %s132 = sphi 0, %s118
    %s136 = sphi 0, %s136
    %s138 = sphi 0, %s136
    %s139 = sphi 0, %s138
    %s153 = sphi 0, %s139
    %s157 = sphi 0, %s157
    %s159 = sphi 0, %s157
    %s160 = sphi 0, %s159
    %s174 = sphi 0, %s160
    %s182 = sphi 0, %s184
    %s185 = sphi 0, %s182
    %s186 = sphi 0, %s185
    %s202 = sphi 0, %s186
    %s210 = sphi 0, %s212
    %s213 = sphi 0, %s210
    %s214 = sphi 0, %s213
    %s230 = sphi 0, %s214
  $region4: #{up_forward.6} parent=0 // loop_header_branch
    %17 = sbr.rel (%p15) target = $region8
  $region5: #{up_forward.6} parent=0 // loop_body
    %s19 = ssub.s32 %s14, 1
    %s20 = ssub.s32 %s14, 2
    %s27 = sadd.s32 1, %s22
    %p28 = scmp.ge.s32.totalorder %s27, 1
    %s29 = scalar_select %p28, 0, %s27
    %s30 = sadd.s32 1, %s21
    %s31 = scalar_select %p28, %s30, %s21
    %p32 = scmp.ge.s32.totalorder %s31, 2
    %s33 = scalar_select %p32, 0, %s31
    %s34 = ssub.s32 %s21, %s33
    %s35 = ssub.s32 %s22, %s29
    %s36 = sor.u32 %s34, %s35
    %p37 = scmp.eq.s32.totalorder %s36, 0
    %s39 = sadd.s32 %s38, 1
    %s40 = scalar_select %p37, %s38, %s39
    %p43 = pneg %p37
    %p44 = scmp.eq.s32.totalorder %s14, 1
    %p45 = por %p43, %p44
    %p46 = scmp.ne.s32.totalorder %s38, %s41
    %p47 = scmp.eq.s32.totalorder %s14, 0
    %p48 = por %p46, %p47
    %p49 = scmp.ne.s32.totalorder %s38, %s41
    %p50 = scmp.eq.s32.totalorder %s19, 1
    %p51 = por %p49, %p50
    %p52 = scmp.ne.s32.totalorder %s41, %s42
    %p53 = scmp.eq.s32.totalorder %s19, 0
    %p54 = por %p52, %p53
    %p55 = scmp.ne.s32.totalorder %s41, %s42
    %p56 = scmp.eq.s32.totalorder %s20, 1
    %p57 = por %p55, %p56
    %p59 = scmp.ne.s32.totalorder %s42, %s58
    %p60 = scmp.eq.s32.totalorder %s20, 0
    %p61 = por %p59, %p60
    %s62 = sadd.s32 %s22, 1
    %s63 = smul.u32 %s62, 8
    %s64 = sadd.s32 %s29, 1
    %s65 = smul.u32 %s64, 8
    %s66 = ssub.s32 %s21, %s33
    %s67 = ssub.s32 %s63, %s65
    %s68 = sor.u32 %s66, %s67
    %p69 = scmp.eq.s32.totalorder %s68, 0
    %s71 = sadd.s32 %s70, 1
    %s72 = scalar_select %p69, %s70, %s71
    %p75 = pneg %p69
    %p76 = scmp.eq.s32.totalorder %s14, 1
    %p77 = por %p75, %p76
    %p78 = scmp.ne.s32.totalorder %s70, %s73
    %p79 = scmp.eq.s32.totalorder %s14, 0
    %p80 = por %p78, %p79
    %p81 = scmp.ne.s32.totalorder %s70, %s73
    %p82 = scmp.eq.s32.totalorder %s19, 1
    %p83 = por %p81, %p82
    %p84 = scmp.ne.s32.totalorder %s73, %s74
    %p85 = scmp.eq.s32.totalorder %s19, 0
    %p86 = por %p84, %p85
    %p87 = scmp.ne.s32.totalorder %s73, %s74
    %p88 = scmp.eq.s32.totalorder %s20, 1
    %p89 = por %p87, %p88
    %p91 = scmp.ne.s32.totalorder %s74, %s90
    %p92 = scmp.eq.s32.totalorder %s20, 0
    %p93 = por %p91, %p92
    %s95 = sadd.s32 %s94, 1
    %p98 = scmp.eq.s32.totalorder %s14, 1
    %p99 = scmp.ne.s32.totalorder %s94, %s96
    %p100 = scmp.eq.s32.totalorder %s14, 0
    %p101 = por %p99, %p100
    %p102 = scmp.ne.s32.totalorder %s94, %s96
    %p103 = scmp.eq.s32.totalorder %s19, 1
    %p104 = por %p102, %p103
    %p105 = scmp.ne.s32.totalorder %s96, %s97
    %p106 = scmp.eq.s32.totalorder %s19, 0
    %p107 = por %p105, %p106
    %p108 = scmp.ne.s32.totalorder %s96, %s97
    %p109 = scmp.eq.s32.totalorder %s20, 1
    %p110 = por %p108, %p109
    %p112 = scmp.ne.s32.totalorder %s97, %s111
    %p113 = scmp.eq.s32.totalorder %s20, 0
    %p114 = por %p112, %p113
    %s116 = sadd.s32 %s115, 1
    %p119 = scmp.eq.s32.totalorder %s14, 1
    %p120 = scmp.ne.s32.totalorder %s115, %s117
    %p121 = scmp.eq.s32.totalorder %s14, 0
    %p122 = por %p120, %p121
    %p123 = scmp.ne.s32.totalorder %s115, %s117
    %p124 = scmp.eq.s32.totalorder %s19, 1
    %p125 = por %p123, %p124
    %p126 = scmp.ne.s32.totalorder %s117, %s118
    %p127 = scmp.eq.s32.totalorder %s19, 0
    %p128 = por %p126, %p127
    %p129 = scmp.ne.s32.totalorder %s117, %s118
    %p130 = scmp.eq.s32.totalorder %s20, 1
    %p131 = por %p129, %p130
    %p133 = scmp.ne.s32.totalorder %s118, %s132
    %p134 = scmp.eq.s32.totalorder %s20, 0
    %p135 = por %p133, %p134
    %s137 = sadd.s32 %s136, 1
    %p140 = scmp.eq.s32.totalorder %s14, 1
    %p141 = scmp.ne.s32.totalorder %s136, %s138
    %p142 = scmp.eq.s32.totalorder %s14, 0
    %p143 = por %p141, %p142
    %p144 = scmp.ne.s32.totalorder %s136, %s138
    %p145 = scmp.eq.s32.totalorder %s19, 1
    %p146 = por %p144, %p145
    %p147 = scmp.ne.s32.totalorder %s138, %s139
    %p148 = scmp.eq.s32.totalorder %s19, 0
    %p149 = por %p147, %p148
    %p150 = scmp.ne.s32.totalorder %s138, %s139
    %p151 = scmp.eq.s32.totalorder %s20, 1
    %p152 = por %p150, %p151
    %p154 = scmp.ne.s32.totalorder %s139, %s153
    %p155 = scmp.eq.s32.totalorder %s20, 0
    %p156 = por %p154, %p155
    %s158 = sadd.s32 %s157, 1
    %p161 = scmp.eq.s32.totalorder %s14, 1
    %p162 = scmp.ne.s32.totalorder %s157, %s159
    %p163 = scmp.eq.s32.totalorder %s14, 0
    %p164 = por %p162, %p163
    %p165 = scmp.ne.s32.totalorder %s157, %s159
    %p166 = scmp.eq.s32.totalorder %s19, 1
    %p167 = por %p165, %p166
    %p168 = scmp.ne.s32.totalorder %s159, %s160
    %p169 = scmp.eq.s32.totalorder %s19, 0
    %p170 = por %p168, %p169
    %p171 = scmp.ne.s32.totalorder %s159, %s160
    %p172 = scmp.eq.s32.totalorder %s20, 1
    %p173 = por %p171, %p172
    %p175 = scmp.ne.s32.totalorder %s160, %s174
    %p176 = scmp.eq.s32.totalorder %s20, 0
    %p177 = por %p175, %p176
    %s178 = ssub.s32 %s21, %s33
    %s179 = ssub.s32 %s22, %s29
    %s180 = sor.u32 %s178, %s179
    %p181 = scmp.eq.s32.totalorder %s180, 0
    %s183 = sadd.s32 %s182, 1
    %s184 = scalar_select %p181, %s182, %s183
    %p187 = pneg %p181
    %p188 = scmp.eq.s32.totalorder %s14, 1
    %p189 = por %p187, %p188
    %p190 = scmp.ne.s32.totalorder %s182, %s185
    %p191 = scmp.eq.s32.totalorder %s14, 0
    %p192 = por %p190, %p191
    %p193 = scmp.ne.s32.totalorder %s182, %s185
    %p194 = scmp.eq.s32.totalorder %s19, 1
    %p195 = por %p193, %p194
    %p196 = scmp.ne.s32.totalorder %s185, %s186
    %p197 = scmp.eq.s32.totalorder %s19, 0
    %p198 = por %p196, %p197
    %p199 = scmp.ne.s32.totalorder %s185, %s186
    %p200 = scmp.eq.s32.totalorder %s20, 1
    %p201 = por %p199, %p200
    %p203 = scmp.ne.s32.totalorder %s186, %s202
    %p204 = scmp.eq.s32.totalorder %s20, 0
    %p205 = por %p203, %p204
    %s206 = sadd.s32 %s21, %s22
    %s207 = sadd.s32 %s33, %s29
    %s208 = ssub.s32 %s206, %s207
    %p209 = scmp.eq.s32.totalorder %s208, 0
    %s211 = sadd.s32 %s210, 1
    %s212 = scalar_select %p209, %s210, %s211
    %p215 = pneg %p209
    %p216 = scmp.eq.s32.totalorder %s14, 1
    %p217 = por %p215, %p216
    %p218 = scmp.ne.s32.totalorder %s210, %s213
    %p219 = scmp.eq.s32.totalorder %s14, 0
    %p220 = por %p218, %p219
    %p221 = scmp.ne.s32.totalorder %s210, %s213
    %p222 = scmp.eq.s32.totalorder %s19, 1
    %p223 = por %p221, %p222
    %p224 = scmp.ne.s32.totalorder %s213, %s214
    %p225 = scmp.eq.s32.totalorder %s19, 0
    %p226 = por %p224, %p225
    %p227 = scmp.ne.s32.totalorder %s213, %s214
    %p228 = scmp.eq.s32.totalorder %s20, 1
    %p229 = por %p227, %p228
    %p231 = scmp.ne.s32.totalorder %s214, %s230
    %p232 = scmp.eq.s32.totalorder %s20, 0
    %p233 = por %p231, %p232
    %p234 = scmp.le.s32.totalorder 1, %s14
    %p235 = scmp.lt.s32.totalorder %s14, 3
    %p236 = pnand %p234, %p235
    %p237 = pneg %p236
    // Predicated region
    $region9: #{up_forward.6} parent=5 // pred_check
      _
    $region10: #{up_forward.6} parent=5 // pred_check_branch
      %239 = sbr.rel (%p236) target = $region12
    $region11: #{up_forward.6} parent=5 // pred_region
      %s240 = ssub.s32 %s14, 1
      // Predicated region
      $region13: #{up_forward.6} parent=11 // pred_check
        %p241 = pneg %p107
      $region14: #{up_forward.6} parent=11 // pred_check_branch
        %243 = sbr.rel (%p241) target = $region16
      $region15: #{up_forward.6} parent=11 // pred_region
        _
      $region16: #{up_forward.6} parent=11 // pred_fallthru
        _
      // Predicated region
      $region17: #{up_forward.6} parent=11 // pred_check
        %p244 = pneg %p128
      $region18: #{up_forward.6} parent=11 // pred_check_branch
        %246 = sbr.rel (%p244) target = $region20
      $region19: #{up_forward.6} parent=11 // pred_region
        _
      $region20: #{up_forward.6} parent=11 // pred_fallthru
        _
      // Predicated region
      $region21: #{up_forward.6} parent=11 // pred_check
        %p247 = pneg %p149
      $region22: #{up_forward.6} parent=11 // pred_check_branch
        %249 = sbr.rel (%p247) target = $region24
      $region23: #{up_forward.6} parent=11 // pred_region
        _
      $region24: #{up_forward.6} parent=11 // pred_fallthru
        _
      // Predicated region
      $region25: #{up_forward.6} parent=11 // pred_check
        %p250 = pneg %p170
      $region26: #{up_forward.6} parent=11 // pred_check_branch
        %252 = sbr.rel (%p250) target = $region28
      $region27: #{up_forward.6} parent=11 // pred_region
        _
      $region28: #{up_forward.6} parent=11 // pred_fallthru
        _
    $region12: #{up_forward.6} parent=5 // pred_fallthru
      _
    %p253 = scmp.lt.s32.totalorder %s14, 2
    // Predicated region
    $region29: #{up_forward.6} parent=5 // pred_check
      %p254 = pneg %p253
    $region30: #{up_forward.6} parent=5 // pred_check_branch
      %256 = sbr.rel (%p254) target = $region32
    $region31: #{up_forward.6} parent=5 // pred_region
      // Predicated region
      $region33: #{up_forward.6} parent=31 // pred_check
        %p257 = pneg %p48
      $region34: #{up_forward.6} parent=31 // pred_check_branch
        %259 = sbr.rel (%p257) target = $region36
      $region35: #{up_forward.6} parent=31 // pred_region
        %s260 = smul.u32 16, %s22
        %s261 = ssub.s32 18, %s260
        %p262 = scmp.lt.s32.totalorder %s261, 16
        %s263 = scalar_select %p262, %s261, 16
        %s264 = smul.u32 8, %s263
        %s265 = smul.u32 %s264, 3
        %p266 = scmp.lt.s32.totalorder %s21, 1
        %s267 = scalar_select %p266, %s21, 1
        %p268 = scmp.lt.s32.totalorder %s260, 17
        %s269 = scalar_select %p268, %s260, 17
        %s270 = smul.addr %s269, 3
        %s271 = smul.addr %s267, 54
        %s272 = sadd.s32 %s270, %s271
        %s273 = smul.addr %s272, 8
        %s274 = scalar_lea.vmem %s0, %s273
        %s275 = smul.u32 16, %s22
        %s276 = ssub.s32 18, %s275
        %p277 = scmp.lt.s32.totalorder %s276, 16
        %s278 = scalar_select %p277, %s276, 16
        %s279 = smul.u32 8, %s278
        %s280 = smul.u32 %s279, 3
      $region36: #{up_forward.6} parent=31 // pred_fallthru
        _
      // Predicated region
      $region37: #{up_forward.6} parent=31 // pred_check
        %p281 = pneg %p80
      $region38: #{up_forward.6} parent=31 // pred_check_branch
        %283 = sbr.rel (%p281) target = $region40
      $region39: #{up_forward.6} parent=31 // pred_region
        %s284 = sadd.s32 %s22, 1
        %s285 = smul.u32 %s284, 8
        %s286 = smul.u32 2, %s285
        %p287 = scmp.lt.s32.totalorder %s21, 1
        %s288 = scalar_select %p287, %s21, 1
        %p289 = scmp.lt.s32.totalorder %s286, 17
        %s290 = scalar_select %p289, %s286, 17
        %s291 = smul.addr %s290, 3
        %s292 = smul.addr %s288, 54
        %s293 = sadd.s32 %s291, %s292
        %s294 = smul.addr %s293, 8
        %s295 = scalar_lea.vmem %s1, %s294
        %s296 = sadd.s32 %s22, 1
        %s297 = smul.u32 %s296, 8
        %s298 = smul.u32 2, %s297
      $region40: #{up_forward.6} parent=31 // pred_fallthru
        _
    $region32: #{up_forward.6} parent=5 // pred_fallthru
      _
    %p299 = scmp.le.s32.totalorder 1, %s14
    %p300 = scmp.lt.s32.totalorder %s14, 3
    %p301 = pnand %p299, %p300
    %p302 = pneg %p301
    // Predicated region
    $region41: #{up_forward.6} parent=5 // pred_check
      _
    $region42: #{up_forward.6} parent=5 // pred_check_branch
      %304 = sbr.rel (%p301) target = $region44
    $region43: #{up_forward.6} parent=5 // pred_region
      %s305 = ssub.s32 %s14, 1
      %s306 = smul.u32 16, %s24
      %s307 = ssub.s32 18, %s306
      %p308 = scmp.lt.s32.totalorder %s307, 16
      %s309 = scalar_select %p308, %s307, 16
      %s310 = smul.u32 8, %s309
      %s311 = smul.u32 %s310, 3
      %p312 = scmp.lt.s32.totalorder %s23, 1
      %s313 = scalar_select %p312, %s23, 1
      %p314 = scmp.lt.s32.totalorder %s306, 17
      %s315 = scalar_select %p314, %s306, 17
      %s316 = smul.addr %s315, 3
      %s317 = smul.addr %s313, 54
      %s318 = sadd.s32 %s316, %s317
      %s319 = smul.addr %s318, 8
      %s320 = scalar_lea.vmem %s0, %s319
      %p321 = pneg %p54
      %p322 = pneg %p51
      %s323 = sadd.s32 %s24, 1
      %s324 = smul.u32 %s323, 8
      %s325 = smul.u32 2, %s324
      %p326 = scmp.lt.s32.totalorder %s23, 1
      %s327 = scalar_select %p326, %s23, 1
      %p328 = scmp.lt.s32.totalorder %s325, 17
      %s329 = scalar_select %p328, %s325, 17
      %s330 = smul.addr %s329, 3
      %s331 = smul.addr %s327, 54
      %s332 = sadd.s32 %s330, %s331
      %s333 = smul.addr %s332, 8
      %s334 = scalar_lea.vmem %s1, %s333
      %p335 = pneg %p86
      %p336 = pneg %p83
      %p337 = pneg %p107
      %p338 = pneg %p104
      %p339 = pneg %p128
      %p340 = pneg %p125
      %p341 = pneg %p149
      %p342 = pneg %p146
      %p343 = pneg %p170
      %p344 = pneg %p167
      %p345 = pneg %p198
      %p346 = pneg %p195
      %s347 = smul.u32 16, %s24
      %p348 = scmp.lt.s32.totalorder %s23, 1
      %s349 = scalar_select %p348, %s23, 1
      %p350 = scmp.lt.s32.totalorder %s347, 15
      %s351 = scalar_select %p350, %s347, 15
      %s352 = smul.addr %s351, 2
      %s353 = smul.addr %s349, 32
      %s354 = sadd.s32 %s352, %s353
      %s355 = smul.addr %s354, 8
      %s356 = scalar_lea.vmem %s6, %s355
      %p357 = pneg %p226
      %p358 = pneg %p223
      %s359 = sadd.s32 %s23, %s24
      %p360 = scmp.lt.s32.totalorder %s359, 1
      %s361 = scalar_select %p360, %s359, 1
      %s362 = smul.addr %s361, 2
      %s363 = scalar_lea.vmem %s7, %s362
      %s364 = smul.u32 16, %s24
      %s365 = ssub.s32 18, %s364
      %p366 = scmp.lt.s32.totalorder %s365, 16
      %s367 = scalar_select %p366, %s365, 16
      %s368 = smul.u32 8, %s367
      %s369 = smul.u32 %s368, 3
      %p370 = scmp.lt.s32.totalorder %s23, 1
      %s371 = scalar_select %p370, %s23, 1
      %p372 = scmp.lt.s32.totalorder %s364, 17
      %s373 = scalar_select %p372, %s364, 17
      %s374 = smul.addr %s373, 3
      %s375 = smul.addr %s371, 54
      %s376 = sadd.s32 %s374, %s375
      %s377 = smul.addr %s376, 8
      %s378 = scalar_lea.vmem %s0, %s377
      %s379 = smul.u32 16, %s24
      %s380 = ssub.s32 18, %s379
      %p381 = scmp.lt.s32.totalorder %s380, 16
      %s382 = scalar_select %p381, %s380, 16
      %s383 = smul.u32 8, %s382
      %s384 = smul.u32 %s383, 3
      %s385 = sadd.s32 %s24, 1
      %s386 = smul.u32 %s385, 8
      %s387 = smul.u32 2, %s386
      %p388 = scmp.lt.s32.totalorder %s23, 1
      %s389 = scalar_select %p388, %s23, 1
      %p390 = scmp.lt.s32.totalorder %s387, 17
      %s391 = scalar_select %p390, %s387, 17
      %s392 = smul.addr %s391, 3
      %s393 = smul.addr %s389, 54
      %s394 = sadd.s32 %s392, %s393
      %s395 = smul.addr %s394, 8
      %s396 = scalar_lea.vmem %s1, %s395
      %s397 = sadd.s32 %s24, 1
      %s398 = smul.u32 %s397, 8
      %s399 = smul.u32 2, %s398
      %s400 = smul.u32 16, %s24
      %p401 = scmp.lt.s32.totalorder %s23, 1
      %s402 = scalar_select %p401, %s23, 1
      %p403 = scmp.lt.s32.totalorder %s400, 15
      %s404 = scalar_select %p403, %s400, 15
      %s405 = smul.addr %s404, 2
      %s406 = smul.addr %s402, 32
      %s407 = sadd.s32 %s405, %s406
      %s408 = smul.addr %s407, 8
      %s409 = scalar_lea.vmem %s6, %s408
      %s410 = smul.u32 16, %s24
      %s411 = sadd.s32 %s23, %s24
      %p412 = scmp.lt.s32.totalorder %s411, 1
      %s413 = scalar_select %p412, %s411, 1
      %s414 = smul.addr %s413, 2
      %s415 = scalar_lea.vmem %s7, %s414
      %s416 = sadd.s32 %s23, %s24
      %v417 = vld [vmem:[%s378] sm:$0xff]
      %v418 = vld [vmem:[%s378 + $0x8] sm:$0xff]
      %v419 = vld [vmem:[%s378 + $0x10] sm:$0x3]
      %v420 = vld [vmem:[%s378 + $0x18] sm:$0xff]
      %v421 = vld [vmem:[%s378 + $0x20] sm:$0xff]
      %v422 = vld [vmem:[%s378 + $0x28] sm:$0x3]
      %v423 = vld [vmem:[%s378 + $0x30] sm:$0xff]
      %v424 = vld [vmem:[%s378 + $0x38] sm:$0xff]
      %v425 = vld [vmem:[%s378 + $0x40] sm:$0x3]
      %v426 = vld [vmem:[%s378 + $0x48] sm:$0xff]
      %v427 = vld [vmem:[%s378 + $0x50] sm:$0xff]
      %v428 = vld [vmem:[%s378 + $0x58] sm:$0x3]
      %v429 = vld [vmem:[%s378 + $0x60] sm:$0xff]
      %v430 = vld [vmem:[%s378 + $0x68] sm:$0xff]
      %v431 = vld [vmem:[%s378 + $0x70] sm:$0x3]
      %v432 = vld [vmem:[%s378 + $0x78] sm:$0xff]
      %v433 = vld [vmem:[%s378 + $0x80] sm:$0xff]
      %v434 = vld [vmem:[%s378 + $0x88] sm:$0x3]
      %v435 = vld [vmem:[%s378 + $0x90] sm:$0xff]
      %v436 = vld [vmem:[%s378 + $0x98] sm:$0xff]
      %v437 = vld [vmem:[%s378 + $0xa0] sm:$0x3]
      %v438 = vld [vmem:[%s378 + $0xa8] sm:$0xff]
      %v439 = vld [vmem:[%s378 + $0xb0] sm:$0xff]
      %v440 = vld [vmem:[%s378 + $0xb8] sm:$0x3]
      %v441 = vld [vmem:[%s378 + $0xc0] sm:$0xff]
      %v442 = vld [vmem:[%s378 + $0xc8] sm:$0xff]
      %v443 = vld [vmem:[%s378 + $0xd0] sm:$0x3]
      %v444 = vld [vmem:[%s378 + $0xd8] sm:$0xff]
      %v445 = vld [vmem:[%s378 + $0xe0] sm:$0xff]
      %v446 = vld [vmem:[%s378 + $0xe8] sm:$0x3]
      %v447 = vld [vmem:[%s378 + $0xf0] sm:$0xff]
      %v448 = vld [vmem:[%s378 + $0xf8] sm:$0xff]
      %v449 = vld [vmem:[%s378 + $0x100] sm:$0x3]
      %v450 = vld [vmem:[%s378 + $0x108] sm:$0xff]
      %v451 = vld [vmem:[%s378 + $0x110] sm:$0xff]
      %v452 = vld [vmem:[%s378 + $0x118] sm:$0x3]
      %v453 = vld [vmem:[%s378 + $0x120] sm:$0xff]
      %v454 = vld [vmem:[%s378 + $0x128] sm:$0xff]
      %v455 = vld [vmem:[%s378 + $0x130] sm:$0x3]
      %v456 = vld [vmem:[%s378 + $0x138] sm:$0xff]
      %v457 = vld [vmem:[%s378 + $0x140] sm:$0xff]
      %v458 = vld [vmem:[%s378 + $0x148] sm:$0x3]
      %v459 = vld [vmem:[%s378 + $0x150] sm:$0xff]
      %v460 = vld [vmem:[%s378 + $0x158] sm:$0xff]
      %v461 = vld [vmem:[%s378 + $0x160] sm:$0x3]
      %v462 = vld [vmem:[%s378 + $0x168] sm:$0xff]
      %v463 = vld [vmem:[%s378 + $0x170] sm:$0xff]
      %v464 = vld [vmem:[%s378 + $0x178] sm:$0x3]
      %v465 = vld [vmem:[%s396] sm:$0xff]
      %v466 = vld [vmem:[%s396 + $0x8] sm:$0xff]
      %v467 = vld [vmem:[%s396 + $0x10] sm:$0x3]
      %v468 = vld [vmem:[%s396 + $0x18] sm:$0xff]
      %v469 = vld [vmem:[%s396 + $0x20] sm:$0xff]
      %v470 = vld [vmem:[%s396 + $0x28] sm:$0x3]
      %v471 = vld [vmem:[%s2] sm:$0x1]
      %v473 = vperm.slane %v471, 0
      %v475 = vmul.f32 %v417, %v473
      %v476 = vmul.f32 %v418, %v473
      %v477 = vmul.f32 %v419, %v473
      %v478 = vmul.f32 %v420, %v473
      %v479 = vmul.f32 %v421, %v473
      %v480 = vmul.f32 %v422, %v473
      %v481 = vmul.f32 %v423, %v473
      %v482 = vmul.f32 %v424, %v473
      %v483 = vmul.f32 %v425, %v473
      %v484 = vmul.f32 %v426, %v473
      %v485 = vmul.f32 %v427, %v473
      %v486 = vmul.f32 %v428, %v473
      %v487 = vmul.f32 %v429, %v473
      %v488 = vmul.f32 %v430, %v473
      %v489 = vmul.f32 %v431, %v473
      %v490 = vmul.f32 %v432, %v473
      %v491 = vmul.f32 %v433, %v473
      %v492 = vmul.f32 %v434, %v473
      %v493 = vmul.f32 %v435, %v473
      %v494 = vmul.f32 %v436, %v473
      %v495 = vmul.f32 %v437, %v473
      %v496 = vmul.f32 %v438, %v473
      %v497 = vmul.f32 %v439, %v473
      %v498 = vmul.f32 %v440, %v473
      %v499 = vmul.f32 %v441, %v473
      %v500 = vmul.f32 %v442, %v473
      %v501 = vmul.f32 %v443, %v473
      %v502 = vmul.f32 %v444, %v473
      %v503 = vmul.f32 %v445, %v473
      %v504 = vmul.f32 %v446, %v473
      %v505 = vmul.f32 %v447, %v473
      %v506 = vmul.f32 %v448, %v473
      %v507 = vmul.f32 %v449, %v473
      %v508 = vmul.f32 %v450, %v473
      %v509 = vmul.f32 %v451, %v473
      %v510 = vmul.f32 %v452, %v473
      %v511 = vmul.f32 %v453, %v473
      %v512 = vmul.f32 %v454, %v473
      %v513 = vmul.f32 %v455, %v473
      %v514 = vmul.f32 %v456, %v473
      %v515 = vmul.f32 %v457, %v473
      %v516 = vmul.f32 %v458, %v473
      %v517 = vmul.f32 %v459, %v473
      %v518 = vmul.f32 %v460, %v473
      %v519 = vmul.f32 %v461, %v473
      %v520 = vmul.f32 %v462, %v473
      %v521 = vmul.f32 %v463, %v473
      %v522 = vmul.f32 %v464, %v473
      %v523 = vmul.f32 %v465, %v473
      %v524 = vmul.f32 %v466, %v473
      %v525 = vmul.f32 %v467, %v473
      %v526 = vmul.f32 %v468, %v473
      %v527 = vmul.f32 %v469, %v473
      %v528 = vmul.f32 %v470, %v473
      %v529 = vld [vmem:[%s3] sm:$0x1]
      %v531 = vperm.slane %v529, 0
      %v533 = vadd.f32 %v475, %v531
      %v534 = vadd.f32 %v476, %v531
      %v535 = vadd.f32 %v477, %v531
      %v536 = vadd.f32 %v478, %v531
      %v537 = vadd.f32 %v479, %v531
      %v538 = vadd.f32 %v480, %v531
      %v539 = vadd.f32 %v481, %v531
      %v540 = vadd.f32 %v482, %v531
      %v541 = vadd.f32 %v483, %v531
      %v542 = vadd.f32 %v484, %v531
      %v543 = vadd.f32 %v485, %v531
      %v544 = vadd.f32 %v486, %v531
      %v545 = vadd.f32 %v487, %v531
      %v546 = vadd.f32 %v488, %v531
      %v547 = vadd.f32 %v489, %v531
      %v548 = vadd.f32 %v490, %v531
      %v549 = vadd.f32 %v491, %v531
      %v550 = vadd.f32 %v492, %v531
      %v551 = vadd.f32 %v493, %v531
      %v552 = vadd.f32 %v494, %v531
      %v553 = vadd.f32 %v495, %v531
      %v554 = vadd.f32 %v496, %v531
      %v555 = vadd.f32 %v497, %v531
      %v556 = vadd.f32 %v498, %v531
      %v557 = vadd.f32 %v499, %v531
      %v558 = vadd.f32 %v500, %v531
      %v559 = vadd.f32 %v501, %v531
      %v560 = vadd.f32 %v502, %v531
      %v561 = vadd.f32 %v503, %v531
      %v562 = vadd.f32 %v504, %v531
      %v563 = vadd.f32 %v505, %v531
      %v564 = vadd.f32 %v506, %v531
      %v565 = vadd.f32 %v507, %v531
      %v566 = vadd.f32 %v508, %v531
      %v567 = vadd.f32 %v509, %v531
      %v568 = vadd.f32 %v510, %v531
      %v569 = vadd.f32 %v511, %v531
      %v570 = vadd.f32 %v512, %v531
      %v571 = vadd.f32 %v513, %v531
      %v572 = vadd.f32 %v514, %v531
      %v573 = vadd.f32 %v515, %v531
      %v574 = vadd.f32 %v516, %v531
      %v575 = vadd.f32 %v517, %v531
      %v576 = vadd.f32 %v518, %v531
      %v577 = vadd.f32 %v519, %v531
      %v578 = vadd.f32 %v520, %v531
      %v579 = vadd.f32 %v521, %v531
      %v580 = vadd.f32 %v522, %v531
      %v581 = vadd.f32 %v523, %v531
      %v582 = vadd.f32 %v524, %v531
      %v583 = vadd.f32 %v525, %v531
      %v584 = vadd.f32 %v526, %v531
      %v585 = vadd.f32 %v527, %v531
      %v586 = vadd.f32 %v528, %v531
      %v587 = vmax.f32 %v533, 0.0
      %v588 = vmax.f32 %v534, 0.0
      %v589 = vmax.f32 %v535, 0.0
      %v590 = vmax.f32 %v536, 0.0
      %v591 = vmax.f32 %v537, 0.0
      %v592 = vmax.f32 %v538, 0.0
      %v593 = vmax.f32 %v539, 0.0
      %v594 = vmax.f32 %v540, 0.0
      %v595 = vmax.f32 %v541, 0.0
      %v596 = vmax.f32 %v542, 0.0
      %v597 = vmax.f32 %v543, 0.0
      %v598 = vmax.f32 %v544, 0.0
      %v599 = vmax.f32 %v545, 0.0
      %v600 = vmax.f32 %v546, 0.0
      %v601 = vmax.f32 %v547, 0.0
      %v602 = vmax.f32 %v548, 0.0
      %v603 = vmax.f32 %v549, 0.0
      %v604 = vmax.f32 %v550, 0.0
      %v605 = vmax.f32 %v551, 0.0
      %v606 = vmax.f32 %v552, 0.0
      %v607 = vmax.f32 %v553, 0.0
      %v608 = vmax.f32 %v554, 0.0
      %v609 = vmax.f32 %v555, 0.0
      %v610 = vmax.f32 %v556, 0.0
      %v611 = vmax.f32 %v557, 0.0
      %v612 = vmax.f32 %v558, 0.0
      %v613 = vmax.f32 %v559, 0.0
      %v614 = vmax.f32 %v560, 0.0
      %v615 = vmax.f32 %v561, 0.0
      %v616 = vmax.f32 %v562, 0.0
      %v617 = vmax.f32 %v563, 0.0
      %v618 = vmax.f32 %v564, 0.0
      %v619 = vmax.f32 %v565, 0.0
      %v620 = vmax.f32 %v566, 0.0
      %v621 = vmax.f32 %v567, 0.0
      %v622 = vmax.f32 %v568, 0.0
      %v623 = vmax.f32 %v569, 0.0
      %v624 = vmax.f32 %v570, 0.0
      %v625 = vmax.f32 %v571, 0.0
      %v626 = vmax.f32 %v572, 0.0
      %v627 = vmax.f32 %v573, 0.0
      %v628 = vmax.f32 %v574, 0.0
      %v629 = vmax.f32 %v575, 0.0
      %v630 = vmax.f32 %v576, 0.0
      %v631 = vmax.f32 %v577, 0.0
      %v632 = vmax.f32 %v578, 0.0
      %v633 = vmax.f32 %v579, 0.0
      %v634 = vmax.f32 %v580, 0.0
      %v635 = vmax.f32 %v581, 0.0
      %v636 = vmax.f32 %v582, 0.0
      %v637 = vmax.f32 %v583, 0.0
      %v638 = vmax.f32 %v584, 0.0
      %v639 = vmax.f32 %v585, 0.0
      %v640 = vmax.f32 %v586, 0.0
      %s641 = smul.u32 %s24, 16
      %v642 = vstv %s641
      %v643 = vadd.s32 %v642, 1
      %v644 = vadd.s32 %v642, 2
      %v645 = vadd.s32 %v642, 3
      %v646 = vadd.s32 %v642, 4
      %v647 = vadd.s32 %v642, 5
      %v648 = vadd.s32 %v642, 6
      %v649 = vadd.s32 %v642, 7
      %v650 = vadd.s32 %v642, 8
      %v651 = vadd.s32 %v642, 9
      %v652 = vadd.s32 %v642, 10
      %v653 = vadd.s32 %v642, 11
      %v654 = vadd.s32 %v642, 12
      %v655 = vadd.s32 %v642, 13
      %v656 = vadd.s32 %v642, 14
      %v657 = vadd.s32 %v642, 15
      %v658 = vadd.s32 %v642, 16
      %v659 = vadd.s32 %v642, 17
      %v660 = vlaneseq
      %v661 = vshrl.u32 %v660, 7
      %v662 = vadd.s32 %v661, 8
      %v663 = vadd.s32 %v661, 16
      %vm664 = vcmp.ge.s32.totalorder %v642, 1
      %vm665 = vcmp.ge.s32.totalorder %v643, 1
      %vm666 = vcmp.ge.s32.totalorder %v644, 1
      %vm667 = vcmp.ge.s32.totalorder %v645, 1
      %vm668 = vcmp.ge.s32.totalorder %v646, 1
      %vm669 = vcmp.ge.s32.totalorder %v647, 1
      %vm670 = vcmp.ge.s32.totalorder %v648, 1
      %vm671 = vcmp.ge.s32.totalorder %v649, 1
      %vm672 = vcmp.ge.s32.totalorder %v650, 1
      %vm673 = vcmp.ge.s32.totalorder %v651, 1
      %vm674 = vcmp.ge.s32.totalorder %v652, 1
      %vm675 = vcmp.ge.s32.totalorder %v653, 1
      %vm676 = vcmp.ge.s32.totalorder %v654, 1
      %vm677 = vcmp.ge.s32.totalorder %v655, 1
      %vm678 = vcmp.ge.s32.totalorder %v656, 1
      %vm679 = vcmp.ge.s32.totalorder %v657, 1
      %vm680 = vcmp.ge.s32.totalorder %v658, 1
      %vm681 = vcmp.ge.s32.totalorder %v659, 1
      %vm682 = vcmp.le.s32.totalorder %v642, 16
      %vm683 = vcmp.le.s32.totalorder %v643, 16
      %vm684 = vcmp.le.s32.totalorder %v644, 16
      %vm685 = vcmp.le.s32.totalorder %v645, 16
      %vm686 = vcmp.le.s32.totalorder %v646, 16
      %vm687 = vcmp.le.s32.totalorder %v647, 16
      %vm688 = vcmp.le.s32.totalorder %v648, 16
      %vm689 = vcmp.le.s32.totalorder %v649, 16
      %vm690 = vcmp.le.s32.totalorder %v650, 16
      %vm691 = vcmp.le.s32.totalorder %v651, 16
      %vm692 = vcmp.le.s32.totalorder %v652, 16
      %vm693 = vcmp.le.s32.totalorder %v653, 16
      %vm694 = vcmp.le.s32.totalorder %v654, 16
      %vm695 = vcmp.le.s32.totalorder %v655, 16
      %vm696 = vcmp.le.s32.totalorder %v656, 16
      %vm697 = vcmp.le.s32.totalorder %v657, 16
      %vm698 = vcmp.le.s32.totalorder %v658, 16
      %vm699 = vcmp.le.s32.totalorder %v659, 16
      %vm700 = vmand %vm664, %vm682
      %vm701 = vmand %vm665, %vm683
      %vm702 = vmand %vm666, %vm684
      %vm703 = vmand %vm667, %vm685
      %vm704 = vmand %vm668, %vm686
      %vm705 = vmand %vm669, %vm687
      %vm706 = vmand %vm670, %vm688
      %vm707 = vmand %vm671, %vm689
      %vm708 = vmand %vm672, %vm690
      %vm709 = vmand %vm673, %vm691
      %vm710 = vmand %vm674, %vm692
      %vm711 = vmand %vm675, %vm693
      %vm712 = vmand %vm676, %vm694
      %vm713 = vmand %vm677, %vm695
      %vm714 = vmand %vm678, %vm696
      %vm715 = vmand %vm679, %vm697
      %vm716 = vmand %vm680, %vm698
      %vm717 = vmand %vm681, %vm699
      %vm718 = vcmp.ge.s32.totalorder %v661, 1
      %vm719 = vcmp.ge.s32.totalorder %v662, 1
      %vm720 = vcmp.ge.s32.totalorder %v663, 1
      %vm721 = vmand %vm700, %vm718
      %vm722 = vmand %vm700, %vm719
      %vm723 = vmand %vm700, %vm720
      %vm724 = vmand %vm701, %vm718
      %vm725 = vmand %vm701, %vm719
      %vm726 = vmand %vm701, %vm720
      %vm727 = vmand %vm702, %vm718
      %vm728 = vmand %vm702, %vm719
      %vm729 = vmand %vm702, %vm720
      %vm730 = vmand %vm703, %vm718
      %vm731 = vmand %vm703, %vm719
      %vm732 = vmand %vm703, %vm720
      %vm733 = vmand %vm704, %vm718
      %vm734 = vmand %vm704, %vm719
      %vm735 = vmand %vm704, %vm720
      %vm736 = vmand %vm705, %vm718
      %vm737 = vmand %vm705, %vm719
      %vm738 = vmand %vm705, %vm720
      %vm739 = vmand %vm706, %vm718
      %vm740 = vmand %vm706, %vm719
      %vm741 = vmand %vm706, %vm720
      %vm742 = vmand %vm707, %vm718
      %vm743 = vmand %vm707, %vm719
      %vm744 = vmand %vm707, %vm720
      %vm745 = vmand %vm708, %vm718
      %vm746 = vmand %vm708, %vm719
      %vm747 = vmand %vm708, %vm720
      %vm748 = vmand %vm709, %vm718
      %vm749 = vmand %vm709, %vm719
      %vm750 = vmand %vm709, %vm720
      %vm751 = vmand %vm710, %vm718
      %vm752 = vmand %vm710, %vm719
      %vm753 = vmand %vm710, %vm720
      %vm754 = vmand %vm711, %vm718
      %vm755 = vmand %vm711, %vm719
      %vm756 = vmand %vm711, %vm720
      %vm757 = vmand %vm712, %vm718
      %vm758 = vmand %vm712, %vm719
      %vm759 = vmand %vm712, %vm720
      %vm760 = vmand %vm713, %vm718
      %vm761 = vmand %vm713, %vm719
      %vm762 = vmand %vm713, %vm720
      %vm763 = vmand %vm714, %vm718
      %vm764 = vmand %vm714, %vm719
      %vm765 = vmand %vm714, %vm720
      %vm766 = vmand %vm715, %vm718
      %vm767 = vmand %vm715, %vm719
      %vm768 = vmand %vm715, %vm720
      %vm769 = vmand %vm716, %vm718
      %vm770 = vmand %vm716, %vm719
      %vm771 = vmand %vm716, %vm720
      %vm772 = vmand %vm717, %vm718
      %vm773 = vmand %vm717, %vm719
      %vm774 = vmand %vm717, %vm720
      %vm775 = vcmp.le.s32.totalorder %v661, 16
      %vm776 = vcmp.le.s32.totalorder %v662, 16
      %vm777 = vcmp.le.s32.totalorder %v663, 16
      %vm778 = vmand %vm721, %vm775
      %vm779 = vmand %vm722, %vm776
      %vm780 = vmand %vm723, %vm777
      %vm781 = vmand %vm724, %vm775
      %vm782 = vmand %vm725, %vm776
      %vm783 = vmand %vm726, %vm777
      %vm784 = vmand %vm727, %vm775
      %vm785 = vmand %vm728, %vm776
      %vm786 = vmand %vm729, %vm777
      %vm787 = vmand %vm730, %vm775
      %vm788 = vmand %vm731, %vm776
      %vm789 = vmand %vm732, %vm777
      %vm790 = vmand %vm733, %vm775
      %vm791 = vmand %vm734, %vm776
      %vm792 = vmand %vm735, %vm777
      %vm793 = vmand %vm736, %vm775
      %vm794 = vmand %vm737, %vm776
      %vm795 = vmand %vm738, %vm777
      %vm796 = vmand %vm739, %vm775
      %vm797 = vmand %vm740, %vm776
      %vm798 = vmand %vm741, %vm777
      %vm799 = vmand %vm742, %vm775
      %vm800 = vmand %vm743, %vm776
      %vm801 = vmand %vm744, %vm777
      %vm802 = vmand %vm745, %vm775
      %vm803 = vmand %vm746, %vm776
      %vm804 = vmand %vm747, %vm777
      %vm805 = vmand %vm748, %vm775
      %vm806 = vmand %vm749, %vm776
      %vm807 = vmand %vm750, %vm777
      %vm808 = vmand %vm751, %vm775
      %vm809 = vmand %vm752, %vm776
      %vm810 = vmand %vm753, %vm777
      %vm811 = vmand %vm754, %vm775
      %vm812 = vmand %vm755, %vm776
      %vm813 = vmand %vm756, %vm777
      %vm814 = vmand %vm757, %vm775
      %vm815 = vmand %vm758, %vm776
      %vm816 = vmand %vm759, %vm777
      %vm817 = vmand %vm760, %vm775
      %vm818 = vmand %vm761, %vm776
      %vm819 = vmand %vm762, %vm777
      %vm820 = vmand %vm763, %vm775
      %vm821 = vmand %vm764, %vm776
      %vm822 = vmand %vm765, %vm777
      %vm823 = vmand %vm766, %vm775
      %vm824 = vmand %vm767, %vm776
      %vm825 = vmand %vm768, %vm777
      %vm826 = vmand %vm769, %vm775
      %vm827 = vmand %vm770, %vm776
      %vm828 = vmand %vm771, %vm777
      %vm829 = vmand %vm772, %vm775
      %vm830 = vmand %vm773, %vm776
      %vm831 = vmand %vm774, %vm777
      %v832 = vsel %vm778, %v587, 0.0
      %v833 = vsel %vm779, %v588, 0.0
      %v834 = vsel %vm780, %v589, 0.0
      %v835 = vsel %vm781, %v590, 0.0
      %v836 = vsel %vm782, %v591, 0.0
      %v837 = vsel %vm783, %v592, 0.0
      %v838 = vsel %vm784, %v593, 0.0
      %v839 = vsel %vm785, %v594, 0.0
      %v840 = vsel %vm786, %v595, 0.0
      %v841 = vsel %vm787, %v596, 0.0
      %v842 = vsel %vm788, %v597, 0.0
      %v843 = vsel %vm789, %v598, 0.0
      %v844 = vsel %vm790, %v599, 0.0
      %v845 = vsel %vm791, %v600, 0.0
      %v846 = vsel %vm792, %v601, 0.0
      %v847 = vsel %vm793, %v602, 0.0
      %v848 = vsel %vm794, %v603, 0.0
      %v849 = vsel %vm795, %v604, 0.0
      %v850 = vsel %vm796, %v605, 0.0
      %v851 = vsel %vm797, %v606, 0.0
      %v852 = vsel %vm798, %v607, 0.0
      %v853 = vsel %vm799, %v608, 0.0
      %v854 = vsel %vm800, %v609, 0.0
      %v855 = vsel %vm801, %v610, 0.0
      %v856 = vsel %vm802, %v611, 0.0
      %v857 = vsel %vm803, %v612, 0.0
      %v858 = vsel %vm804, %v613, 0.0
      %v859 = vsel %vm805, %v614, 0.0
      %v860 = vsel %vm806, %v615, 0.0
      %v861 = vsel %vm807, %v616, 0.0
      %v862 = vsel %vm808, %v617, 0.0
      %v863 = vsel %vm809, %v618, 0.0
      %v864 = vsel %vm810, %v619, 0.0
      %v865 = vsel %vm811, %v620, 0.0
      %v866 = vsel %vm812, %v621, 0.0
      %v867 = vsel %vm813, %v622, 0.0
      %v868 = vsel %vm814, %v623, 0.0
      %v869 = vsel %vm815, %v624, 0.0
      %v870 = vsel %vm816, %v625, 0.0
      %v871 = vsel %vm817, %v626, 0.0
      %v872 = vsel %vm818, %v627, 0.0
      %v873 = vsel %vm819, %v628, 0.0
      %v874 = vsel %vm820, %v629, 0.0
      %v875 = vsel %vm821, %v630, 0.0
      %v876 = vsel %vm822, %v631, 0.0
      %v877 = vsel %vm823, %v632, 0.0
      %v878 = vsel %vm824, %v633, 0.0
      %v879 = vsel %vm825, %v634, 0.0
      %v880 = vsel %vm826, %v635, 0.0
      %v881 = vsel %vm827, %v636, 0.0
      %v882 = vsel %vm828, %v637, 0.0
      %v883 = vsel %vm829, %v638, 0.0
      %v884 = vsel %vm830, %v639, 0.0
      %v885 = vsel %vm831, %v640, 0.0
      %vm934 = vcmask 1046528
      %v935 = vrot.slane %v832, 1
      %v936 = vrot.slane %v833, 1
      %v937 = vsel %vm934, %v935, %v936
      %v938 = vrot.slane %v834, 1
      %v939 = vsel %vm934, %v936, %v938
      %v940 = vrot.slane %v835, 1
      %v941 = vrot.slane %v836, 1
      %v942 = vsel %vm934, %v940, %v941
      %v943 = vrot.slane %v837, 1
      %v944 = vsel %vm934, %v941, %v943
      %v945 = vrot.slane %v838, 1
      %v946 = vrot.slane %v839, 1
      %v947 = vsel %vm934, %v945, %v946
      %v948 = vrot.slane %v840, 1
      %v949 = vsel %vm934, %v946, %v948
      %v950 = vrot.slane %v841, 1
      %v951 = vrot.slane %v842, 1
      %v952 = vsel %vm934, %v950, %v951
      %v953 = vrot.slane %v843, 1
      %v954 = vsel %vm934, %v951, %v953
      %v955 = vrot.slane %v844, 1
      %v956 = vrot.slane %v845, 1
      %v957 = vsel %vm934, %v955, %v956
      %v958 = vrot.slane %v846, 1
      %v959 = vsel %vm934, %v956, %v958
      %v960 = vrot.slane %v847, 1
      %v961 = vrot.slane %v848, 1
      %v962 = vsel %vm934, %v960, %v961
      %v963 = vrot.slane %v849, 1
      %v964 = vsel %vm934, %v961, %v963
      %v965 = vrot.slane %v850, 1
      %v966 = vrot.slane %v851, 1
      %v967 = vsel %vm934, %v965, %v966
      %v968 = vrot.slane %v852, 1
      %v969 = vsel %vm934, %v966, %v968
      %v970 = vrot.slane %v853, 1
      %v971 = vrot.slane %v854, 1
      %v972 = vsel %vm934, %v970, %v971
      %v973 = vrot.slane %v855, 1
      %v974 = vsel %vm934, %v971, %v973
      %v975 = vrot.slane %v856, 1
      %v976 = vrot.slane %v857, 1
      %v977 = vsel %vm934, %v975, %v976
      %v978 = vrot.slane %v858, 1
      %v979 = vsel %vm934, %v976, %v978
      %v980 = vrot.slane %v859, 1
      %v981 = vrot.slane %v860, 1
      %v982 = vsel %vm934, %v980, %v981
      %v983 = vrot.slane %v861, 1
      %v984 = vsel %vm934, %v981, %v983
      %v985 = vrot.slane %v862, 1
      %v986 = vrot.slane %v863, 1
      %v987 = vsel %vm934, %v985, %v986
      %v988 = vrot.slane %v864, 1
      %v989 = vsel %vm934, %v986, %v988
      %v990 = vrot.slane %v865, 1
      %v991 = vrot.slane %v866, 1
      %v992 = vsel %vm934, %v990, %v991
      %v993 = vrot.slane %v867, 1
      %v994 = vsel %vm934, %v991, %v993
      %v995 = vrot.slane %v868, 1
      %v996 = vrot.slane %v869, 1
      %v997 = vsel %vm934, %v995, %v996
      %v998 = vrot.slane %v870, 1
      %v999 = vsel %vm934, %v996, %v998
      %v1000 = vrot.slane %v871, 1
      %v1001 = vrot.slane %v872, 1
      %v1002 = vsel %vm934, %v1000, %v1001
      %v1003 = vrot.slane %v873, 1
      %v1004 = vsel %vm934, %v1001, %v1003
      %v1005 = vrot.slane %v874, 1
      %v1006 = vrot.slane %v875, 1
      %v1007 = vsel %vm934, %v1005, %v1006
      %v1008 = vrot.slane %v876, 1
      %v1009 = vsel %vm934, %v1006, %v1008
      %v1010 = vrot.slane %v877, 1
      %v1011 = vrot.slane %v878, 1
      %v1012 = vsel %vm934, %v1010, %v1011
      %v1013 = vrot.slane %v879, 1
      %v1014 = vsel %vm934, %v1011, %v1013
      %1015 = vrot.lane.b32.xlu0 %v937, 4
      %v1016 = vpop.permute.xlu0 %1015
      %1017 = vrot.lane.b32.xlu0 %v939, 4
      %v1018 = vpop.permute.xlu0 %1017
      %1019 = vrot.lane.b32.xlu0 %v942, 4
      %v1020 = vpop.permute.xlu0 %1019
      %1021 = vrot.lane.b32.xlu0 %v944, 4
      %v1022 = vpop.permute.xlu0 %1021
      %1023 = vrot.lane.b32.xlu0 %v947, 4
      %v1024 = vpop.permute.xlu0 %1023
      %1025 = vrot.lane.b32.xlu0 %v949, 4
      %v1026 = vpop.permute.xlu0 %1025
      %1027 = vrot.lane.b32.xlu0 %v952, 4
      %v1028 = vpop.permute.xlu0 %1027
      %1029 = vrot.lane.b32.xlu0 %v954, 4
      %v1030 = vpop.permute.xlu0 %1029
      %1031 = vrot.lane.b32.xlu0 %v957, 4
      %v1032 = vpop.permute.xlu0 %1031
      %1033 = vrot.lane.b32.xlu0 %v959, 4
      %v1034 = vpop.permute.xlu0 %1033
      %1035 = vrot.lane.b32.xlu0 %v962, 4
      %v1036 = vpop.permute.xlu0 %1035
      %1037 = vrot.lane.b32.xlu0 %v964, 4
      %v1038 = vpop.permute.xlu0 %1037
      %1039 = vrot.lane.b32.xlu0 %v967, 4
      %v1040 = vpop.permute.xlu0 %1039
      %1041 = vrot.lane.b32.xlu0 %v969, 4
      %v1042 = vpop.permute.xlu0 %1041
      %1043 = vrot.lane.b32.xlu0 %v972, 4
      %v1044 = vpop.permute.xlu0 %1043
      %1045 = vrot.lane.b32.xlu0 %v974, 4
      %v1046 = vpop.permute.xlu0 %1045
      %1047 = vrot.lane.b32.xlu0 %v977, 4
      %v1048 = vpop.permute.xlu0 %1047
      %1049 = vrot.lane.b32.xlu0 %v979, 4
      %v1050 = vpop.permute.xlu0 %1049
      %1051 = vrot.lane.b32.xlu0 %v982, 4
      %v1052 = vpop.permute.xlu0 %1051
      %1053 = vrot.lane.b32.xlu0 %v984, 4
      %v1054 = vpop.permute.xlu0 %1053
      %1055 = vrot.lane.b32.xlu0 %v987, 4
      %v1056 = vpop.permute.xlu0 %1055
      %1057 = vrot.lane.b32.xlu0 %v989, 4
      %v1058 = vpop.permute.xlu0 %1057
      %1059 = vrot.lane.b32.xlu0 %v992, 4
      %v1060 = vpop.permute.xlu0 %1059
      %1061 = vrot.lane.b32.xlu0 %v994, 4
      %v1062 = vpop.permute.xlu0 %1061
      %1063 = vrot.lane.b32.xlu0 %v997, 4
      %v1064 = vpop.permute.xlu0 %1063
      %1065 = vrot.lane.b32.xlu0 %v999, 4
      %v1066 = vpop.permute.xlu0 %1065
      %1067 = vrot.lane.b32.xlu0 %v1002, 4
      %v1068 = vpop.permute.xlu0 %1067
      %1069 = vrot.lane.b32.xlu0 %v1004, 4
      %v1070 = vpop.permute.xlu0 %1069
      %1071 = vrot.lane.b32.xlu0 %v1007, 4
      %v1072 = vpop.permute.xlu0 %1071
      %1073 = vrot.lane.b32.xlu0 %v1009, 4
      %v1074 = vpop.permute.xlu0 %1073
      %1075 = vrot.lane.b32.xlu0 %v1012, 4
      %v1076 = vpop.permute.xlu0 %1075
      %1077 = vrot.lane.b32.xlu0 %v1014, 4
      %v1078 = vpop.permute.xlu0 %1077
      %vm1111 = vcmask 1045504
      %v1112 = vrot.slane %v832, 2
      %v1113 = vrot.slane %v833, 2
      %v1114 = vsel %vm1111, %v1112, %v1113
      %v1115 = vrot.slane %v834, 2
      %v1116 = vsel %vm1111, %v1113, %v1115
      %v1117 = vrot.slane %v835, 2
      %v1118 = vrot.slane %v836, 2
      %v1119 = vsel %vm1111, %v1117, %v1118
      %v1120 = vrot.slane %v837, 2
      %v1121 = vsel %vm1111, %v1118, %v1120
      %v1122 = vrot.slane %v838, 2
      %v1123 = vrot.slane %v839, 2
      %v1124 = vsel %vm1111, %v1122, %v1123
      %v1125 = vrot.slane %v840, 2
      %v1126 = vsel %vm1111, %v1123, %v1125
      %v1127 = vrot.slane %v841, 2
      %v1128 = vrot.slane %v842, 2
      %v1129 = vsel %vm1111, %v1127, %v1128
      %v1130 = vrot.slane %v843, 2
      %v1131 = vsel %vm1111, %v1128, %v1130
      %v1132 = vrot.slane %v844, 2
      %v1133 = vrot.slane %v845, 2
      %v1134 = vsel %vm1111, %v1132, %v1133
      %v1135 = vrot.slane %v846, 2
      %v1136 = vsel %vm1111, %v1133, %v1135
      %v1137 = vrot.slane %v847, 2
      %v1138 = vrot.slane %v848, 2
      %v1139 = vsel %vm1111, %v1137, %v1138
      %v1140 = vrot.slane %v849, 2
      %v1141 = vsel %vm1111, %v1138, %v1140
      %v1142 = vrot.slane %v850, 2
      %v1143 = vrot.slane %v851, 2
      %v1144 = vsel %vm1111, %v1142, %v1143
      %v1145 = vrot.slane %v852, 2
      %v1146 = vsel %vm1111, %v1143, %v1145
      %v1147 = vrot.slane %v853, 2
      %v1148 = vrot.slane %v854, 2
      %v1149 = vsel %vm1111, %v1147, %v1148
      %v1150 = vrot.slane %v855, 2
      %v1151 = vsel %vm1111, %v1148, %v1150
      %v1152 = vrot.slane %v856, 2
      %v1153 = vrot.slane %v857, 2
      %v1154 = vsel %vm1111, %v1152, %v1153
      %v1155 = vrot.slane %v858, 2
      %v1156 = vsel %vm1111, %v1153, %v1155
      %v1157 = vrot.slane %v859, 2
      %v1158 = vrot.slane %v860, 2
      %v1159 = vsel %vm1111, %v1157, %v1158
      %v1160 = vrot.slane %v861, 2
      %v1161 = vsel %vm1111, %v1158, %v1160
      %v1162 = vrot.slane %v862, 2
      %v1163 = vrot.slane %v863, 2
      %v1164 = vsel %vm1111, %v1162, %v1163
      %v1165 = vrot.slane %v864, 2
      %v1166 = vsel %vm1111, %v1163, %v1165
      %v1167 = vrot.slane %v865, 2
      %v1168 = vrot.slane %v866, 2
      %v1169 = vsel %vm1111, %v1167, %v1168
      %v1170 = vrot.slane %v867, 2
      %v1171 = vsel %vm1111, %v1168, %v1170
      %v1172 = vrot.slane %v868, 2
      %v1173 = vrot.slane %v869, 2
      %v1174 = vsel %vm1111, %v1172, %v1173
      %v1175 = vrot.slane %v870, 2
      %v1176 = vsel %vm1111, %v1173, %v1175
      %v1177 = vrot.slane %v871, 2
      %v1178 = vrot.slane %v872, 2
      %v1179 = vsel %vm1111, %v1177, %v1178
      %v1180 = vrot.slane %v873, 2
      %v1181 = vsel %vm1111, %v1178, %v1180
      %v1182 = vrot.slane %v874, 2
      %v1183 = vrot.slane %v875, 2
      %v1184 = vsel %vm1111, %v1182, %v1183
      %v1185 = vrot.slane %v876, 2
      %v1186 = vsel %vm1111, %v1183, %v1185
      %v1187 = vrot.slane %v877, 2
      %v1188 = vrot.slane %v878, 2
      %v1189 = vsel %vm1111, %v1187, %v1188
      %v1190 = vrot.slane %v879, 2
      %v1191 = vsel %vm1111, %v1188, %v1190
      %1192 = vrot.lane.b32.xlu0 %v1114, 8
      %v1193 = vpop.permute.xlu0 %1192
      %1194 = vrot.lane.b32.xlu0 %v1116, 8
      %v1195 = vpop.permute.xlu0 %1194
      %1196 = vrot.lane.b32.xlu0 %v1119, 8
      %v1197 = vpop.permute.xlu0 %1196
      %1198 = vrot.lane.b32.xlu0 %v1121, 8
      %v1199 = vpop.permute.xlu0 %1198
      %1200 = vrot.lane.b32.xlu0 %v1124, 8
      %v1201 = vpop.permute.xlu0 %1200
      %1202 = vrot.lane.b32.xlu0 %v1126, 8
      %v1203 = vpop.permute.xlu0 %1202
      %1204 = vrot.lane.b32.xlu0 %v1129, 8
      %v1205 = vpop.permute.xlu0 %1204
      %1206 = vrot.lane.b32.xlu0 %v1131, 8
      %v1207 = vpop.permute.xlu0 %1206
      %1208 = vrot.lane.b32.xlu0 %v1134, 8
      %v1209 = vpop.permute.xlu0 %1208
      %1210 = vrot.lane.b32.xlu0 %v1136, 8
      %v1211 = vpop.permute.xlu0 %1210
      %1212 = vrot.lane.b32.xlu0 %v1139, 8
      %v1213 = vpop.permute.xlu0 %1212
      %1214 = vrot.lane.b32.xlu0 %v1141, 8
      %v1215 = vpop.permute.xlu0 %1214
      %1216 = vrot.lane.b32.xlu0 %v1144, 8
      %v1217 = vpop.permute.xlu0 %1216
      %1218 = vrot.lane.b32.xlu0 %v1146, 8
      %v1219 = vpop.permute.xlu0 %1218
      %1220 = vrot.lane.b32.xlu0 %v1149, 8
      %v1221 = vpop.permute.xlu0 %1220
      %1222 = vrot.lane.b32.xlu0 %v1151, 8
      %v1223 = vpop.permute.xlu0 %1222
      %1224 = vrot.lane.b32.xlu0 %v1154, 8
      %v1225 = vpop.permute.xlu0 %1224
      %1226 = vrot.lane.b32.xlu0 %v1156, 8
      %v1227 = vpop.permute.xlu0 %1226
      %1228 = vrot.lane.b32.xlu0 %v1159, 8
      %v1229 = vpop.permute.xlu0 %1228
      %1230 = vrot.lane.b32.xlu0 %v1161, 8
      %v1231 = vpop.permute.xlu0 %1230
      %1232 = vrot.lane.b32.xlu0 %v1164, 8
      %v1233 = vpop.permute.xlu0 %1232
      %1234 = vrot.lane.b32.xlu0 %v1166, 8
      %v1235 = vpop.permute.xlu0 %1234
      %1236 = vrot.lane.b32.xlu0 %v1169, 8
      %v1237 = vpop.permute.xlu0 %1236
      %1238 = vrot.lane.b32.xlu0 %v1171, 8
      %v1239 = vpop.permute.xlu0 %1238
      %1240 = vrot.lane.b32.xlu0 %v1174, 8
      %v1241 = vpop.permute.xlu0 %1240
      %1242 = vrot.lane.b32.xlu0 %v1176, 8
      %v1243 = vpop.permute.xlu0 %1242
      %1244 = vrot.lane.b32.xlu0 %v1179, 8
      %v1245 = vpop.permute.xlu0 %1244
      %1246 = vrot.lane.b32.xlu0 %v1181, 8
      %v1247 = vpop.permute.xlu0 %1246
      %1248 = vrot.lane.b32.xlu0 %v1184, 8
      %v1249 = vpop.permute.xlu0 %1248
      %1250 = vrot.lane.b32.xlu0 %v1186, 8
      %v1251 = vpop.permute.xlu0 %1250
      %1252 = vrot.lane.b32.xlu0 %v1189, 8
      %v1253 = vpop.permute.xlu0 %1252
      %1254 = vrot.lane.b32.xlu0 %v1191, 8
      %v1255 = vpop.permute.xlu0 %1254
      %vm1288 = vcmask 31744
      %v1289 = vsel %vm1288, %v832, %v1016
      %v1290 = vsel %vm1288, %v833, %v1018
      %v1291 = vsel %vm1288, %v835, %v1020
      %v1292 = vsel %vm1288, %v836, %v1022
      %v1293 = vsel %vm1288, %v838, %v1024
      %v1294 = vsel %vm1288, %v839, %v1026
      %v1295 = vsel %vm1288, %v841, %v1028
      %v1296 = vsel %vm1288, %v842, %v1030
      %v1297 = vsel %vm1288, %v844, %v1032
      %v1298 = vsel %vm1288, %v845, %v1034
      %v1299 = vsel %vm1288, %v847, %v1036
      %v1300 = vsel %vm1288, %v848, %v1038
      %v1301 = vsel %vm1288, %v850, %v1040
      %v1302 = vsel %vm1288, %v851, %v1042
      %v1303 = vsel %vm1288, %v853, %v1044
      %v1304 = vsel %vm1288, %v854, %v1046
      %v1305 = vsel %vm1288, %v856, %v1048
      %v1306 = vsel %vm1288, %v857, %v1050
      %v1307 = vsel %vm1288, %v859, %v1052
      %v1308 = vsel %vm1288, %v860, %v1054
      %v1309 = vsel %vm1288, %v862, %v1056
      %v1310 = vsel %vm1288, %v863, %v1058
      %v1311 = vsel %vm1288, %v865, %v1060
      %v1312 = vsel %vm1288, %v866, %v1062
      %v1313 = vsel %vm1288, %v868, %v1064
      %v1314 = vsel %vm1288, %v869, %v1066
      %v1315 = vsel %vm1288, %v871, %v1068
      %v1316 = vsel %vm1288, %v872, %v1070
      %v1317 = vsel %vm1288, %v874, %v1072
      %v1318 = vsel %vm1288, %v875, %v1074
      %v1319 = vsel %vm1288, %v877, %v1076
      %v1320 = vsel %vm1288, %v878, %v1078
      %vm1321 = vcmask 64512
      %v1322 = vsel %vm1321, %v1289, %v1193
      %v1323 = vsel %vm1321, %v1290, %v1195
      %v1324 = vsel %vm1321, %v1291, %v1197
      %v1325 = vsel %vm1321, %v1292, %v1199
      %v1326 = vsel %vm1321, %v1293, %v1201
      %v1327 = vsel %vm1321, %v1294, %v1203
      %v1328 = vsel %vm1321, %v1295, %v1205
      %v1329 = vsel %vm1321, %v1296, %v1207
      %v1330 = vsel %vm1321, %v1297, %v1209
      %v1331 = vsel %vm1321, %v1298, %v1211
      %v1332 = vsel %vm1321, %v1299, %v1213
      %v1333 = vsel %vm1321, %v1300, %v1215
      %v1334 = vsel %vm1321, %v1301, %v1217
      %v1335 = vsel %vm1321, %v1302, %v1219
      %v1336 = vsel %vm1321, %v1303, %v1221
      %v1337 = vsel %vm1321, %v1304, %v1223
      %v1338 = vsel %vm1321, %v1305, %v1225
      %v1339 = vsel %vm1321, %v1306, %v1227
      %v1340 = vsel %vm1321, %v1307, %v1229
      %v1341 = vsel %vm1321, %v1308, %v1231
      %v1342 = vsel %vm1321, %v1309, %v1233
      %v1343 = vsel %vm1321, %v1310, %v1235
      %v1344 = vsel %vm1321, %v1311, %v1237
      %v1345 = vsel %vm1321, %v1312, %v1239
      %v1346 = vsel %vm1321, %v1313, %v1241
      %v1347 = vsel %vm1321, %v1314, %v1243
      %v1348 = vsel %vm1321, %v1315, %v1245
      %v1349 = vsel %vm1321, %v1316, %v1247
      %v1350 = vsel %vm1321, %v1317, %v1249
      %v1351 = vsel %vm1321, %v1318, %v1251
      %v1352 = vsel %vm1321, %v1319, %v1253
      %v1353 = vsel %vm1321, %v1320, %v1255
      %v1354 = vld [vmem:[%s4] sm:$0xff]
      %v1355 = vld [vmem:[%s4 + $0x8] sm:$0xf]
      %v1359 = vrot.slane %v880, 1
      %v1360 = vrot.slane %v881, 1
      %v1361 = vsel %vm934, %v1359, %v1360
      %v1362 = vrot.slane %v882, 1
      %v1363 = vsel %vm934, %v1360, %v1362
      %1364 = vrot.lane.b32.xlu0 %v1361, 4
      %v1365 = vpop.permute.xlu0 %1364
      %1366 = vrot.lane.b32.xlu0 %v1363, 4
      %v1367 = vpop.permute.xlu0 %1366
      %v1370 = vrot.slane %v880, 2
      %v1371 = vrot.slane %v881, 2
      %v1372 = vsel %vm1111, %v1370, %v1371
      %v1373 = vrot.slane %v882, 2
      %v1374 = vsel %vm1111, %v1371, %v1373
      %1375 = vrot.lane.b32.xlu0 %v1372, 8
      %v1376 = vpop.permute.xlu0 %1375
      %1377 = vrot.lane.b32.xlu0 %v1374, 8
      %v1378 = vpop.permute.xlu0 %1377
      %v1381 = vsel %vm1288, %v880, %v1365
      %v1382 = vsel %vm1288, %v881, %v1367
      %v1383 = vsel %vm1321, %v1381, %v1376
      %v1384 = vsel %vm1321, %v1382, %v1378
      %s1385 = scalar_lea.vmem %s4, 16
      %v1386 = vld [vmem:[%s1385] sm:$0xff]
      %v1387 = vld [vmem:[%s1385 + $0x8] sm:$0xf]
      %vm1388 = vcmask 97280
      %v1390 = vsel %vm1388, %v1324, 0
      %v1393 = vsel %vm1388, %v1325, 0
      %v1396 = vsel %vm1388, %v1326, 0
      %v1399 = vsel %vm1388, %v1327, 0
      %v1402 = vsel %vm1388, %v1328, 0
      %v1405 = vsel %vm1388, %v1329, 0
      %v1408 = vsel %vm1388, %v1330, 0
      %v1411 = vsel %vm1388, %v1331, 0
      %v1414 = vsel %vm1388, %v1332, 0
      %v1417 = vsel %vm1388, %v1333, 0
      %v1420 = vsel %vm1388, %v1334, 0
      %v1423 = vsel %vm1388, %v1335, 0
      %v1426 = vsel %vm1388, %v1336, 0
      %v1429 = vsel %vm1388, %v1337, 0
      %v1432 = vsel %vm1388, %v1338, 0
      %v1435 = vsel %vm1388, %v1339, 0
      %v1438 = vsel %vm1388, %v1340, 0
      %v1441 = vsel %vm1388, %v1341, 0
      %v1444 = vsel %vm1388, %v1342, 0
      %v1447 = vsel %vm1388, %v1343, 0
      %v1450 = vsel %vm1388, %v1344, 0
      %v1453 = vsel %vm1388, %v1345, 0
      %v1456 = vsel %vm1388, %v1346, 0
      %v1459 = vsel %vm1388, %v1347, 0
      %v1462 = vsel %vm1388, %v1348, 0
      %v1465 = vsel %vm1388, %v1349, 0
      %v1468 = vsel %vm1388, %v1350, 0
      %v1471 = vsel %vm1388, %v1351, 0
      %v1474 = vsel %vm1388, %v1352, 0
      %v1477 = vsel %vm1388, %v1353, 0
      %v1480 = vsel %vm1388, %v1383, 0
      %v1483 = vsel %vm1388, %v1384, 0
      %vm1485 = vcmask 1043456
      %v1487 = vsel %vm1485, %v1387, 0
      %1489 = vmatpush.msra.mxu0 0.0
      %1490 = vmatpush.msra.mxu0 0.0
      %1491 = vmatpush.msra.mxu0 0.0
      %1492 = vmatpush.msra.mxu0 0.0
      %1493 = vmatpush.msra.mxu0 0.0
      %1494 = vmatpush.msra.mxu0 0.0
      %1495 = vmatpush.msra.mxu0 0.0
      %1496 = vmatpush.msra.mxu0 0.0
      %1497 = vmatpush.msra.mxu0 0.0
      %1498 = vmatpush.msra.mxu0 0.0
      %1499 = vmatpush.msra.mxu0 0.0
      %1500 = vmatpush.msra.mxu0 0.0
      %1501 = vmatpush.msra.mxu0 0.0
      %1502 = vmatpush.msra.mxu0 0.0
      %1503 = vmatpush.msra.mxu0 %v1487
      %1504 = vmatpush.msra.mxu0 %v1386
      %1505 = vmatmul.f32.gmra.mxu0 %v1390
      %v1506 = vpop.f32.mrf.mxu0
      %v1507 = vadd.f32 0.0, %v1506
      %1508 = vmatmul.f32.gmra.mxu0 %v1393
      %v1509 = vpop.f32.mrf.mxu0
      %v1510 = vadd.f32 0.0, %v1509
      %1511 = vmatmul.f32.gmra.mxu0 %v1396
      %v1512 = vpop.f32.mrf.mxu0
      %v1513 = vadd.f32 0.0, %v1512
      %1514 = vmatmul.f32.gmra.mxu0 %v1399
      %v1515 = vpop.f32.mrf.mxu0
      %v1516 = vadd.f32 0.0, %v1515
      %1517 = vmatmul.f32.gmra.mxu0 %v1402
      %v1518 = vpop.f32.mrf.mxu0
      %v1519 = vadd.f32 0.0, %v1518
      %1520 = vmatmul.f32.gmra.mxu0 %v1405
      %v1521 = vpop.f32.mrf.mxu0
      %v1522 = vadd.f32 0.0, %v1521
      %1523 = vmatmul.f32.gmra.mxu0 %v1408
      %v1524 = vpop.f32.mrf.mxu0
      %v1525 = vadd.f32 0.0, %v1524
      %1526 = vmatmul.f32.gmra.mxu0 %v1411
      %v1527 = vpop.f32.mrf.mxu0
      %v1528 = vadd.f32 0.0, %v1527
      %1529 = vmatmul.f32.gmra.mxu0 %v1414
      %v1530 = vpop.f32.mrf.mxu0
      %v1531 = vadd.f32 0.0, %v1530
      %1532 = vmatmul.f32.gmra.mxu0 %v1417
      %v1533 = vpop.f32.mrf.mxu0
      %v1534 = vadd.f32 0.0, %v1533
      %1535 = vmatmul.f32.gmra.mxu0 %v1420
      %v1536 = vpop.f32.mrf.mxu0
      %v1537 = vadd.f32 0.0, %v1536
      %1538 = vmatmul.f32.gmra.mxu0 %v1423
      %v1539 = vpop.f32.mrf.mxu0
      %v1540 = vadd.f32 0.0, %v1539
      %1541 = vmatmul.f32.gmra.mxu0 %v1426
      %v1542 = vpop.f32.mrf.mxu0
      %v1543 = vadd.f32 0.0, %v1542
      %1544 = vmatmul.f32.gmra.mxu0 %v1429
      %v1545 = vpop.f32.mrf.mxu0
      %v1546 = vadd.f32 0.0, %v1545
      %1547 = vmatmul.f32.gmra.mxu0 %v1432
      %v1548 = vpop.f32.mrf.mxu0
      %v1549 = vadd.f32 0.0, %v1548
      %1550 = vmatmul.f32.gmra.mxu0 %v1435
      %v1551 = vpop.f32.mrf.mxu0
      %v1552 = vadd.f32 0.0, %v1551
      %1553 = vmatmul.f32.gmra.mxu0 %v1438
      %v1554 = vpop.f32.mrf.mxu0
      %v1555 = vadd.f32 0.0, %v1554
      %1556 = vmatmul.f32.gmra.mxu0 %v1441
      %v1557 = vpop.f32.mrf.mxu0
      %v1558 = vadd.f32 0.0, %v1557
      %1559 = vmatmul.f32.gmra.mxu0 %v1444
      %v1560 = vpop.f32.mrf.mxu0
      %v1561 = vadd.f32 0.0, %v1560
      %1562 = vmatmul.f32.gmra.mxu0 %v1447
      %v1563 = vpop.f32.mrf.mxu0
      %v1564 = vadd.f32 0.0, %v1563
      %1565 = vmatmul.f32.gmra.mxu0 %v1450
      %v1566 = vpop.f32.mrf.mxu0
      %v1567 = vadd.f32 0.0, %v1566
      %1568 = vmatmul.f32.gmra.mxu0 %v1453
      %v1569 = vpop.f32.mrf.mxu0
      %v1570 = vadd.f32 0.0, %v1569
      %1571 = vmatmul.f32.gmra.mxu0 %v1456
      %v1572 = vpop.f32.mrf.mxu0
      %v1573 = vadd.f32 0.0, %v1572
      %1574 = vmatmul.f32.gmra.mxu0 %v1459
      %v1575 = vpop.f32.mrf.mxu0
      %v1576 = vadd.f32 0.0, %v1575
      %1577 = vmatmul.f32.gmra.mxu0 %v1462
      %v1578 = vpop.f32.mrf.mxu0
      %v1579 = vadd.f32 0.0, %v1578
      %1580 = vmatmul.f32.gmra.mxu0 %v1465
      %v1581 = vpop.f32.mrf.mxu0
      %v1582 = vadd.f32 0.0, %v1581
      %1583 = vmatmul.f32.gmra.mxu0 %v1468
      %v1584 = vpop.f32.mrf.mxu0
      %v1585 = vadd.f32 0.0, %v1584
      %1586 = vmatmul.f32.gmra.mxu0 %v1471
      %v1587 = vpop.f32.mrf.mxu0
      %v1588 = vadd.f32 0.0, %v1587
      %1589 = vmatmul.f32.gmra.mxu0 %v1474
      %v1590 = vpop.f32.mrf.mxu0
      %v1591 = vadd.f32 0.0, %v1590
      %1592 = vmatmul.f32.gmra.mxu0 %v1477
      %v1593 = vpop.f32.mrf.mxu0
      %v1594 = vadd.f32 0.0, %v1593
      %1595 = vmatmul.f32.gmra.mxu0 %v1480
      %v1596 = vpop.f32.mrf.mxu0
      %v1597 = vadd.f32 0.0, %v1596
      %1598 = vmatmul.f32.gmra.mxu0 %v1483
      %v1599 = vpop.f32.mrf.mxu0
      %v1600 = vadd.f32 0.0, %v1599
      %1601 = vdwg.mxu0
      %v1603 = vsel %vm1388, %v1322, 0
      %v1606 = vsel %vm1388, %v1323, 0
      %v1609 = vsel %vm1485, %v1355, 0
      %1611 = vmatpush.msra.mxu0 0.0
      %1612 = vmatpush.msra.mxu0 0.0
      %1613 = vmatpush.msra.mxu0 0.0
      %1614 = vmatpush.msra.mxu0 0.0
      %1615 = vmatpush.msra.mxu0 0.0
      %1616 = vmatpush.msra.mxu0 0.0
      %1617 = vmatpush.msra.mxu0 0.0
      %1618 = vmatpush.msra.mxu0 0.0
      %1619 = vmatpush.msra.mxu0 0.0
      %1620 = vmatpush.msra.mxu0 0.0
      %1621 = vmatpush.msra.mxu0 0.0
      %1622 = vmatpush.msra.mxu0 0.0
      %1623 = vmatpush.msra.mxu0 0.0
      %1624 = vmatpush.msra.mxu0 0.0
      %1625 = vmatpush.msra.mxu0 %v1609
      %1626 = vmatpush.msra.mxu0 %v1354
      %1627 = vmatmul.f32.gmra.mxu0 %v1603
      %v1628 = vpop.f32.mrf.mxu0
      %v1629 = vadd.f32 %v1507, %v1628
      %1630 = vmatmul.f32.gmra.mxu0 %v1606
      %v1631 = vpop.f32.mrf.mxu0
      %v1632 = vadd.f32 %v1510, %v1631
      %1633 = vmatmul.f32.gmra.mxu0 %v1390
      %v1634 = vpop.f32.mrf.mxu0
      %v1635 = vadd.f32 %v1513, %v1634
      %1636 = vmatmul.f32.gmra.mxu0 %v1393
      %v1637 = vpop.f32.mrf.mxu0
      %v1638 = vadd.f32 %v1516, %v1637
      %1639 = vmatmul.f32.gmra.mxu0 %v1396
      %v1640 = vpop.f32.mrf.mxu0
      %v1641 = vadd.f32 %v1519, %v1640
      %1642 = vmatmul.f32.gmra.mxu0 %v1399
      %v1643 = vpop.f32.mrf.mxu0
      %v1644 = vadd.f32 %v1522, %v1643
      %1645 = vmatmul.f32.gmra.mxu0 %v1402
      %v1646 = vpop.f32.mrf.mxu0
      %v1647 = vadd.f32 %v1525, %v1646
      %1648 = vmatmul.f32.gmra.mxu0 %v1405
      %v1649 = vpop.f32.mrf.mxu0
      %v1650 = vadd.f32 %v1528, %v1649
      %1651 = vmatmul.f32.gmra.mxu0 %v1408
      %v1652 = vpop.f32.mrf.mxu0
      %v1653 = vadd.f32 %v1531, %v1652
      %1654 = vmatmul.f32.gmra.mxu0 %v1411
      %v1655 = vpop.f32.mrf.mxu0
      %v1656 = vadd.f32 %v1534, %v1655
      %1657 = vmatmul.f32.gmra.mxu0 %v1414
      %v1658 = vpop.f32.mrf.mxu0
      %v1659 = vadd.f32 %v1537, %v1658
      %1660 = vmatmul.f32.gmra.mxu0 %v1417
      %v1661 = vpop.f32.mrf.mxu0
      %v1662 = vadd.f32 %v1540, %v1661
      %1663 = vmatmul.f32.gmra.mxu0 %v1420
      %v1664 = vpop.f32.mrf.mxu0
      %v1665 = vadd.f32 %v1543, %v1664
      %1666 = vmatmul.f32.gmra.mxu0 %v1423
      %v1667 = vpop.f32.mrf.mxu0
      %v1668 = vadd.f32 %v1546, %v1667
      %1669 = vmatmul.f32.gmra.mxu0 %v1426
      %v1670 = vpop.f32.mrf.mxu0
      %v1671 = vadd.f32 %v1549, %v1670
      %1672 = vmatmul.f32.gmra.mxu0 %v1429
      %v1673 = vpop.f32.mrf.mxu0
      %v1674 = vadd.f32 %v1552, %v1673
      %1675 = vmatmul.f32.gmra.mxu0 %v1432
      %v1676 = vpop.f32.mrf.mxu0
      %v1677 = vadd.f32 %v1555, %v1676
      %1678 = vmatmul.f32.gmra.mxu0 %v1435
      %v1679 = vpop.f32.mrf.mxu0
      %v1680 = vadd.f32 %v1558, %v1679
      %1681 = vmatmul.f32.gmra.mxu0 %v1438
      %v1682 = vpop.f32.mrf.mxu0
      %v1683 = vadd.f32 %v1561, %v1682
      %1684 = vmatmul.f32.gmra.mxu0 %v1441
      %v1685 = vpop.f32.mrf.mxu0
      %v1686 = vadd.f32 %v1564, %v1685
      %1687 = vmatmul.f32.gmra.mxu0 %v1444
      %v1688 = vpop.f32.mrf.mxu0
      %v1689 = vadd.f32 %v1567, %v1688
      %1690 = vmatmul.f32.gmra.mxu0 %v1447
      %v1691 = vpop.f32.mrf.mxu0
      %v1692 = vadd.f32 %v1570, %v1691
      %1693 = vmatmul.f32.gmra.mxu0 %v1450
      %v1694 = vpop.f32.mrf.mxu0
      %v1695 = vadd.f32 %v1573, %v1694
      %1696 = vmatmul.f32.gmra.mxu0 %v1453
      %v1697 = vpop.f32.mrf.mxu0
      %v1698 = vadd.f32 %v1576, %v1697
      %1699 = vmatmul.f32.gmra.mxu0 %v1456
      %v1700 = vpop.f32.mrf.mxu0
      %v1701 = vadd.f32 %v1579, %v1700
      %1702 = vmatmul.f32.gmra.mxu0 %v1459
      %v1703 = vpop.f32.mrf.mxu0
      %v1704 = vadd.f32 %v1582, %v1703
      %1705 = vmatmul.f32.gmra.mxu0 %v1462
      %v1706 = vpop.f32.mrf.mxu0
      %v1707 = vadd.f32 %v1585, %v1706
      %1708 = vmatmul.f32.gmra.mxu0 %v1465
      %v1709 = vpop.f32.mrf.mxu0
      %v1710 = vadd.f32 %v1588, %v1709
      %1711 = vmatmul.f32.gmra.mxu0 %v1468
      %v1712 = vpop.f32.mrf.mxu0
      %v1713 = vadd.f32 %v1591, %v1712
      %1714 = vmatmul.f32.gmra.mxu0 %v1471
      %v1715 = vpop.f32.mrf.mxu0
      %v1716 = vadd.f32 %v1594, %v1715
      %1717 = vmatmul.f32.gmra.mxu0 %v1474
      %v1718 = vpop.f32.mrf.mxu0
      %v1719 = vadd.f32 %v1597, %v1718
      %1720 = vmatmul.f32.gmra.mxu0 %v1477
      %v1721 = vpop.f32.mrf.mxu0
      %v1722 = vadd.f32 %v1600, %v1721
      %1723 = vdwg.mxu0
      %v1727 = vrot.slane %v883, 1
      %v1728 = vrot.slane %v884, 1
      %v1729 = vsel %vm934, %v1727, %v1728
      %v1730 = vrot.slane %v885, 1
      %v1731 = vsel %vm934, %v1728, %v1730
      %1732 = vrot.lane.b32.xlu0 %v1729, 4
      %v1733 = vpop.permute.xlu0 %1732
      %1734 = vrot.lane.b32.xlu0 %v1731, 4
      %v1735 = vpop.permute.xlu0 %1734
      %v1738 = vrot.slane %v883, 2
      %v1739 = vrot.slane %v884, 2
      %v1740 = vsel %vm1111, %v1738, %v1739
      %v1741 = vrot.slane %v885, 2
      %v1742 = vsel %vm1111, %v1739, %v1741
      %1743 = vrot.lane.b32.xlu0 %v1740, 8
      %v1744 = vpop.permute.xlu0 %1743
      %1745 = vrot.lane.b32.xlu0 %v1742, 8
      %v1746 = vpop.permute.xlu0 %1745
      %v1749 = vsel %vm1288, %v883, %v1733
      %v1750 = vsel %vm1288, %v884, %v1735
      %v1751 = vsel %vm1321, %v1749, %v1744
      %v1752 = vsel %vm1321, %v1750, %v1746
      %s1753 = scalar_lea.vmem %s4, 32
      %v1754 = vld [vmem:[%s1753] sm:$0xff]
      %v1755 = vld [vmem:[%s1753 + $0x8] sm:$0xf]
      %v1757 = vsel %vm1388, %v1751, 0
      %v1760 = vsel %vm1388, %v1752, 0
      %v1763 = vsel %vm1485, %v1755, 0
      %1765 = vmatpush.msra.mxu0 0.0
      %1766 = vmatpush.msra.mxu0 0.0
      %1767 = vmatpush.msra.mxu0 0.0
      %1768 = vmatpush.msra.mxu0 0.0
      %1769 = vmatpush.msra.mxu0 0.0
      %1770 = vmatpush.msra.mxu0 0.0
      %1771 = vmatpush.msra.mxu0 0.0
      %1772 = vmatpush.msra.mxu0 0.0
      %1773 = vmatpush.msra.mxu0 0.0
      %1774 = vmatpush.msra.mxu0 0.0
      %1775 = vmatpush.msra.mxu0 0.0
      %1776 = vmatpush.msra.mxu0 0.0
      %1777 = vmatpush.msra.mxu0 0.0
      %1778 = vmatpush.msra.mxu0 0.0
      %1779 = vmatpush.msra.mxu0 %v1763
      %1780 = vmatpush.msra.mxu0 %v1754
      %1781 = vmatmul.f32.gmra.mxu0 %v1396
      %v1782 = vpop.f32.mrf.mxu0
      %v1783 = vadd.f32 0.0, %v1782
      %1784 = vmatmul.f32.gmra.mxu0 %v1399
      %v1785 = vpop.f32.mrf.mxu0
      %v1786 = vadd.f32 0.0, %v1785
      %1787 = vmatmul.f32.gmra.mxu0 %v1402
      %v1788 = vpop.f32.mrf.mxu0
      %v1789 = vadd.f32 0.0, %v1788
      %1790 = vmatmul.f32.gmra.mxu0 %v1405
      %v1791 = vpop.f32.mrf.mxu0
      %v1792 = vadd.f32 0.0, %v1791
      %1793 = vmatmul.f32.gmra.mxu0 %v1408
      %v1794 = vpop.f32.mrf.mxu0
      %v1795 = vadd.f32 0.0, %v1794
      %1796 = vmatmul.f32.gmra.mxu0 %v1411
      %v1797 = vpop.f32.mrf.mxu0
      %v1798 = vadd.f32 0.0, %v1797
      %1799 = vmatmul.f32.gmra.mxu0 %v1414
      %v1800 = vpop.f32.mrf.mxu0
      %v1801 = vadd.f32 0.0, %v1800
      %1802 = vmatmul.f32.gmra.mxu0 %v1417
      %v1803 = vpop.f32.mrf.mxu0
      %v1804 = vadd.f32 0.0, %v1803
      %1805 = vmatmul.f32.gmra.mxu0 %v1420
      %v1806 = vpop.f32.mrf.mxu0
      %v1807 = vadd.f32 0.0, %v1806
      %1808 = vmatmul.f32.gmra.mxu0 %v1423
      %v1809 = vpop.f32.mrf.mxu0
      %v1810 = vadd.f32 0.0, %v1809
      %1811 = vmatmul.f32.gmra.mxu0 %v1426
      %v1812 = vpop.f32.mrf.mxu0
      %v1813 = vadd.f32 0.0, %v1812
      %1814 = vmatmul.f32.gmra.mxu0 %v1429
      %v1815 = vpop.f32.mrf.mxu0
      %v1816 = vadd.f32 0.0, %v1815
      %1817 = vmatmul.f32.gmra.mxu0 %v1432
      %v1818 = vpop.f32.mrf.mxu0
      %v1819 = vadd.f32 0.0, %v1818
      %1820 = vmatmul.f32.gmra.mxu0 %v1435
      %v1821 = vpop.f32.mrf.mxu0
      %v1822 = vadd.f32 0.0, %v1821
      %1823 = vmatmul.f32.gmra.mxu0 %v1438
      %v1824 = vpop.f32.mrf.mxu0
      %v1825 = vadd.f32 0.0, %v1824
      %1826 = vmatmul.f32.gmra.mxu0 %v1441
      %v1827 = vpop.f32.mrf.mxu0
      %v1828 = vadd.f32 0.0, %v1827
      %1829 = vmatmul.f32.gmra.mxu0 %v1444
      %v1830 = vpop.f32.mrf.mxu0
      %v1831 = vadd.f32 0.0, %v1830
      %1832 = vmatmul.f32.gmra.mxu0 %v1447
      %v1833 = vpop.f32.mrf.mxu0
      %v1834 = vadd.f32 0.0, %v1833
      %1835 = vmatmul.f32.gmra.mxu0 %v1450
      %v1836 = vpop.f32.mrf.mxu0
      %v1837 = vadd.f32 0.0, %v1836
      %1838 = vmatmul.f32.gmra.mxu0 %v1453
      %v1839 = vpop.f32.mrf.mxu0
      %v1840 = vadd.f32 0.0, %v1839
      %1841 = vmatmul.f32.gmra.mxu0 %v1456
      %v1842 = vpop.f32.mrf.mxu0
      %v1843 = vadd.f32 0.0, %v1842
      %1844 = vmatmul.f32.gmra.mxu0 %v1459
      %v1845 = vpop.f32.mrf.mxu0
      %v1846 = vadd.f32 0.0, %v1845
      %1847 = vmatmul.f32.gmra.mxu0 %v1462
      %v1848 = vpop.f32.mrf.mxu0
      %v1849 = vadd.f32 0.0, %v1848
      %1850 = vmatmul.f32.gmra.mxu0 %v1465
      %v1851 = vpop.f32.mrf.mxu0
      %v1852 = vadd.f32 0.0, %v1851
      %1853 = vmatmul.f32.gmra.mxu0 %v1468
      %v1854 = vpop.f32.mrf.mxu0
      %v1855 = vadd.f32 0.0, %v1854
      %1856 = vmatmul.f32.gmra.mxu0 %v1471
      %v1857 = vpop.f32.mrf.mxu0
      %v1858 = vadd.f32 0.0, %v1857
      %1859 = vmatmul.f32.gmra.mxu0 %v1474
      %v1860 = vpop.f32.mrf.mxu0
      %v1861 = vadd.f32 0.0, %v1860
      %1862 = vmatmul.f32.gmra.mxu0 %v1477
      %v1863 = vpop.f32.mrf.mxu0
      %v1864 = vadd.f32 0.0, %v1863
      %1865 = vmatmul.f32.gmra.mxu0 %v1480
      %v1866 = vpop.f32.mrf.mxu0
      %v1867 = vadd.f32 0.0, %v1866
      %1868 = vmatmul.f32.gmra.mxu0 %v1483
      %v1869 = vpop.f32.mrf.mxu0
      %v1870 = vadd.f32 0.0, %v1869
      %1871 = vmatmul.f32.gmra.mxu0 %v1757
      %v1872 = vpop.f32.mrf.mxu0
      %v1873 = vadd.f32 0.0, %v1872
      %1874 = vmatmul.f32.gmra.mxu0 %v1760
      %v1875 = vpop.f32.mrf.mxu0
      %v1876 = vadd.f32 0.0, %v1875
      %1877 = vdwg.mxu0
      %v1878 = vadd.f32 %v1629, %v1783
      %v1879 = vadd.f32 %v1632, %v1786
      %v1880 = vadd.f32 %v1635, %v1789
      %v1881 = vadd.f32 %v1638, %v1792
      %v1882 = vadd.f32 %v1641, %v1795
      %v1883 = vadd.f32 %v1644, %v1798
      %v1884 = vadd.f32 %v1647, %v1801
      %v1885 = vadd.f32 %v1650, %v1804
      %v1886 = vadd.f32 %v1653, %v1807
      %v1887 = vadd.f32 %v1656, %v1810
      %v1888 = vadd.f32 %v1659, %v1813
      %v1889 = vadd.f32 %v1662, %v1816
      %v1890 = vadd.f32 %v1665, %v1819
      %v1891 = vadd.f32 %v1668, %v1822
      %v1892 = vadd.f32 %v1671, %v1825
      %v1893 = vadd.f32 %v1674, %v1828
      %v1894 = vadd.f32 %v1677, %v1831
      %v1895 = vadd.f32 %v1680, %v1834
      %v1896 = vadd.f32 %v1683, %v1837
      %v1897 = vadd.f32 %v1686, %v1840
      %v1898 = vadd.f32 %v1689, %v1843
      %v1899 = vadd.f32 %v1692, %v1846
      %v1900 = vadd.f32 %v1695, %v1849
      %v1901 = vadd.f32 %v1698, %v1852
      %v1902 = vadd.f32 %v1701, %v1855
      %v1903 = vadd.f32 %v1704, %v1858
      %v1904 = vadd.f32 %v1707, %v1861
      %v1905 = vadd.f32 %v1710, %v1864
      %v1906 = vadd.f32 %v1713, %v1867
      %v1907 = vadd.f32 %v1716, %v1870
      %v1908 = vadd.f32 %v1719, %v1873
      %v1909 = vadd.f32 %v1722, %v1876
      %v1910 = vld [vmem:[%s5] sm:$0x1]
      %v1912 = vperm.slane %v1910, 0
      %v1914 = vadd.f32 %v1878, %v1912
      %v1915 = vadd.f32 %v1879, %v1912
      %v1916 = vadd.f32 %v1880, %v1912
      %v1917 = vadd.f32 %v1881, %v1912
      %v1918 = vadd.f32 %v1882, %v1912
      %v1919 = vadd.f32 %v1883, %v1912
      %v1920 = vadd.f32 %v1884, %v1912
      %v1921 = vadd.f32 %v1885, %v1912
      %v1922 = vadd.f32 %v1886, %v1912
      %v1923 = vadd.f32 %v1887, %v1912
      %v1924 = vadd.f32 %v1888, %v1912
      %v1925 = vadd.f32 %v1889, %v1912
      %v1926 = vadd.f32 %v1890, %v1912
      %v1927 = vadd.f32 %v1891, %v1912
      %v1928 = vadd.f32 %v1892, %v1912
      %v1929 = vadd.f32 %v1893, %v1912
      %v1930 = vadd.f32 %v1894, %v1912
      %v1931 = vadd.f32 %v1895, %v1912
      %v1932 = vadd.f32 %v1896, %v1912
      %v1933 = vadd.f32 %v1897, %v1912
      %v1934 = vadd.f32 %v1898, %v1912
      %v1935 = vadd.f32 %v1899, %v1912
      %v1936 = vadd.f32 %v1900, %v1912
      %v1937 = vadd.f32 %v1901, %v1912
      %v1938 = vadd.f32 %v1902, %v1912
      %v1939 = vadd.f32 %v1903, %v1912
      %v1940 = vadd.f32 %v1904, %v1912
      %v1941 = vadd.f32 %v1905, %v1912
      %v1942 = vadd.f32 %v1906, %v1912
      %v1943 = vadd.f32 %v1907, %v1912
      %v1944 = vadd.f32 %v1908, %v1912
      %v1945 = vadd.f32 %v1909, %v1912
      %1946 = vst.msk [vmem:[%s409] sm:$0xff] %vm1288, %v1914
      %1947 = vst.msk [vmem:[%s409 + $0x8] sm:$0xff] %vm1288, %v1915
      %1948 = vst.msk [vmem:[%s409 + $0x10] sm:$0xff] %vm1288, %v1916
      %1949 = vst.msk [vmem:[%s409 + $0x18] sm:$0xff] %vm1288, %v1917
      %1950 = vst.msk [vmem:[%s409 + $0x20] sm:$0xff] %vm1288, %v1918
      %1951 = vst.msk [vmem:[%s409 + $0x28] sm:$0xff] %vm1288, %v1919
      %1952 = vst.msk [vmem:[%s409 + $0x30] sm:$0xff] %vm1288, %v1920
      %1953 = vst.msk [vmem:[%s409 + $0x38] sm:$0xff] %vm1288, %v1921
      %1954 = vst.msk [vmem:[%s409 + $0x40] sm:$0xff] %vm1288, %v1922
      %1955 = vst.msk [vmem:[%s409 + $0x48] sm:$0xff] %vm1288, %v1923
      %1956 = vst.msk [vmem:[%s409 + $0x50] sm:$0xff] %vm1288, %v1924
      %1957 = vst.msk [vmem:[%s409 + $0x58] sm:$0xff] %vm1288, %v1925
      %1958 = vst.msk [vmem:[%s409 + $0x60] sm:$0xff] %vm1288, %v1926
      %1959 = vst.msk [vmem:[%s409 + $0x68] sm:$0xff] %vm1288, %v1927
      %1960 = vst.msk [vmem:[%s409 + $0x70] sm:$0xff] %vm1288, %v1928
      %1961 = vst.msk [vmem:[%s409 + $0x78] sm:$0xff] %vm1288, %v1929
      %1962 = vst.msk [vmem:[%s409 + $0x80] sm:$0xff] %vm1288, %v1930
      %1963 = vst.msk [vmem:[%s409 + $0x88] sm:$0xff] %vm1288, %v1931
      %1964 = vst.msk [vmem:[%s409 + $0x90] sm:$0xff] %vm1288, %v1932
      %1965 = vst.msk [vmem:[%s409 + $0x98] sm:$0xff] %vm1288, %v1933
      %1966 = vst.msk [vmem:[%s409 + $0xa0] sm:$0xff] %vm1288, %v1934
      %1967 = vst.msk [vmem:[%s409 + $0xa8] sm:$0xff] %vm1288, %v1935
      %1968 = vst.msk [vmem:[%s409 + $0xb0] sm:$0xff] %vm1288, %v1936
      %1969 = vst.msk [vmem:[%s409 + $0xb8] sm:$0xff] %vm1288, %v1937
      %1970 = vst.msk [vmem:[%s409 + $0xc0] sm:$0xff] %vm1288, %v1938
      %1971 = vst.msk [vmem:[%s409 + $0xc8] sm:$0xff] %vm1288, %v1939
      %1972 = vst.msk [vmem:[%s409 + $0xd0] sm:$0xff] %vm1288, %v1940
      %1973 = vst.msk [vmem:[%s409 + $0xd8] sm:$0xff] %vm1288, %v1941
      %1974 = vst.msk [vmem:[%s409 + $0xe0] sm:$0xff] %vm1288, %v1942
      %1975 = vst.msk [vmem:[%s409 + $0xe8] sm:$0xff] %vm1288, %v1943
      %1976 = vst.msk [vmem:[%s409 + $0xf0] sm:$0xff] %vm1288, %v1944
      %1977 = vst.msk [vmem:[%s409 + $0xf8] sm:$0xff] %vm1288, %v1945
      %v1978 = vsel %vm1288, %v1914, 0.0
      %v1979 = vsel %vm1288, %v1915, 0.0
      %v1980 = vadd.f32 %v1978, %v1979
      %v1981 = vsel %vm1288, %v1916, 0.0
      %v1982 = vadd.f32 %v1980, %v1981
      %v1983 = vsel %vm1288, %v1917, 0.0
      %v1984 = vadd.f32 %v1982, %v1983
      %v1985 = vsel %vm1288, %v1918, 0.0
      %v1986 = vadd.f32 %v1984, %v1985
      %v1987 = vsel %vm1288, %v1919, 0.0
      %v1988 = vadd.f32 %v1986, %v1987
      %v1989 = vsel %vm1288, %v1920, 0.0
      %v1990 = vadd.f32 %v1988, %v1989
      %v1991 = vsel %vm1288, %v1921, 0.0
      %v1992 = vadd.f32 %v1990, %v1991
      %v1993 = vsel %vm1288, %v1922, 0.0
      %v1994 = vadd.f32 %v1992, %v1993
      %v1995 = vsel %vm1288, %v1923, 0.0
      %v1996 = vadd.f32 %v1994, %v1995
      %v1997 = vsel %vm1288, %v1924, 0.0
      %v1998 = vadd.f32 %v1996, %v1997
      %v1999 = vsel %vm1288, %v1925, 0.0
      %v2000 = vadd.f32 %v1998, %v1999
      %v2001 = vsel %vm1288, %v1926, 0.0
      %v2002 = vadd.f32 %v2000, %v2001
      %v2003 = vsel %vm1288, %v1927, 0.0
      %v2004 = vadd.f32 %v2002, %v2003
      %v2005 = vsel %vm1288, %v1928, 0.0
      %v2006 = vadd.f32 %v2004, %v2005
      %v2007 = vsel %vm1288, %v1929, 0.0
      %v2008 = vadd.f32 %v2006, %v2007
      %v2009 = vsel %vm1288, %v1930, 0.0
      %v2010 = vadd.f32 %v2008, %v2009
      %v2011 = vsel %vm1288, %v1931, 0.0
      %v2012 = vadd.f32 %v2010, %v2011
      %v2013 = vsel %vm1288, %v1932, 0.0
      %v2014 = vadd.f32 %v2012, %v2013
      %v2015 = vsel %vm1288, %v1933, 0.0
      %v2016 = vadd.f32 %v2014, %v2015
      %v2017 = vsel %vm1288, %v1934, 0.0
      %v2018 = vadd.f32 %v2016, %v2017
      %v2019 = vsel %vm1288, %v1935, 0.0
      %v2020 = vadd.f32 %v2018, %v2019
      %v2021 = vsel %vm1288, %v1936, 0.0
      %v2022 = vadd.f32 %v2020, %v2021
      %v2023 = vsel %vm1288, %v1937, 0.0
      %v2024 = vadd.f32 %v2022, %v2023
      %v2025 = vsel %vm1288, %v1938, 0.0
      %v2026 = vadd.f32 %v2024, %v2025
      %v2027 = vsel %vm1288, %v1939, 0.0
      %v2028 = vadd.f32 %v2026, %v2027
      %v2029 = vsel %vm1288, %v1940, 0.0
      %v2030 = vadd.f32 %v2028, %v2029
      %v2031 = vsel %vm1288, %v1941, 0.0
      %v2032 = vadd.f32 %v2030, %v2031
      %v2033 = vsel %vm1288, %v1942, 0.0
      %v2034 = vadd.f32 %v2032, %v2033
      %v2035 = vsel %vm1288, %v1943, 0.0
      %v2036 = vadd.f32 %v2034, %v2035
      %v2037 = vsel %vm1288, %v1944, 0.0
      %v2038 = vadd.f32 %v2036, %v2037
      %v2039 = vsel %vm1288, %v1945, 0.0
      %v2040 = vadd.f32 %v2038, %v2039
      %v2041 = vrot.slane %v2040, 4
      %v2042 = vadd.f32 %v2040, %v2041
      %v2043 = vrot.slane %v2042, 2
      %v2044 = vadd.f32 %v2042, %v2043
      %v2045 = vrot.slane %v2044, 1
      %v2046 = vadd.f32 %v2044, %v2045
      %v2047 = vmul.f32 %v1914, %v1914
      %v2048 = vmul.f32 %v1915, %v1915
      %v2049 = vmul.f32 %v1916, %v1916
      %v2050 = vmul.f32 %v1917, %v1917
      %v2051 = vmul.f32 %v1918, %v1918
      %v2052 = vmul.f32 %v1919, %v1919
      %v2053 = vmul.f32 %v1920, %v1920
      %v2054 = vmul.f32 %v1921, %v1921
      %v2055 = vmul.f32 %v1922, %v1922
      %v2056 = vmul.f32 %v1923, %v1923
      %v2057 = vmul.f32 %v1924, %v1924
      %v2058 = vmul.f32 %v1925, %v1925
      %v2059 = vmul.f32 %v1926, %v1926
      %v2060 = vmul.f32 %v1927, %v1927
      %v2061 = vmul.f32 %v1928, %v1928
      %v2062 = vmul.f32 %v1929, %v1929
      %v2063 = vmul.f32 %v1930, %v1930
      %v2064 = vmul.f32 %v1931, %v1931
      %v2065 = vmul.f32 %v1932, %v1932
      %v2066 = vmul.f32 %v1933, %v1933
      %v2067 = vmul.f32 %v1934, %v1934
      %v2068 = vmul.f32 %v1935, %v1935
      %v2069 = vmul.f32 %v1936, %v1936
      %v2070 = vmul.f32 %v1937, %v1937
      %v2071 = vmul.f32 %v1938, %v1938
      %v2072 = vmul.f32 %v1939, %v1939
      %v2073 = vmul.f32 %v1940, %v1940
      %v2074 = vmul.f32 %v1941, %v1941
      %v2075 = vmul.f32 %v1942, %v1942
      %v2076 = vmul.f32 %v1943, %v1943
      %v2077 = vmul.f32 %v1944, %v1944
      %v2078 = vmul.f32 %v1945, %v1945
      %v2079 = vsel %vm1288, %v2047, 0.0
      %v2080 = vsel %vm1288, %v2048, 0.0
      %v2081 = vadd.f32 %v2079, %v2080
      %v2082 = vsel %vm1288, %v2049, 0.0
      %v2083 = vadd.f32 %v2081, %v2082
      %v2084 = vsel %vm1288, %v2050, 0.0
      %v2085 = vadd.f32 %v2083, %v2084
      %v2086 = vsel %vm1288, %v2051, 0.0
      %v2087 = vadd.f32 %v2085, %v2086
      %v2088 = vsel %vm1288, %v2052, 0.0
      %v2089 = vadd.f32 %v2087, %v2088
      %v2090 = vsel %vm1288, %v2053, 0.0
      %v2091 = vadd.f32 %v2089, %v2090
      %v2092 = vsel %vm1288, %v2054, 0.0
      %v2093 = vadd.f32 %v2091, %v2092
      %v2094 = vsel %vm1288, %v2055, 0.0
      %v2095 = vadd.f32 %v2093, %v2094
      %v2096 = vsel %vm1288, %v2056, 0.0
      %v2097 = vadd.f32 %v2095, %v2096
      %v2098 = vsel %vm1288, %v2057, 0.0
      %v2099 = vadd.f32 %v2097, %v2098
      %v2100 = vsel %vm1288, %v2058, 0.0
      %v2101 = vadd.f32 %v2099, %v2100
      %v2102 = vsel %vm1288, %v2059, 0.0
      %v2103 = vadd.f32 %v2101, %v2102
      %v2104 = vsel %vm1288, %v2060, 0.0
      %v2105 = vadd.f32 %v2103, %v2104
      %v2106 = vsel %vm1288, %v2061, 0.0
      %v2107 = vadd.f32 %v2105, %v2106
      %v2108 = vsel %vm1288, %v2062, 0.0
      %v2109 = vadd.f32 %v2107, %v2108
      %v2110 = vsel %vm1288, %v2063, 0.0
      %v2111 = vadd.f32 %v2109, %v2110
      %v2112 = vsel %vm1288, %v2064, 0.0
      %v2113 = vadd.f32 %v2111, %v2112
      %v2114 = vsel %vm1288, %v2065, 0.0
      %v2115 = vadd.f32 %v2113, %v2114
      %v2116 = vsel %vm1288, %v2066, 0.0
      %v2117 = vadd.f32 %v2115, %v2116
      %v2118 = vsel %vm1288, %v2067, 0.0
      %v2119 = vadd.f32 %v2117, %v2118
      %v2120 = vsel %vm1288, %v2068, 0.0
      %v2121 = vadd.f32 %v2119, %v2120
      %v2122 = vsel %vm1288, %v2069, 0.0
      %v2123 = vadd.f32 %v2121, %v2122
      %v2124 = vsel %vm1288, %v2070, 0.0
      %v2125 = vadd.f32 %v2123, %v2124
      %v2126 = vsel %vm1288, %v2071, 0.0
      %v2127 = vadd.f32 %v2125, %v2126
      %v2128 = vsel %vm1288, %v2072, 0.0
      %v2129 = vadd.f32 %v2127, %v2128
      %v2130 = vsel %vm1288, %v2073, 0.0
      %v2131 = vadd.f32 %v2129, %v2130
      %v2132 = vsel %vm1288, %v2074, 0.0
      %v2133 = vadd.f32 %v2131, %v2132
      %v2134 = vsel %vm1288, %v2075, 0.0
      %v2135 = vadd.f32 %v2133, %v2134
      %v2136 = vsel %vm1288, %v2076, 0.0
      %v2137 = vadd.f32 %v2135, %v2136
      %v2138 = vsel %vm1288, %v2077, 0.0
      %v2139 = vadd.f32 %v2137, %v2138
      %v2140 = vsel %vm1288, %v2078, 0.0
      %v2141 = vadd.f32 %v2139, %v2140
      %v2142 = vrot.slane %v2141, 4
      %v2143 = vadd.f32 %v2141, %v2142
      %v2144 = vrot.slane %v2143, 2
      %v2145 = vadd.f32 %v2143, %v2144
      %v2146 = vrot.slane %v2145, 1
      %v2147 = vadd.f32 %v2145, %v2146
      %vm2148 = vcmask 1040384
      %v2149 = vsel %vm2148, %v2046, %v2147
      %vm2150 = vcmask 25600
      %2151 = vst.msk [vmem:[%s415] sm:$0x3] %vm2150, %v2149
      %s2152 = smul.u32 16, %s24
      %p2153 = scmp.lt.s32.totalorder %s23, 1
      %s2154 = scalar_select %p2153, %s23, 1
      %p2155 = scmp.lt.s32.totalorder %s2152, 15
      %s2156 = scalar_select %p2155, %s2152, 15
      %s2157 = smul.addr %s2156, 2
      %s2158 = smul.addr %s2154, 32
      %s2159 = sadd.s32 %s2157, %s2158
      %s2160 = smul.addr %s2159, 8
      %s2161 = scalar_lea.vmem %s6, %s2160
      %s2162 = sadd.s32 %s23, %s24
      %p2163 = scmp.lt.s32.totalorder %s2162, 1
      %s2164 = scalar_select %p2163, %s2162, 1
      %s2165 = smul.addr %s2164, 2
      %s2166 = scalar_lea.vmem %s7, %s2165
      // Predicated region
      $region45: #{up_forward.6} parent=43 // pred_check
        %p2167 = pneg %p195
      $region46: #{up_forward.6} parent=43 // pred_check_branch
        %2169 = sbr.rel (%p2167) target = $region48
      $region47: #{up_forward.6} parent=43 // pred_region
        %s2170 = smul.u32 16, %s24
      $region48: #{up_forward.6} parent=43 // pred_fallthru
        _
      // Predicated region
      $region49: #{up_forward.6} parent=43 // pred_check
        %p2171 = pneg %p223
      $region50: #{up_forward.6} parent=43 // pred_check_branch
        %2173 = sbr.rel (%p2171) target = $region52
      $region51: #{up_forward.6} parent=43 // pred_region
        %s2174 = sadd.s32 %s23, %s24
      $region52: #{up_forward.6} parent=43 // pred_fallthru
        _
    $region44: #{up_forward.6} parent=5 // pred_fallthru
      _
    %p2175 = scmp.le.s32.totalorder 2, %s14
    // Predicated region
    $region53: #{up_forward.6} parent=5 // pred_check
      %p2176 = pneg %p2175
    $region54: #{up_forward.6} parent=5 // pred_check_branch
      %2178 = sbr.rel (%p2176) target = $region56
    $region55: #{up_forward.6} parent=5 // pred_region
      %s2179 = ssub.s32 %s14, 2
      // Predicated region
      $region57: #{up_forward.6} parent=55 // pred_check
        %p2180 = pneg %p201
      $region58: #{up_forward.6} parent=55 // pred_check_branch
        %2182 = sbr.rel (%p2180) target = $region60
      $region59: #{up_forward.6} parent=55 // pred_region
        %s2183 = smul.u32 16, %s26
        %p2184 = scmp.lt.s32.totalorder %s25, 1
        %s2185 = scalar_select %p2184, %s25, 1
        %p2186 = scmp.lt.s32.totalorder %s2183, 15
        %s2187 = scalar_select %p2186, %s2183, 15
        %s2188 = smul.addr %s2187, 2
        %s2189 = smul.addr %s2185, 32
        %s2190 = sadd.s32 %s2188, %s2189
        %s2191 = smul.addr %s2190, 8
        %s2192 = scalar_lea.vmem %s6, %s2191
      $region60: #{up_forward.6} parent=55 // pred_fallthru
        _
      // Predicated region
      $region61: #{up_forward.6} parent=55 // pred_check
        %p2193 = pneg %p229
      $region62: #{up_forward.6} parent=55 // pred_check_branch
        %2195 = sbr.rel (%p2193) target = $region64
      $region63: #{up_forward.6} parent=55 // pred_region
        %s2196 = sadd.s32 %s25, %s26
        %p2197 = scmp.lt.s32.totalorder %s2196, 1
        %s2198 = scalar_select %p2197, %s2196, 1
        %s2199 = smul.addr %s2198, 2
        %s2200 = scalar_lea.vmem %s7, %s2199
      $region64: #{up_forward.6} parent=55 // pred_fallthru
        _
    $region56: #{up_forward.6} parent=5 // pred_fallthru
      _
  $region6: #{up_forward.6} parent=0 // loop_footer
    %s18 = sadd.s32 1, %s14
  $region7: #{up_forward.6} parent=0 // loop_footer_branch
    %13 = sbr.rel target = $region3
  $region8: #{up_forward.6} parent=0 // loop_exit
    _

// kernel: up_forward.5
$region0: #{up_forward.5}
  #allocation0 [shape = 'u32[]', space=smem, size = 0x4, offset = 0x4, fixed_abs, tag = 'smem constant byte address 0x4 - core index']
  #allocation1 [shape = 'u32[72,128]{1,0:T(1,128)}', space=vmem, size = 0x9000, scoped, tag = 'internal scratch']
  %s0 = inlined_call_operand.vmem [shape: f32[2,18,18,2], index: 0, kind: input, shape index: {}, may-alias: {0,1}]
  %s1 = inlined_call_operand.vmem [shape: f32[2,18,18,2], index: 1, kind: input, shape index: {}, may-alias: {0,1}]
  %s2 = inlined_call_operand.vmem [shape: f32[2,18,18,2], index: 2, kind: input, shape index: {}, may-alias: {2,3}]
  %s3 = inlined_call_operand.vmem [shape: f32[2,18,18,2], index: 3, kind: input, shape index: {}, may-alias: {2,3}]
  %s4 = inlined_call_operand.vmem [shape: f32[3,6,4], index: 4, kind: input, shape index: {}]
  %s5 = inlined_call_operand.vmem [shape: f32[3,6,4], index: 5, kind: input, shape index: {}]
  %s6 = inlined_call_operand.vmem [shape: f32[1,4], index: 6, kind: input, shape index: {}]
  %s7 = inlined_call_operand.vmem [shape: f32[2,16,16,4], index: 7, kind: output, shape index: {0}]
  %s8 = inlined_call_operand.vmem [shape: f32[2,2,4], index: 8, kind: output, shape index: {1}]
  %9 = xla_tuple %s7, %s8
  %s10 = sld [smem:[#allocation0]]
  $region69: #{up_forward.5} parent=0
    _
  %s12 = ssub.s32 1, %s10
  %s13 = scalar_select 0, %s12, %s10
  loop: start=0, step=1, limit=4
  $region2: #{up_forward.5} parent=0 // loop_pre_header
    _
  $region3: #{up_forward.5} parent=0 // loop_header
    %s15 = sphi 0, %s19
    %p16 = scmp.ge.s32.totalorder %s15, 4
    %s22 = sphi 0, %s34
    %s23 = sphi 0, %s30
    %s24 = sphi 0, %s22
    %s25 = sphi 0, %s23
    %s26 = sphi 0, %s24
    %s27 = sphi 0, %s25
    %s39 = sphi 0, %s41
    %s42 = sphi 0, %s39
    %s43 = sphi 0, %s42
    %s59 = sphi 0, %s43
    %s71 = sphi 0, %s73
    %s74 = sphi 0, %s71
    %s75 = sphi 0, %s74
    %s91 = sphi 0, %s75
    %s99 = sphi 0, %s101
    %s102 = sphi 0, %s99
    %s103 = sphi 0, %s102
    %s119 = sphi 0, %s103
    %s131 = sphi 0, %s133
    %s134 = sphi 0, %s131
    %s135 = sphi 0, %s134
    %s151 = sphi 0, %s135
    %s155 = sphi 0, %s155
    %s157 = sphi 0, %s155
    %s158 = sphi 0, %s157
    %s172 = sphi 0, %s158
    %s176 = sphi 0, %s176
    %s178 = sphi 0, %s176
    %s179 = sphi 0, %s178
    %s193 = sphi 0, %s179
    %s197 = sphi 0, %s197
    %s199 = sphi 0, %s197
    %s200 = sphi 0, %s199
    %s214 = sphi 0, %s200
    %s222 = sphi 0, %s224
    %s225 = sphi 0, %s222
    %s226 = sphi 0, %s225
    %s242 = sphi 0, %s226
    %s250 = sphi 0, %s252
    %s253 = sphi 0, %s250
    %s254 = sphi 0, %s253
    %s270 = sphi 0, %s254
  $region4: #{up_forward.5} parent=0 // loop_header_branch
    %18 = sbr.rel (%p16) target = $region8
  $region5: #{up_forward.5} parent=0 // loop_body
    %s20 = ssub.s32 %s15, 1
    %s21 = ssub.s32 %s15, 2
    %s28 = sadd.s32 1, %s23
    %p29 = scmp.ge.s32.totalorder %s28, 1
    %s30 = scalar_select %p29, 0, %s28
    %s31 = sadd.s32 1, %s22
    %s32 = scalar_select %p29, %s31, %s22
    %p33 = scmp.ge.s32.totalorder %s32, 2
    %s34 = scalar_select %p33, 0, %s32
    %s35 = ssub.s32 %s22, %s34
    %s36 = ssub.s32 %s23, %s30
    %s37 = sor.u32 %s35, %s36
    %p38 = scmp.eq.s32.totalorder %s37, 0
    %s40 = sadd.s32 %s39, 1
    %s41 = scalar_select %p38, %s39, %s40
    %p44 = pneg %p38
    %p45 = scmp.eq.s32.totalorder %s15, 1
    %p46 = por %p44, %p45
    %p47 = scmp.ne.s32.totalorder %s39, %s42
    %p48 = scmp.eq.s32.totalorder %s15, 0
    %p49 = por %p47, %p48
    %p50 = scmp.ne.s32.totalorder %s39, %s42
    %p51 = scmp.eq.s32.totalorder %s20, 1
    %p52 = por %p50, %p51
    %p53 = scmp.ne.s32.totalorder %s42, %s43
    %p54 = scmp.eq.s32.totalorder %s20, 0
    %p55 = por %p53, %p54
    %p56 = scmp.ne.s32.totalorder %s42, %s43
    %p57 = scmp.eq.s32.totalorder %s21, 1
    %p58 = por %p56, %p57
    %p60 = scmp.ne.s32.totalorder %s43, %s59
    %p61 = scmp.eq.s32.totalorder %s21, 0
    %p62 = por %p60, %p61
    %s63 = sadd.s32 %s23, 1
    %s64 = smul.u32 %s63, 8
    %s65 = sadd.s32 %s30, 1
    %s66 = smul.u32 %s65, 8
    %s67 = ssub.s32 %s22, %s34
    %s68 = ssub.s32 %s64, %s66
    %s69 = sor.u32 %s67, %s68
    %p70 = scmp.eq.s32.totalorder %s69, 0
    %s72 = sadd.s32 %s71, 1
    %s73 = scalar_select %p70, %s71, %s72
    %p76 = pneg %p70
    %p77 = scmp.eq.s32.totalorder %s15, 1
    %p78 = por %p76, %p77
    %p79 = scmp.ne.s32.totalorder %s71, %s74
    %p80 = scmp.eq.s32.totalorder %s15, 0
    %p81 = por %p79, %p80
    %p82 = scmp.ne.s32.totalorder %s71, %s74
    %p83 = scmp.eq.s32.totalorder %s20, 1
    %p84 = por %p82, %p83
    %p85 = scmp.ne.s32.totalorder %s74, %s75
    %p86 = scmp.eq.s32.totalorder %s20, 0
    %p87 = por %p85, %p86
    %p88 = scmp.ne.s32.totalorder %s74, %s75
    %p89 = scmp.eq.s32.totalorder %s21, 1
    %p90 = por %p88, %p89
    %p92 = scmp.ne.s32.totalorder %s75, %s91
    %p93 = scmp.eq.s32.totalorder %s21, 0
    %p94 = por %p92, %p93
    %s95 = ssub.s32 %s22, %s34
    %s96 = ssub.s32 %s23, %s30
    %s97 = sor.u32 %s95, %s96
    %p98 = scmp.eq.s32.totalorder %s97, 0
    %s100 = sadd.s32 %s99, 1
    %s101 = scalar_select %p98, %s99, %s100
    %p104 = pneg %p98
    %p105 = scmp.eq.s32.totalorder %s15, 1
    %p106 = por %p104, %p105
    %p107 = scmp.ne.s32.totalorder %s99, %s102
    %p108 = scmp.eq.s32.totalorder %s15, 0
    %p109 = por %p107, %p108
    %p110 = scmp.ne.s32.totalorder %s99, %s102
    %p111 = scmp.eq.s32.totalorder %s20, 1
    %p112 = por %p110, %p111
    %p113 = scmp.ne.s32.totalorder %s102, %s103
    %p114 = scmp.eq.s32.totalorder %s20, 0
    %p115 = por %p113, %p114
    %p116 = scmp.ne.s32.totalorder %s102, %s103
    %p117 = scmp.eq.s32.totalorder %s21, 1
    %p118 = por %p116, %p117
    %p120 = scmp.ne.s32.totalorder %s103, %s119
    %p121 = scmp.eq.s32.totalorder %s21, 0
    %p122 = por %p120, %p121
    %s123 = sadd.s32 %s23, 1
    %s124 = smul.u32 %s123, 8
    %s125 = sadd.s32 %s30, 1
    %s126 = smul.u32 %s125, 8
    %s127 = ssub.s32 %s22, %s34
    %s128 = ssub.s32 %s124, %s126
    %s129 = sor.u32 %s127, %s128
    %p130 = scmp.eq.s32.totalorder %s129, 0
    %s132 = sadd.s32 %s131, 1
    %s133 = scalar_select %p130, %s131, %s132
    %p136 = pneg %p130
    %p137 = scmp.eq.s32.totalorder %s15, 1
    %p138 = por %p136, %p137
    %p139 = scmp.ne.s32.totalorder %s131, %s134
    %p140 = scmp.eq.s32.totalorder %s15, 0
    %p141 = por %p139, %p140
    %p142 = scmp.ne.s32.totalorder %s131, %s134
    %p143 = scmp.eq.s32.totalorder %s20, 1
    %p144 = por %p142, %p143
    %p145 = scmp.ne.s32.totalorder %s134, %s135
    %p146 = scmp.eq.s32.totalorder %s20, 0
    %p147 = por %p145, %p146
    %p148 = scmp.ne.s32.totalorder %s134, %s135
    %p149 = scmp.eq.s32.totalorder %s21, 1
    %p150 = por %p148, %p149
    %p152 = scmp.ne.s32.totalorder %s135, %s151
    %p153 = scmp.eq.s32.totalorder %s21, 0
    %p154 = por %p152, %p153
    %s156 = sadd.s32 %s155, 1
    %p159 = scmp.eq.s32.totalorder %s15, 1
    %p160 = scmp.ne.s32.totalorder %s155, %s157
    %p161 = scmp.eq.s32.totalorder %s15, 0
    %p162 = por %p160, %p161
    %p163 = scmp.ne.s32.totalorder %s155, %s157
    %p164 = scmp.eq.s32.totalorder %s20, 1
    %p165 = por %p163, %p164
    %p166 = scmp.ne.s32.totalorder %s157, %s158
    %p167 = scmp.eq.s32.totalorder %s20, 0
    %p168 = por %p166, %p167
    %p169 = scmp.ne.s32.totalorder %s157, %s158
    %p170 = scmp.eq.s32.totalorder %s21, 1
    %p171 = por %p169, %p170
    %p173 = scmp.ne.s32.totalorder %s158, %s172
    %p174 = scmp.eq.s32.totalorder %s21, 0
    %p175 = por %p173, %p174
    %s177 = sadd.s32 %s176, 1
    %p180 = scmp.eq.s32.totalorder %s15, 1
    %p181 = scmp.ne.s32.totalorder %s176, %s178
    %p182 = scmp.eq.s32.totalorder %s15, 0
    %p183 = por %p181, %p182
    %p184 = scmp.ne.s32.totalorder %s176, %s178
    %p185 = scmp.eq.s32.totalorder %s20, 1
    %p186 = por %p184, %p185
    %p187 = scmp.ne.s32.totalorder %s178, %s179
    %p188 = scmp.eq.s32.totalorder %s20, 0
    %p189 = por %p187, %p188
    %p190 = scmp.ne.s32.totalorder %s178, %s179
    %p191 = scmp.eq.s32.totalorder %s21, 1
    %p192 = por %p190, %p191
    %p194 = scmp.ne.s32.totalorder %s179, %s193
    %p195 = scmp.eq.s32.totalorder %s21, 0
    %p196 = por %p194, %p195
    %s198 = sadd.s32 %s197, 1
    %p201 = scmp.eq.s32.totalorder %s15, 1
    %p202 = scmp.ne.s32.totalorder %s197, %s199
    %p203 = scmp.eq.s32.totalorder %s15, 0
    %p204 = por %p202, %p203
    %p205 = scmp.ne.s32.totalorder %s197, %s199
    %p206 = scmp.eq.s32.totalorder %s20, 1
    %p207 = por %p205, %p206
    %p208 = scmp.ne.s32.totalorder %s199, %s200
    %p209 = scmp.eq.s32.totalorder %s20, 0
    %p210 = por %p208, %p209
    %p211 = scmp.ne.s32.totalorder %s199, %s200
    %p212 = scmp.eq.s32.totalorder %s21, 1
    %p213 = por %p211, %p212
    %p215 = scmp.ne.s32.totalorder %s200, %s214
    %p216 = scmp.eq.s32.totalorder %s21, 0
    %p217 = por %p215, %p216
    %s218 = ssub.s32 %s22, %s34
    %s219 = ssub.s32 %s23, %s30
    %s220 = sor.u32 %s218, %s219
    %p221 = scmp.eq.s32.totalorder %s220, 0
    %s223 = sadd.s32 %s222, 1
    %s224 = scalar_select %p221, %s222, %s223
    %p227 = pneg %p221
    %p228 = scmp.eq.s32.totalorder %s15, 1
    %p229 = por %p227, %p228
    %p230 = scmp.ne.s32.totalorder %s222, %s225
    %p231 = scmp.eq.s32.totalorder %s15, 0
    %p232 = por %p230, %p231
    %p233 = scmp.ne.s32.totalorder %s222, %s225
    %p234 = scmp.eq.s32.totalorder %s20, 1
    %p235 = por %p233, %p234
    %p236 = scmp.ne.s32.totalorder %s225, %s226
    %p237 = scmp.eq.s32.totalorder %s20, 0
    %p238 = por %p236, %p237
    %p239 = scmp.ne.s32.totalorder %s225, %s226
    %p240 = scmp.eq.s32.totalorder %s21, 1
    %p241 = por %p239, %p240
    %p243 = scmp.ne.s32.totalorder %s226, %s242
    %p244 = scmp.eq.s32.totalorder %s21, 0
    %p245 = por %p243, %p244
    %s246 = sadd.s32 %s22, %s23
    %s247 = sadd.s32 %s34, %s30
    %s248 = ssub.s32 %s246, %s247
    %p249 = scmp.eq.s32.totalorder %s248, 0
    %s251 = sadd.s32 %s250, 1
    %s252 = scalar_select %p249, %s250, %s251
    %p255 = pneg %p249
    %p256 = scmp.eq.s32.totalorder %s15, 1
    %p257 = por %p255, %p256
    %p258 = scmp.ne.s32.totalorder %s250, %s253
    %p259 = scmp.eq.s32.totalorder %s15, 0
    %p260 = por %p258, %p259
    %p261 = scmp.ne.s32.totalorder %s250, %s253
    %p262 = scmp.eq.s32.totalorder %s20, 1
    %p263 = por %p261, %p262
    %p264 = scmp.ne.s32.totalorder %s253, %s254
    %p265 = scmp.eq.s32.totalorder %s20, 0
    %p266 = por %p264, %p265
    %p267 = scmp.ne.s32.totalorder %s253, %s254
    %p268 = scmp.eq.s32.totalorder %s21, 1
    %p269 = por %p267, %p268
    %p271 = scmp.ne.s32.totalorder %s254, %s270
    %p272 = scmp.eq.s32.totalorder %s21, 0
    %p273 = por %p271, %p272
    %p274 = scmp.le.s32.totalorder 1, %s15
    %p275 = scmp.lt.s32.totalorder %s15, 3
    %p276 = pnand %p274, %p275
    %p277 = pneg %p276
    // Predicated region
    $region9: #{up_forward.5} parent=5 // pred_check
      _
    $region10: #{up_forward.5} parent=5 // pred_check_branch
      %279 = sbr.rel (%p276) target = $region12
    $region11: #{up_forward.5} parent=5 // pred_region
      %s280 = ssub.s32 %s15, 1
      // Predicated region
      $region13: #{up_forward.5} parent=11 // pred_check
        %p281 = pneg %p168
      $region14: #{up_forward.5} parent=11 // pred_check_branch
        %283 = sbr.rel (%p281) target = $region16
      $region15: #{up_forward.5} parent=11 // pred_region
        _
      $region16: #{up_forward.5} parent=11 // pred_fallthru
        _
      // Predicated region
      $region17: #{up_forward.5} parent=11 // pred_check
        %p284 = pneg %p189
      $region18: #{up_forward.5} parent=11 // pred_check_branch
        %286 = sbr.rel (%p284) target = $region20
      $region19: #{up_forward.5} parent=11 // pred_region
        _
      $region20: #{up_forward.5} parent=11 // pred_fallthru
        _
      // Predicated region
      $region21: #{up_forward.5} parent=11 // pred_check
        %p287 = pneg %p210
      $region22: #{up_forward.5} parent=11 // pred_check_branch
        %289 = sbr.rel (%p287) target = $region24
      $region23: #{up_forward.5} parent=11 // pred_region
        _
      $region24: #{up_forward.5} parent=11 // pred_fallthru
        _
    $region12: #{up_forward.5} parent=5 // pred_fallthru
      _
    %p290 = scmp.lt.s32.totalorder %s15, 2
    // Predicated region
    $region25: #{up_forward.5} parent=5 // pred_check
      %p291 = pneg %p290
    $region26: #{up_forward.5} parent=5 // pred_check_branch
      %293 = sbr.rel (%p291) target = $region28
    $region27: #{up_forward.5} parent=5 // pred_region
      // Predicated region
      $region29: #{up_forward.5} parent=27 // pred_check
        %p294 = pneg %p49
      $region30: #{up_forward.5} parent=27 // pred_check_branch
        %296 = sbr.rel (%p294) target = $region32
      $region31: #{up_forward.5} parent=27 // pred_region
        %s297 = smul.u32 16, %s23
        %s298 = ssub.s32 18, %s297
        %p299 = scmp.lt.s32.totalorder %s298, 16
        %s300 = scalar_select %p299, %s298, 16
        %s301 = smul.u32 8, %s300
        %s302 = smul.u32 %s301, 3
        %p303 = scmp.lt.s32.totalorder %s22, 1
        %s304 = scalar_select %p303, %s22, 1
        %p305 = scmp.lt.s32.totalorder %s297, 17
        %s306 = scalar_select %p305, %s297, 17
        %s307 = smul.addr %s306, 3
        %s308 = smul.addr %s304, 54
        %s309 = sadd.s32 %s307, %s308
        %s310 = smul.addr %s309, 8
        %s311 = scalar_lea.vmem %s0, %s310
        %s312 = smul.u32 16, %s23
        %s313 = ssub.s32 18, %s312
        %p314 = scmp.lt.s32.totalorder %s313, 16
        %s315 = scalar_select %p314, %s313, 16
        %s316 = smul.u32 8, %s315
        %s317 = smul.u32 %s316, 3
      $region32: #{up_forward.5} parent=27 // pred_fallthru
        _
      // Predicated region
      $region33: #{up_forward.5} parent=27 // pred_check
        %p318 = pneg %p81
      $region34: #{up_forward.5} parent=27 // pred_check_branch
        %320 = sbr.rel (%p318) target = $region36
      $region35: #{up_forward.5} parent=27 // pred_region
        %s321 = sadd.s32 %s23, 1
        %s322 = smul.u32 %s321, 8
        %s323 = smul.u32 2, %s322
        %p324 = scmp.lt.s32.totalorder %s22, 1
        %s325 = scalar_select %p324, %s22, 1
        %p326 = scmp.lt.s32.totalorder %s323, 17
        %s327 = scalar_select %p326, %s323, 17
        %s328 = smul.addr %s327, 3
        %s329 = smul.addr %s325, 54
        %s330 = sadd.s32 %s328, %s329
        %s331 = smul.addr %s330, 8
        %s332 = scalar_lea.vmem %s1, %s331
        %s333 = sadd.s32 %s23, 1
        %s334 = smul.u32 %s333, 8
        %s335 = smul.u32 2, %s334
      $region36: #{up_forward.5} parent=27 // pred_fallthru
        _
      // Predicated region
      $region37: #{up_forward.5} parent=27 // pred_check
        %p336 = pneg %p109
      $region38: #{up_forward.5} parent=27 // pred_check_branch
        %338 = sbr.rel (%p336) target = $region40
      $region39: #{up_forward.5} parent=27 // pred_region
        %s339 = smul.u32 16, %s23
        %s340 = ssub.s32 18, %s339
        %p341 = scmp.lt.s32.totalorder %s340, 16
        %s342 = scalar_select %p341, %s340, 16
        %s343 = smul.u32 8, %s342
        %s344 = smul.u32 %s343, 3
        %p345 = scmp.lt.s32.totalorder %s22, 1
        %s346 = scalar_select %p345, %s22, 1
        %p347 = scmp.lt.s32.totalorder %s339, 17
        %s348 = scalar_select %p347, %s339, 17
        %s349 = smul.addr %s348, 3
        %s350 = smul.addr %s346, 54
        %s351 = sadd.s32 %s349, %s350
        %s352 = smul.addr %s351, 8
        %s353 = scalar_lea.vmem %s2, %s352
        %s354 = smul.u32 16, %s23
        %s355 = ssub.s32 18, %s354
        %p356 = scmp.lt.s32.totalorder %s355, 16
        %s357 = scalar_select %p356, %s355, 16
        %s358 = smul.u32 8, %s357
        %s359 = smul.u32 %s358, 3
      $region40: #{up_forward.5} parent=27 // pred_fallthru
        _
      // Predicated region
      $region41: #{up_forward.5} parent=27 // pred_check
        %p360 = pneg %p141
      $region42: #{up_forward.5} parent=27 // pred_check_branch
        %362 = sbr.rel (%p360) target = $region44
      $region43: #{up_forward.5} parent=27 // pred_region
        %s363 = sadd.s32 %s23, 1
        %s364 = smul.u32 %s363, 8
        %s365 = smul.u32 2, %s364
        %p366 = scmp.lt.s32.totalorder %s22, 1
        %s367 = scalar_select %p366, %s22, 1
        %p368 = scmp.lt.s32.totalorder %s365, 17
        %s369 = scalar_select %p368, %s365, 17
        %s370 = smul.addr %s369, 3
        %s371 = smul.addr %s367, 54
        %s372 = sadd.s32 %s370, %s371
        %s373 = smul.addr %s372, 8
        %s374 = scalar_lea.vmem %s3, %s373
        %s375 = sadd.s32 %s23, 1
        %s376 = smul.u32 %s375, 8
        %s377 = smul.u32 2, %s376
      $region44: #{up_forward.5} parent=27 // pred_fallthru
        _
    $region28: #{up_forward.5} parent=5 // pred_fallthru
      _
    %p378 = scmp.le.s32.totalorder 1, %s15
    %p379 = scmp.lt.s32.totalorder %s15, 3
    %p380 = pnand %p378, %p379
    %p381 = pneg %p380
    // Predicated region
    $region45: #{up_forward.5} parent=5 // pred_check
      _
    $region46: #{up_forward.5} parent=5 // pred_check_branch
      %383 = sbr.rel (%p380) target = $region48
    $region47: #{up_forward.5} parent=5 // pred_region
      %s384 = ssub.s32 %s15, 1
      %s385 = smul.u32 16, %s25
      %s386 = ssub.s32 18, %s385
      %p387 = scmp.lt.s32.totalorder %s386, 16
      %s388 = scalar_select %p387, %s386, 16
      %s389 = smul.u32 8, %s388
      %s390 = smul.u32 %s389, 3
      %p391 = scmp.lt.s32.totalorder %s24, 1
      %s392 = scalar_select %p391, %s24, 1
      %p393 = scmp.lt.s32.totalorder %s385, 17
      %s394 = scalar_select %p393, %s385, 17
      %s395 = smul.addr %s394, 3
      %s396 = smul.addr %s392, 54
      %s397 = sadd.s32 %s395, %s396
      %s398 = smul.addr %s397, 8
      %s399 = scalar_lea.vmem %s0, %s398
      %p400 = pneg %p55
      %p401 = pneg %p52
      %s402 = sadd.s32 %s25, 1
      %s403 = smul.u32 %s402, 8
      %s404 = smul.u32 2, %s403
      %p405 = scmp.lt.s32.totalorder %s24, 1
      %s406 = scalar_select %p405, %s24, 1
      %p407 = scmp.lt.s32.totalorder %s404, 17
      %s408 = scalar_select %p407, %s404, 17
      %s409 = smul.addr %s408, 3
      %s410 = smul.addr %s406, 54
      %s411 = sadd.s32 %s409, %s410
      %s412 = smul.addr %s411, 8
      %s413 = scalar_lea.vmem %s1, %s412
      %p414 = pneg %p87
      %p415 = pneg %p84
      %s416 = smul.u32 16, %s25
      %s417 = ssub.s32 18, %s416
      %p418 = scmp.lt.s32.totalorder %s417, 16
      %s419 = scalar_select %p418, %s417, 16
      %s420 = smul.u32 8, %s419
      %s421 = smul.u32 %s420, 3
      %p422 = scmp.lt.s32.totalorder %s24, 1
      %s423 = scalar_select %p422, %s24, 1
      %p424 = scmp.lt.s32.totalorder %s416, 17
      %s425 = scalar_select %p424, %s416, 17
      %s426 = smul.addr %s425, 3
      %s427 = smul.addr %s423, 54
      %s428 = sadd.s32 %s426, %s427
      %s429 = smul.addr %s428, 8
      %s430 = scalar_lea.vmem %s2, %s429
      %p431 = pneg %p115
      %p432 = pneg %p112
      %s433 = sadd.s32 %s25, 1
      %s434 = smul.u32 %s433, 8
      %s435 = smul.u32 2, %s434
      %p436 = scmp.lt.s32.totalorder %s24, 1
      %s437 = scalar_select %p436, %s24, 1
      %p438 = scmp.lt.s32.totalorder %s435, 17
      %s439 = scalar_select %p438, %s435, 17
      %s440 = smul.addr %s439, 3
      %s441 = smul.addr %s437, 54
      %s442 = sadd.s32 %s440, %s441
      %s443 = smul.addr %s442, 8
      %s444 = scalar_lea.vmem %s3, %s443
      %p445 = pneg %p147
      %p446 = pneg %p144
      %p447 = pneg %p168
      %p448 = pneg %p165
      %p449 = pneg %p189
      %p450 = pneg %p186
      %p451 = pneg %p210
      %p452 = pneg %p207
      %p453 = pneg %p238
      %p454 = pneg %p235
      %s455 = smul.u32 16, %s25
      %p456 = scmp.lt.s32.totalorder %s24, 1
      %s457 = scalar_select %p456, %s24, 1
      %p458 = scmp.lt.s32.totalorder %s455, 15
      %s459 = scalar_select %p458, %s455, 15
      %s460 = smul.addr %s459, 2
      %s461 = smul.addr %s457, 32
      %s462 = sadd.s32 %s460, %s461
      %s463 = smul.addr %s462, 8
      %s464 = scalar_lea.vmem %s7, %s463
      %p465 = pneg %p266
      %p466 = pneg %p263
      %s467 = sadd.s32 %s24, %s25
      %p468 = scmp.lt.s32.totalorder %s467, 1
      %s469 = scalar_select %p468, %s467, 1
      %s470 = smul.addr %s469, 2
      %s471 = scalar_lea.vmem %s8, %s470
      %s472 = smul.u32 16, %s25
      %s473 = ssub.s32 18, %s472
      %p474 = scmp.lt.s32.totalorder %s473, 16
      %s475 = scalar_select %p474, %s473, 16
      %s476 = smul.u32 8, %s475
      %s477 = smul.u32 %s476, 3
      %p478 = scmp.lt.s32.totalorder %s24, 1
      %s479 = scalar_select %p478, %s24, 1
      %p480 = scmp.lt.s32.totalorder %s472, 17
      %s481 = scalar_select %p480, %s472, 17
      %s482 = smul.addr %s481, 3
      %s483 = smul.addr %s479, 54
      %s484 = sadd.s32 %s482, %s483
      %s485 = smul.addr %s484, 8
      %s486 = scalar_lea.vmem %s0, %s485
      %s487 = smul.u32 16, %s25
      %s488 = ssub.s32 18, %s487
      %p489 = scmp.lt.s32.totalorder %s488, 16
      %s490 = scalar_select %p489, %s488, 16
      %s491 = smul.u32 8, %s490
      %s492 = smul.u32 %s491, 3
      %s493 = sadd.s32 %s25, 1
      %s494 = smul.u32 %s493, 8
      %s495 = smul.u32 2, %s494
      %p496 = scmp.lt.s32.totalorder %s24, 1
      %s497 = scalar_select %p496, %s24, 1
      %p498 = scmp.lt.s32.totalorder %s495, 17
      %s499 = scalar_select %p498, %s495, 17
      %s500 = smul.addr %s499, 3
      %s501 = smul.addr %s497, 54
      %s502 = sadd.s32 %s500, %s501
      %s503 = smul.addr %s502, 8
      %s504 = scalar_lea.vmem %s1, %s503
      %s505 = sadd.s32 %s25, 1
      %s506 = smul.u32 %s505, 8
      %s507 = smul.u32 2, %s506
      %s508 = smul.u32 16, %s25
      %s509 = ssub.s32 18, %s508
      %p510 = scmp.lt.s32.totalorder %s509, 16
      %s511 = scalar_select %p510, %s509, 16
      %s512 = smul.u32 8, %s511
      %s513 = smul.u32 %s512, 3
      %p514 = scmp.lt.s32.totalorder %s24, 1
      %s515 = scalar_select %p514, %s24, 1
      %p516 = scmp.lt.s32.totalorder %s508, 17
      %s517 = scalar_select %p516, %s508, 17
      %s518 = smul.addr %s517, 3
      %s519 = smul.addr %s515, 54
      %s520 = sadd.s32 %s518, %s519
      %s521 = smul.addr %s520, 8
      %s522 = scalar_lea.vmem %s2, %s521
      %s523 = smul.u32 16, %s25
      %s524 = ssub.s32 18, %s523
      %p525 = scmp.lt.s32.totalorder %s524, 16
      %s526 = scalar_select %p525, %s524, 16
      %s527 = smul.u32 8, %s526
      %s528 = smul.u32 %s527, 3
      %s529 = sadd.s32 %s25, 1
      %s530 = smul.u32 %s529, 8
      %s531 = smul.u32 2, %s530
      %p532 = scmp.lt.s32.totalorder %s24, 1
      %s533 = scalar_select %p532, %s24, 1
      %p534 = scmp.lt.s32.totalorder %s531, 17
      %s535 = scalar_select %p534, %s531, 17
      %s536 = smul.addr %s535, 3
      %s537 = smul.addr %s533, 54
      %s538 = sadd.s32 %s536, %s537
      %s539 = smul.addr %s538, 8
      %s540 = scalar_lea.vmem %s3, %s539
      %s541 = sadd.s32 %s25, 1
      %s542 = smul.u32 %s541, 8
      %s543 = smul.u32 2, %s542
      %s544 = smul.u32 16, %s25
      %p545 = scmp.lt.s32.totalorder %s24, 1
      %s546 = scalar_select %p545, %s24, 1
      %p547 = scmp.lt.s32.totalorder %s544, 15
      %s548 = scalar_select %p547, %s544, 15
      %s549 = smul.addr %s548, 2
      %s550 = smul.addr %s546, 32
      %s551 = sadd.s32 %s549, %s550
      %s552 = smul.addr %s551, 8
      %s553 = scalar_lea.vmem %s7, %s552
      %s554 = smul.u32 16, %s25
      %s555 = sadd.s32 %s24, %s25
      %p556 = scmp.lt.s32.totalorder %s555, 1
      %s557 = scalar_select %p556, %s555, 1
      %s558 = smul.addr %s557, 2
      %s559 = scalar_lea.vmem %s8, %s558
      %s560 = sadd.s32 %s24, %s25
      %v561 = vld [vmem:[%s486] sm:$0xff]
      %v562 = vld [vmem:[%s486 + $0x8] sm:$0xff]
      %v563 = vld [vmem:[%s486 + $0x10] sm:$0x3]
      %v564 = vld [vmem:[%s486 + $0x18] sm:$0xff]
      %v565 = vld [vmem:[%s486 + $0x20] sm:$0xff]
      %v566 = vld [vmem:[%s486 + $0x28] sm:$0x3]
      %v567 = vld [vmem:[%s486 + $0x30] sm:$0xff]
      %v568 = vld [vmem:[%s486 + $0x38] sm:$0xff]
      %v569 = vld [vmem:[%s486 + $0x40] sm:$0x3]
      %v570 = vld [vmem:[%s486 + $0x48] sm:$0xff]
      %v571 = vld [vmem:[%s486 + $0x50] sm:$0xff]
      %v572 = vld [vmem:[%s486 + $0x58] sm:$0x3]
      %v573 = vld [vmem:[%s486 + $0x60] sm:$0xff]
      %v574 = vld [vmem:[%s486 + $0x68] sm:$0xff]
      %v575 = vld [vmem:[%s486 + $0x70] sm:$0x3]
      %v576 = vld [vmem:[%s486 + $0x78] sm:$0xff]
      %v577 = vld [vmem:[%s486 + $0x80] sm:$0xff]
      %v578 = vld [vmem:[%s486 + $0x88] sm:$0x3]
      %v579 = vld [vmem:[%s486 + $0x90] sm:$0xff]
      %v580 = vld [vmem:[%s486 + $0x98] sm:$0xff]
      %v581 = vld [vmem:[%s486 + $0xa0] sm:$0x3]
      %v582 = vld [vmem:[%s486 + $0xa8] sm:$0xff]
      %v583 = vld [vmem:[%s486 + $0xb0] sm:$0xff]
      %v584 = vld [vmem:[%s486 + $0xb8] sm:$0x3]
      %v585 = vld [vmem:[%s486 + $0xc0] sm:$0xff]
      %v586 = vld [vmem:[%s486 + $0xc8] sm:$0xff]
      %v587 = vld [vmem:[%s486 + $0xd0] sm:$0x3]
      %v588 = vld [vmem:[%s486 + $0xd8] sm:$0xff]
      %v589 = vld [vmem:[%s486 + $0xe0] sm:$0xff]
      %v590 = vld [vmem:[%s486 + $0xe8] sm:$0x3]
      %v591 = vld [vmem:[%s486 + $0xf0] sm:$0xff]
      %v592 = vld [vmem:[%s486 + $0xf8] sm:$0xff]
      %v593 = vld [vmem:[%s486 + $0x100] sm:$0x3]
      %v594 = vld [vmem:[%s486 + $0x108] sm:$0xff]
      %v595 = vld [vmem:[%s486 + $0x110] sm:$0xff]
      %v596 = vld [vmem:[%s486 + $0x118] sm:$0x3]
      %v597 = vld [vmem:[%s486 + $0x120] sm:$0xff]
      %v598 = vld [vmem:[%s486 + $0x128] sm:$0xff]
      %v599 = vld [vmem:[%s486 + $0x130] sm:$0x3]
      %v600 = vld [vmem:[%s486 + $0x138] sm:$0xff]
      %v601 = vld [vmem:[%s486 + $0x140] sm:$0xff]
      %v602 = vld [vmem:[%s486 + $0x148] sm:$0x3]
      %v603 = vld [vmem:[%s486 + $0x150] sm:$0xff]
      %v604 = vld [vmem:[%s486 + $0x158] sm:$0xff]
      %v605 = vld [vmem:[%s486 + $0x160] sm:$0x3]
      %v606 = vld [vmem:[%s486 + $0x168] sm:$0xff]
      %v607 = vld [vmem:[%s486 + $0x170] sm:$0xff]
      %v608 = vld [vmem:[%s486 + $0x178] sm:$0x3]
      %v609 = vld [vmem:[%s504] sm:$0xff]
      %v610 = vld [vmem:[%s504 + $0x8] sm:$0xff]
      %v611 = vld [vmem:[%s504 + $0x10] sm:$0x3]
      %v612 = vld [vmem:[%s504 + $0x18] sm:$0xff]
      %v613 = vld [vmem:[%s504 + $0x20] sm:$0xff]
      %v614 = vld [vmem:[%s504 + $0x28] sm:$0x3]
      %v615 = vld [vmem:[%s522] sm:$0xff]
      %v616 = vld [vmem:[%s522 + $0x8] sm:$0xff]
      %v617 = vld [vmem:[%s522 + $0x10] sm:$0x3]
      %v618 = vld [vmem:[%s522 + $0x18] sm:$0xff]
      %v619 = vld [vmem:[%s522 + $0x20] sm:$0xff]
      %v620 = vld [vmem:[%s522 + $0x28] sm:$0x3]
      %v621 = vld [vmem:[%s522 + $0x30] sm:$0xff]
      %v622 = vld [vmem:[%s522 + $0x38] sm:$0xff]
      %v623 = vld [vmem:[%s522 + $0x40] sm:$0x3]
      %v624 = vld [vmem:[%s522 + $0x48] sm:$0xff]
      %v625 = vld [vmem:[%s522 + $0x50] sm:$0xff]
      %v626 = vld [vmem:[%s522 + $0x58] sm:$0x3]
      %v627 = vld [vmem:[%s522 + $0x60] sm:$0xff]
      %v628 = vld [vmem:[%s522 + $0x68] sm:$0xff]
      %v629 = vld [vmem:[%s522 + $0x70] sm:$0x3]
      %v630 = vld [vmem:[%s522 + $0x78] sm:$0xff]
      %v631 = vld [vmem:[%s522 + $0x80] sm:$0xff]
      %v632 = vld [vmem:[%s522 + $0x88] sm:$0x3]
      %v633 = vld [vmem:[%s522 + $0x90] sm:$0xff]
      %v634 = vld [vmem:[%s522 + $0x98] sm:$0xff]
      %v635 = vld [vmem:[%s522 + $0xa0] sm:$0x3]
      %v636 = vld [vmem:[%s522 + $0xa8] sm:$0xff]
      %v637 = vld [vmem:[%s522 + $0xb0] sm:$0xff]
      %v638 = vld [vmem:[%s522 + $0xb8] sm:$0x3]
      %v639 = vld [vmem:[%s522 + $0xc0] sm:$0xff]
      %v640 = vld [vmem:[%s522 + $0xc8] sm:$0xff]
      %v641 = vld [vmem:[%s522 + $0xd0] sm:$0x3]
      %v642 = vld [vmem:[%s522 + $0xd8] sm:$0xff]
      %v643 = vld [vmem:[%s522 + $0xe0] sm:$0xff]
      %v644 = vld [vmem:[%s522 + $0xe8] sm:$0x3]
      %v645 = vld [vmem:[%s522 + $0xf0] sm:$0xff]
      %v646 = vld [vmem:[%s522 + $0xf8] sm:$0xff]
      %v647 = vld [vmem:[%s522 + $0x100] sm:$0x3]
      %v648 = vld [vmem:[%s522 + $0x108] sm:$0xff]
      %v649 = vld [vmem:[%s522 + $0x110] sm:$0xff]
      %v650 = vld [vmem:[%s522 + $0x118] sm:$0x3]
      %v651 = vld [vmem:[%s522 + $0x120] sm:$0xff]
      %v652 = vld [vmem:[%s522 + $0x128] sm:$0xff]
      %v653 = vld [vmem:[%s522 + $0x130] sm:$0x3]
      %v654 = vld [vmem:[%s522 + $0x138] sm:$0xff]
      %v655 = vld [vmem:[%s522 + $0x140] sm:$0xff]
      %v656 = vld [vmem:[%s522 + $0x148] sm:$0x3]
      %v657 = vld [vmem:[%s522 + $0x150] sm:$0xff]
      %v658 = vld [vmem:[%s522 + $0x158] sm:$0xff]
      %v659 = vld [vmem:[%s522 + $0x160] sm:$0x3]
      %v660 = vld [vmem:[%s522 + $0x168] sm:$0xff]
      %v661 = vld [vmem:[%s522 + $0x170] sm:$0xff]
      %v662 = vld [vmem:[%s522 + $0x178] sm:$0x3]
      %v663 = vld [vmem:[%s540] sm:$0xff]
      %v664 = vld [vmem:[%s540 + $0x8] sm:$0xff]
      %v665 = vld [vmem:[%s540 + $0x10] sm:$0x3]
      %v666 = vld [vmem:[%s540 + $0x18] sm:$0xff]
      %v667 = vld [vmem:[%s540 + $0x20] sm:$0xff]
      %v668 = vld [vmem:[%s540 + $0x28] sm:$0x3]
      %vm717 = vcmask 1046528
      %v718 = vrot.slane %v561, 1
      %v719 = vrot.slane %v562, 1
      %v720 = vsel %vm717, %v718, %v719
      %v721 = vrot.slane %v563, 1
      %v722 = vsel %vm717, %v719, %v721
      %v723 = vrot.slane %v564, 1
      %v724 = vrot.slane %v565, 1
      %v725 = vsel %vm717, %v723, %v724
      %v726 = vrot.slane %v566, 1
      %v727 = vsel %vm717, %v724, %v726
      %v728 = vrot.slane %v567, 1
      %v729 = vrot.slane %v568, 1
      %v730 = vsel %vm717, %v728, %v729
      %v731 = vrot.slane %v569, 1
      %v732 = vsel %vm717, %v729, %v731
      %v733 = vrot.slane %v570, 1
      %v734 = vrot.slane %v571, 1
      %v735 = vsel %vm717, %v733, %v734
      %v736 = vrot.slane %v572, 1
      %v737 = vsel %vm717, %v734, %v736
      %v738 = vrot.slane %v573, 1
      %v739 = vrot.slane %v574, 1
      %v740 = vsel %vm717, %v738, %v739
      %v741 = vrot.slane %v575, 1
      %v742 = vsel %vm717, %v739, %v741
      %v743 = vrot.slane %v576, 1
      %v744 = vrot.slane %v577, 1
      %v745 = vsel %vm717, %v743, %v744
      %v746 = vrot.slane %v578, 1
      %v747 = vsel %vm717, %v744, %v746
      %v748 = vrot.slane %v579, 1
      %v749 = vrot.slane %v580, 1
      %v750 = vsel %vm717, %v748, %v749
      %v751 = vrot.slane %v581, 1
      %v752 = vsel %vm717, %v749, %v751
      %v753 = vrot.slane %v582, 1
      %v754 = vrot.slane %v583, 1
      %v755 = vsel %vm717, %v753, %v754
      %v756 = vrot.slane %v584, 1
      %v757 = vsel %vm717, %v754, %v756
      %v758 = vrot.slane %v585, 1
      %v759 = vrot.slane %v586, 1
      %v760 = vsel %vm717, %v758, %v759
      %v761 = vrot.slane %v587, 1
      %v762 = vsel %vm717, %v759, %v761
      %v763 = vrot.slane %v588, 1
      %v764 = vrot.slane %v589, 1
      %v765 = vsel %vm717, %v763, %v764
      %v766 = vrot.slane %v590, 1
      %v767 = vsel %vm717, %v764, %v766
      %v768 = vrot.slane %v591, 1
      %v769 = vrot.slane %v592, 1
      %v770 = vsel %vm717, %v768, %v769
      %v771 = vrot.slane %v593, 1
      %v772 = vsel %vm717, %v769, %v771
      %v773 = vrot.slane %v594, 1
      %v774 = vrot.slane %v595, 1
      %v775 = vsel %vm717, %v773, %v774
      %v776 = vrot.slane %v596, 1
      %v777 = vsel %vm717, %v774, %v776
      %v778 = vrot.slane %v597, 1
      %v779 = vrot.slane %v598, 1
      %v780 = vsel %vm717, %v778, %v779
      %v781 = vrot.slane %v599, 1
      %v782 = vsel %vm717, %v779, %v781
      %v783 = vrot.slane %v600, 1
      %v784 = vrot.slane %v601, 1
      %v785 = vsel %vm717, %v783, %v784
      %v786 = vrot.slane %v602, 1
      %v787 = vsel %vm717, %v784, %v786
      %v788 = vrot.slane %v603, 1
      %v789 = vrot.slane %v604, 1
      %v790 = vsel %vm717, %v788, %v789
      %v791 = vrot.slane %v605, 1
      %v792 = vsel %vm717, %v789, %v791
      %v793 = vrot.slane %v606, 1
      %v794 = vrot.slane %v607, 1
      %v795 = vsel %vm717, %v793, %v794
      %v796 = vrot.slane %v608, 1
      %v797 = vsel %vm717, %v794, %v796
      %798 = vrot.lane.b32.xlu0 %v720, 2
      %v799 = vpop.permute.xlu0 %798
      %800 = vrot.lane.b32.xlu0 %v722, 2
      %v801 = vpop.permute.xlu0 %800
      %802 = vrot.lane.b32.xlu0 %v725, 2
      %v803 = vpop.permute.xlu0 %802
      %804 = vrot.lane.b32.xlu0 %v727, 2
      %v805 = vpop.permute.xlu0 %804
      %806 = vrot.lane.b32.xlu0 %v730, 2
      %v807 = vpop.permute.xlu0 %806
      %808 = vrot.lane.b32.xlu0 %v732, 2
      %v809 = vpop.permute.xlu0 %808
      %810 = vrot.lane.b32.xlu0 %v735, 2
      %v811 = vpop.permute.xlu0 %810
      %812 = vrot.lane.b32.xlu0 %v737, 2
      %v813 = vpop.permute.xlu0 %812
      %814 = vrot.lane.b32.xlu0 %v740, 2
      %v815 = vpop.permute.xlu0 %814
      %816 = vrot.lane.b32.xlu0 %v742, 2
      %v817 = vpop.permute.xlu0 %816
      %818 = vrot.lane.b32.xlu0 %v745, 2
      %v819 = vpop.permute.xlu0 %818
      %820 = vrot.lane.b32.xlu0 %v747, 2
      %v821 = vpop.permute.xlu0 %820
      %822 = vrot.lane.b32.xlu0 %v750, 2
      %v823 = vpop.permute.xlu0 %822
      %824 = vrot.lane.b32.xlu0 %v752, 2
      %v825 = vpop.permute.xlu0 %824
      %826 = vrot.lane.b32.xlu0 %v755, 2
      %v827 = vpop.permute.xlu0 %826
      %828 = vrot.lane.b32.xlu0 %v757, 2
      %v829 = vpop.permute.xlu0 %828
      %830 = vrot.lane.b32.xlu0 %v760, 2
      %v831 = vpop.permute.xlu0 %830
      %832 = vrot.lane.b32.xlu0 %v762, 2
      %v833 = vpop.permute.xlu0 %832
      %834 = vrot.lane.b32.xlu0 %v765, 2
      %v835 = vpop.permute.xlu0 %834
      %836 = vrot.lane.b32.xlu0 %v767, 2
      %v837 = vpop.permute.xlu0 %836
      %838 = vrot.lane.b32.xlu0 %v770, 2
      %v839 = vpop.permute.xlu0 %838
      %840 = vrot.lane.b32.xlu0 %v772, 2
      %v841 = vpop.permute.xlu0 %840
      %842 = vrot.lane.b32.xlu0 %v775, 2
      %v843 = vpop.permute.xlu0 %842
      %844 = vrot.lane.b32.xlu0 %v777, 2
      %v845 = vpop.permute.xlu0 %844
      %846 = vrot.lane.b32.xlu0 %v780, 2
      %v847 = vpop.permute.xlu0 %846
      %848 = vrot.lane.b32.xlu0 %v782, 2
      %v849 = vpop.permute.xlu0 %848
      %850 = vrot.lane.b32.xlu0 %v785, 2
      %v851 = vpop.permute.xlu0 %850
      %852 = vrot.lane.b32.xlu0 %v787, 2
      %v853 = vpop.permute.xlu0 %852
      %854 = vrot.lane.b32.xlu0 %v790, 2
      %v855 = vpop.permute.xlu0 %854
      %856 = vrot.lane.b32.xlu0 %v792, 2
      %v857 = vpop.permute.xlu0 %856
      %858 = vrot.lane.b32.xlu0 %v795, 2
      %v859 = vpop.permute.xlu0 %858
      %860 = vrot.lane.b32.xlu0 %v797, 2
      %v861 = vpop.permute.xlu0 %860
      %vm894 = vcmask 1045504
      %v895 = vrot.slane %v561, 2
      %v896 = vrot.slane %v562, 2
      %v897 = vsel %vm894, %v895, %v896
      %v898 = vrot.slane %v563, 2
      %v899 = vsel %vm894, %v896, %v898
      %v900 = vrot.slane %v564, 2
      %v901 = vrot.slane %v565, 2
      %v902 = vsel %vm894, %v900, %v901
      %v903 = vrot.slane %v566, 2
      %v904 = vsel %vm894, %v901, %v903
      %v905 = vrot.slane %v567, 2
      %v906 = vrot.slane %v568, 2
      %v907 = vsel %vm894, %v905, %v906
      %v908 = vrot.slane %v569, 2
      %v909 = vsel %vm894, %v906, %v908
      %v910 = vrot.slane %v570, 2
      %v911 = vrot.slane %v571, 2
      %v912 = vsel %vm894, %v910, %v911
      %v913 = vrot.slane %v572, 2
      %v914 = vsel %vm894, %v911, %v913
      %v915 = vrot.slane %v573, 2
      %v916 = vrot.slane %v574, 2
      %v917 = vsel %vm894, %v915, %v916
      %v918 = vrot.slane %v575, 2
      %v919 = vsel %vm894, %v916, %v918
      %v920 = vrot.slane %v576, 2
      %v921 = vrot.slane %v577, 2
      %v922 = vsel %vm894, %v920, %v921
      %v923 = vrot.slane %v578, 2
      %v924 = vsel %vm894, %v921, %v923
      %v925 = vrot.slane %v579, 2
      %v926 = vrot.slane %v580, 2
      %v927 = vsel %vm894, %v925, %v926
      %v928 = vrot.slane %v581, 2
      %v929 = vsel %vm894, %v926, %v928
      %v930 = vrot.slane %v582, 2
      %v931 = vrot.slane %v583, 2
      %v932 = vsel %vm894, %v930, %v931
      %v933 = vrot.slane %v584, 2
      %v934 = vsel %vm894, %v931, %v933
      %v935 = vrot.slane %v585, 2
      %v936 = vrot.slane %v586, 2
      %v937 = vsel %vm894, %v935, %v936
      %v938 = vrot.slane %v587, 2
      %v939 = vsel %vm894, %v936, %v938
      %v940 = vrot.slane %v588, 2
      %v941 = vrot.slane %v589, 2
      %v942 = vsel %vm894, %v940, %v941
      %v943 = vrot.slane %v590, 2
      %v944 = vsel %vm894, %v941, %v943
      %v945 = vrot.slane %v591, 2
      %v946 = vrot.slane %v592, 2
      %v947 = vsel %vm894, %v945, %v946
      %v948 = vrot.slane %v593, 2
      %v949 = vsel %vm894, %v946, %v948
      %v950 = vrot.slane %v594, 2
      %v951 = vrot.slane %v595, 2
      %v952 = vsel %vm894, %v950, %v951
      %v953 = vrot.slane %v596, 2
      %v954 = vsel %vm894, %v951, %v953
      %v955 = vrot.slane %v597, 2
      %v956 = vrot.slane %v598, 2
      %v957 = vsel %vm894, %v955, %v956
      %v958 = vrot.slane %v599, 2
      %v959 = vsel %vm894, %v956, %v958
      %v960 = vrot.slane %v600, 2
      %v961 = vrot.slane %v601, 2
      %v962 = vsel %vm894, %v960, %v961
      %v963 = vrot.slane %v602, 2
      %v964 = vsel %vm894, %v961, %v963
      %v965 = vrot.slane %v603, 2
      %v966 = vrot.slane %v604, 2
      %v967 = vsel %vm894, %v965, %v966
      %v968 = vrot.slane %v605, 2
      %v969 = vsel %vm894, %v966, %v968
      %v970 = vrot.slane %v606, 2
      %v971 = vrot.slane %v607, 2
      %v972 = vsel %vm894, %v970, %v971
      %v973 = vrot.slane %v608, 2
      %v974 = vsel %vm894, %v971, %v973
      %975 = vrot.lane.b32.xlu0 %v897, 4
      %v976 = vpop.permute.xlu0 %975
      %977 = vrot.lane.b32.xlu0 %v899, 4
      %v978 = vpop.permute.xlu0 %977
      %979 = vrot.lane.b32.xlu0 %v902, 4
      %v980 = vpop.permute.xlu0 %979
      %981 = vrot.lane.b32.xlu0 %v904, 4
      %v982 = vpop.permute.xlu0 %981
      %983 = vrot.lane.b32.xlu0 %v907, 4
      %v984 = vpop.permute.xlu0 %983
      %985 = vrot.lane.b32.xlu0 %v909, 4
      %v986 = vpop.permute.xlu0 %985
      %987 = vrot.lane.b32.xlu0 %v912, 4
      %v988 = vpop.permute.xlu0 %987
      %989 = vrot.lane.b32.xlu0 %v914, 4
      %v990 = vpop.permute.xlu0 %989
      %991 = vrot.lane.b32.xlu0 %v917, 4
      %v992 = vpop.permute.xlu0 %991
      %993 = vrot.lane.b32.xlu0 %v919, 4
      %v994 = vpop.permute.xlu0 %993
      %995 = vrot.lane.b32.xlu0 %v922, 4
      %v996 = vpop.permute.xlu0 %995
      %997 = vrot.lane.b32.xlu0 %v924, 4
      %v998 = vpop.permute.xlu0 %997
      %999 = vrot.lane.b32.xlu0 %v927, 4
      %v1000 = vpop.permute.xlu0 %999
      %1001 = vrot.lane.b32.xlu0 %v929, 4
      %v1002 = vpop.permute.xlu0 %1001
      %1003 = vrot.lane.b32.xlu0 %v932, 4
      %v1004 = vpop.permute.xlu0 %1003
      %1005 = vrot.lane.b32.xlu0 %v934, 4
      %v1006 = vpop.permute.xlu0 %1005
      %1007 = vrot.lane.b32.xlu0 %v937, 4
      %v1008 = vpop.permute.xlu0 %1007
      %1009 = vrot.lane.b32.xlu0 %v939, 4
      %v1010 = vpop.permute.xlu0 %1009
      %1011 = vrot.lane.b32.xlu0 %v942, 4
      %v1012 = vpop.permute.xlu0 %1011
      %1013 = vrot.lane.b32.xlu0 %v944, 4
      %v1014 = vpop.permute.xlu0 %1013
      %1015 = vrot.lane.b32.xlu0 %v947, 4
      %v1016 = vpop.permute.xlu0 %1015
      %1017 = vrot.lane.b32.xlu0 %v949, 4
      %v1018 = vpop.permute.xlu0 %1017
      %1019 = vrot.lane.b32.xlu0 %v952, 4
      %v1020 = vpop.permute.xlu0 %1019
      %1021 = vrot.lane.b32.xlu0 %v954, 4
      %v1022 = vpop.permute.xlu0 %1021
      %1023 = vrot.lane.b32.xlu0 %v957, 4
      %v1024 = vpop.permute.xlu0 %1023
      %1025 = vrot.lane.b32.xlu0 %v959, 4
      %v1026 = vpop.permute.xlu0 %1025
      %1027 = vrot.lane.b32.xlu0 %v962, 4
      %v1028 = vpop.permute.xlu0 %1027
      %1029 = vrot.lane.b32.xlu0 %v964, 4
      %v1030 = vpop.permute.xlu0 %1029
      %1031 = vrot.lane.b32.xlu0 %v967, 4
      %v1032 = vpop.permute.xlu0 %1031
      %1033 = vrot.lane.b32.xlu0 %v969, 4
      %v1034 = vpop.permute.xlu0 %1033
      %1035 = vrot.lane.b32.xlu0 %v972, 4
      %v1036 = vpop.permute.xlu0 %1035
      %1037 = vrot.lane.b32.xlu0 %v974, 4
      %v1038 = vpop.permute.xlu0 %1037
      %vm1071 = vcmask 15360
      %v1072 = vsel %vm1071, %v561, %v799
      %v1073 = vsel %vm1071, %v562, %v801
      %v1074 = vsel %vm1071, %v564, %v803
      %v1075 = vsel %vm1071, %v565, %v805
      %v1076 = vsel %vm1071, %v567, %v807
      %v1077 = vsel %vm1071, %v568, %v809
      %v1078 = vsel %vm1071, %v570, %v811
      %v1079 = vsel %vm1071, %v571, %v813
      %v1080 = vsel %vm1071, %v573, %v815
      %v1081 = vsel %vm1071, %v574, %v817
      %v1082 = vsel %vm1071, %v576, %v819
      %v1083 = vsel %vm1071, %v577, %v821
      %v1084 = vsel %vm1071, %v579, %v823
      %v1085 = vsel %vm1071, %v580, %v825
      %v1086 = vsel %vm1071, %v582, %v827
      %v1087 = vsel %vm1071, %v583, %v829
      %v1088 = vsel %vm1071, %v585, %v831
      %v1089 = vsel %vm1071, %v586, %v833
      %v1090 = vsel %vm1071, %v588, %v835
      %v1091 = vsel %vm1071, %v589, %v837
      %v1092 = vsel %vm1071, %v591, %v839
      %v1093 = vsel %vm1071, %v592, %v841
      %v1094 = vsel %vm1071, %v594, %v843
      %v1095 = vsel %vm1071, %v595, %v845
      %v1096 = vsel %vm1071, %v597, %v847
      %v1097 = vsel %vm1071, %v598, %v849
      %v1098 = vsel %vm1071, %v600, %v851
      %v1099 = vsel %vm1071, %v601, %v853
      %v1100 = vsel %vm1071, %v603, %v855
      %v1101 = vsel %vm1071, %v604, %v857
      %v1102 = vsel %vm1071, %v606, %v859
      %v1103 = vsel %vm1071, %v607, %v861
      %vm1104 = vcmask 31744
      %v1105 = vsel %vm1104, %v1072, %v976
      %v1106 = vsel %vm1104, %v1073, %v978
      %v1107 = vsel %vm1104, %v1074, %v980
      %v1108 = vsel %vm1104, %v1075, %v982
      %v1109 = vsel %vm1104, %v1076, %v984
      %v1110 = vsel %vm1104, %v1077, %v986
      %v1111 = vsel %vm1104, %v1078, %v988
      %v1112 = vsel %vm1104, %v1079, %v990
      %v1113 = vsel %vm1104, %v1080, %v992
      %v1114 = vsel %vm1104, %v1081, %v994
      %v1115 = vsel %vm1104, %v1082, %v996
      %v1116 = vsel %vm1104, %v1083, %v998
      %v1117 = vsel %vm1104, %v1084, %v1000
      %v1118 = vsel %vm1104, %v1085, %v1002
      %v1119 = vsel %vm1104, %v1086, %v1004
      %v1120 = vsel %vm1104, %v1087, %v1006
      %v1121 = vsel %vm1104, %v1088, %v1008
      %v1122 = vsel %vm1104, %v1089, %v1010
      %v1123 = vsel %vm1104, %v1090, %v1012
      %v1124 = vsel %vm1104, %v1091, %v1014
      %v1125 = vsel %vm1104, %v1092, %v1016
      %v1126 = vsel %vm1104, %v1093, %v1018
      %v1127 = vsel %vm1104, %v1094, %v1020
      %v1128 = vsel %vm1104, %v1095, %v1022
      %v1129 = vsel %vm1104, %v1096, %v1024
      %v1130 = vsel %vm1104, %v1097, %v1026
      %v1131 = vsel %vm1104, %v1098, %v1028
      %v1132 = vsel %vm1104, %v1099, %v1030
      %v1133 = vsel %vm1104, %v1100, %v1032
      %v1134 = vsel %vm1104, %v1101, %v1034
      %v1135 = vsel %vm1104, %v1102, %v1036
      %v1136 = vsel %vm1104, %v1103, %v1038
      %v1137 = vld [vmem:[%s4] sm:$0x3f]
      %v1141 = vrot.slane %v609, 1
      %v1142 = vrot.slane %v610, 1
      %v1143 = vsel %vm717, %v1141, %v1142
      %v1144 = vrot.slane %v611, 1
      %v1145 = vsel %vm717, %v1142, %v1144
      %1146 = vrot.lane.b32.xlu0 %v1143, 2
      %v1147 = vpop.permute.xlu0 %1146
      %1148 = vrot.lane.b32.xlu0 %v1145, 2
      %v1149 = vpop.permute.xlu0 %1148
      %v1152 = vrot.slane %v609, 2
      %v1153 = vrot.slane %v610, 2
      %v1154 = vsel %vm894, %v1152, %v1153
      %v1155 = vrot.slane %v611, 2
      %v1156 = vsel %vm894, %v1153, %v1155
      %1157 = vrot.lane.b32.xlu0 %v1154, 4
      %v1158 = vpop.permute.xlu0 %1157
      %1159 = vrot.lane.b32.xlu0 %v1156, 4
      %v1160 = vpop.permute.xlu0 %1159
      %v1163 = vsel %vm1071, %v609, %v1147
      %v1164 = vsel %vm1071, %v610, %v1149
      %v1165 = vsel %vm1104, %v1163, %v1158
      %v1166 = vsel %vm1104, %v1164, %v1160
      %s1167 = scalar_lea.vmem %s4, 8
      %v1168 = vld [vmem:[%s1167] sm:$0x3f]
      %vm1169 = vcmask 48128
      %v1171 = vsel %vm1169, %v1107, 0
      %v1174 = vsel %vm1169, %v1108, 0
      %v1177 = vsel %vm1169, %v1109, 0
      %v1180 = vsel %vm1169, %v1110, 0
      %v1183 = vsel %vm1169, %v1111, 0
      %v1186 = vsel %vm1169, %v1112, 0
      %v1189 = vsel %vm1169, %v1113, 0
      %v1192 = vsel %vm1169, %v1114, 0
      %v1195 = vsel %vm1169, %v1115, 0
      %v1198 = vsel %vm1169, %v1116, 0
      %v1201 = vsel %vm1169, %v1117, 0
      %v1204 = vsel %vm1169, %v1118, 0
      %v1207 = vsel %vm1169, %v1119, 0
      %v1210 = vsel %vm1169, %v1120, 0
      %v1213 = vsel %vm1169, %v1121, 0
      %v1216 = vsel %vm1169, %v1122, 0
      %v1219 = vsel %vm1169, %v1123, 0
      %v1222 = vsel %vm1169, %v1124, 0
      %v1225 = vsel %vm1169, %v1125, 0
      %v1228 = vsel %vm1169, %v1126, 0
      %v1231 = vsel %vm1169, %v1127, 0
      %v1234 = vsel %vm1169, %v1128, 0
      %v1237 = vsel %vm1169, %v1129, 0
      %v1240 = vsel %vm1169, %v1130, 0
      %v1243 = vsel %vm1169, %v1131, 0
      %v1246 = vsel %vm1169, %v1132, 0
      %v1249 = vsel %vm1169, %v1133, 0
      %v1252 = vsel %vm1169, %v1134, 0
      %v1255 = vsel %vm1169, %v1135, 0
      %v1258 = vsel %vm1169, %v1136, 0
      %v1261 = vsel %vm1169, %v1165, 0
      %v1264 = vsel %vm1169, %v1166, 0
      %v1267 = vsel %vm894, %v1168, 0
      %1269 = vmatpush.msra.mxu0 0.0
      %1270 = vmatpush.msra.mxu0 0.0
      %1271 = vmatpush.msra.mxu0 0.0
      %1272 = vmatpush.msra.mxu0 0.0
      %1273 = vmatpush.msra.mxu0 0.0
      %1274 = vmatpush.msra.mxu0 0.0
      %1275 = vmatpush.msra.mxu0 0.0
      %1276 = vmatpush.msra.mxu0 0.0
      %1277 = vmatpush.msra.mxu0 0.0
      %1278 = vmatpush.msra.mxu0 0.0
      %1279 = vmatpush.msra.mxu0 0.0
      %1280 = vmatpush.msra.mxu0 0.0
      %1281 = vmatpush.msra.mxu0 0.0
      %1282 = vmatpush.msra.mxu0 0.0
      %1283 = vmatpush.msra.mxu0 0.0
      %1284 = vmatpush.msra.mxu0 %v1267
      %1285 = vmatmul.f32.gmra.mxu0 %v1171
      %v1286 = vpop.f32.mrf.mxu0
      %v1287 = vadd.f32 0.0, %v1286
      %1288 = vmatmul.f32.gmra.mxu0 %v1174
      %v1289 = vpop.f32.mrf.mxu0
      %v1290 = vadd.f32 0.0, %v1289
      %1291 = vmatmul.f32.gmra.mxu0 %v1177
      %v1292 = vpop.f32.mrf.mxu0
      %v1293 = vadd.f32 0.0, %v1292
      %1294 = vmatmul.f32.gmra.mxu0 %v1180
      %v1295 = vpop.f32.mrf.mxu0
      %v1296 = vadd.f32 0.0, %v1295
      %1297 = vmatmul.f32.gmra.mxu0 %v1183
      %v1298 = vpop.f32.mrf.mxu0
      %v1299 = vadd.f32 0.0, %v1298
      %1300 = vmatmul.f32.gmra.mxu0 %v1186
      %v1301 = vpop.f32.mrf.mxu0
      %v1302 = vadd.f32 0.0, %v1301
      %1303 = vmatmul.f32.gmra.mxu0 %v1189
      %v1304 = vpop.f32.mrf.mxu0
      %v1305 = vadd.f32 0.0, %v1304
      %1306 = vmatmul.f32.gmra.mxu0 %v1192
      %v1307 = vpop.f32.mrf.mxu0
      %v1308 = vadd.f32 0.0, %v1307
      %1309 = vmatmul.f32.gmra.mxu0 %v1195
      %v1310 = vpop.f32.mrf.mxu0
      %v1311 = vadd.f32 0.0, %v1310
      %1312 = vmatmul.f32.gmra.mxu0 %v1198
      %v1313 = vpop.f32.mrf.mxu0
      %v1314 = vadd.f32 0.0, %v1313
      %1315 = vmatmul.f32.gmra.mxu0 %v1201
      %v1316 = vpop.f32.mrf.mxu0
      %v1317 = vadd.f32 0.0, %v1316
      %1318 = vmatmul.f32.gmra.mxu0 %v1204
      %v1319 = vpop.f32.mrf.mxu0
      %v1320 = vadd.f32 0.0, %v1319
      %1321 = vmatmul.f32.gmra.mxu0 %v1207
      %v1322 = vpop.f32.mrf.mxu0
      %v1323 = vadd.f32 0.0, %v1322
      %1324 = vmatmul.f32.gmra.mxu0 %v1210
      %v1325 = vpop.f32.mrf.mxu0
      %v1326 = vadd.f32 0.0, %v1325
      %1327 = vmatmul.f32.gmra.mxu0 %v1213
      %v1328 = vpop.f32.mrf.mxu0
      %v1329 = vadd.f32 0.0, %v1328
      %1330 = vmatmul.f32.gmra.mxu0 %v1216
      %v1331 = vpop.f32.mrf.mxu0
      %v1332 = vadd.f32 0.0, %v1331
      %1333 = vmatmul.f32.gmra.mxu0 %v1219
      %v1334 = vpop.f32.mrf.mxu0
      %v1335 = vadd.f32 0.0, %v1334
      %1336 = vmatmul.f32.gmra.mxu0 %v1222
      %v1337 = vpop.f32.mrf.mxu0
      %v1338 = vadd.f32 0.0, %v1337
      %1339 = vmatmul.f32.gmra.mxu0 %v1225
      %v1340 = vpop.f32.mrf.mxu0
      %v1341 = vadd.f32 0.0, %v1340
      %1342 = vmatmul.f32.gmra.mxu0 %v1228
      %v1343 = vpop.f32.mrf.mxu0
      %v1344 = vadd.f32 0.0, %v1343
      %1345 = vmatmul.f32.gmra.mxu0 %v1231
      %v1346 = vpop.f32.mrf.mxu0
      %v1347 = vadd.f32 0.0, %v1346
      %1348 = vmatmul.f32.gmra.mxu0 %v1234
      %v1349 = vpop.f32.mrf.mxu0
      %v1350 = vadd.f32 0.0, %v1349
      %1351 = vmatmul.f32.gmra.mxu0 %v1237
      %v1352 = vpop.f32.mrf.mxu0
      %v1353 = vadd.f32 0.0, %v1352
      %1354 = vmatmul.f32.gmra.mxu0 %v1240
      %v1355 = vpop.f32.mrf.mxu0
      %v1356 = vadd.f32 0.0, %v1355
      %1357 = vmatmul.f32.gmra.mxu0 %v1243
      %v1358 = vpop.f32.mrf.mxu0
      %v1359 = vadd.f32 0.0, %v1358
      %1360 = vmatmul.f32.gmra.mxu0 %v1246
      %v1361 = vpop.f32.mrf.mxu0
      %v1362 = vadd.f32 0.0, %v1361
      %1363 = vmatmul.f32.gmra.mxu0 %v1249
      %v1364 = vpop.f32.mrf.mxu0
      %v1365 = vadd.f32 0.0, %v1364
      %1366 = vmatmul.f32.gmra.mxu0 %v1252
      %v1367 = vpop.f32.mrf.mxu0
      %v1368 = vadd.f32 0.0, %v1367
      %1369 = vmatmul.f32.gmra.mxu0 %v1255
      %v1370 = vpop.f32.mrf.mxu0
      %v1371 = vadd.f32 0.0, %v1370
      %1372 = vmatmul.f32.gmra.mxu0 %v1258
      %v1373 = vpop.f32.mrf.mxu0
      %v1374 = vadd.f32 0.0, %v1373
      %1375 = vmatmul.f32.gmra.mxu0 %v1261
      %v1376 = vpop.f32.mrf.mxu0
      %v1377 = vadd.f32 0.0, %v1376
      %1378 = vmatmul.f32.gmra.mxu0 %v1264
      %v1379 = vpop.f32.mrf.mxu0
      %v1380 = vadd.f32 0.0, %v1379
      %1381 = vdwg.mxu0
      %v1383 = vsel %vm1169, %v1105, 0
      %v1386 = vsel %vm1169, %v1106, 0
      %v1389 = vsel %vm894, %v1137, 0
      %1391 = vmatpush.msra.mxu0 0.0
      %1392 = vmatpush.msra.mxu0 0.0
      %1393 = vmatpush.msra.mxu0 0.0
      %1394 = vmatpush.msra.mxu0 0.0
      %1395 = vmatpush.msra.mxu0 0.0
      %1396 = vmatpush.msra.mxu0 0.0
      %1397 = vmatpush.msra.mxu0 0.0
      %1398 = vmatpush.msra.mxu0 0.0
      %1399 = vmatpush.msra.mxu0 0.0
      %1400 = vmatpush.msra.mxu0 0.0
      %1401 = vmatpush.msra.mxu0 0.0
      %1402 = vmatpush.msra.mxu0 0.0
      %1403 = vmatpush.msra.mxu0 0.0
      %1404 = vmatpush.msra.mxu0 0.0
      %1405 = vmatpush.msra.mxu0 0.0
      %1406 = vmatpush.msra.mxu0 %v1389
      %1407 = vmatmul.f32.gmra.mxu0 %v1383
      %v1408 = vpop.f32.mrf.mxu0
      %v1409 = vadd.f32 %v1287, %v1408
      %1410 = vmatmul.f32.gmra.mxu0 %v1386
      %v1411 = vpop.f32.mrf.mxu0
      %v1412 = vadd.f32 %v1290, %v1411
      %1413 = vmatmul.f32.gmra.mxu0 %v1171
      %v1414 = vpop.f32.mrf.mxu0
      %v1415 = vadd.f32 %v1293, %v1414
      %1416 = vmatmul.f32.gmra.mxu0 %v1174
      %v1417 = vpop.f32.mrf.mxu0
      %v1418 = vadd.f32 %v1296, %v1417
      %1419 = vmatmul.f32.gmra.mxu0 %v1177
      %v1420 = vpop.f32.mrf.mxu0
      %v1421 = vadd.f32 %v1299, %v1420
      %1422 = vmatmul.f32.gmra.mxu0 %v1180
      %v1423 = vpop.f32.mrf.mxu0
      %v1424 = vadd.f32 %v1302, %v1423
      %1425 = vmatmul.f32.gmra.mxu0 %v1183
      %v1426 = vpop.f32.mrf.mxu0
      %v1427 = vadd.f32 %v1305, %v1426
      %1428 = vmatmul.f32.gmra.mxu0 %v1186
      %v1429 = vpop.f32.mrf.mxu0
      %v1430 = vadd.f32 %v1308, %v1429
      %1431 = vmatmul.f32.gmra.mxu0 %v1189
      %v1432 = vpop.f32.mrf.mxu0
      %v1433 = vadd.f32 %v1311, %v1432
      %1434 = vmatmul.f32.gmra.mxu0 %v1192
      %v1435 = vpop.f32.mrf.mxu0
      %v1436 = vadd.f32 %v1314, %v1435
      %1437 = vmatmul.f32.gmra.mxu0 %v1195
      %v1438 = vpop.f32.mrf.mxu0
      %v1439 = vadd.f32 %v1317, %v1438
      %1440 = vmatmul.f32.gmra.mxu0 %v1198
      %v1441 = vpop.f32.mrf.mxu0
      %v1442 = vadd.f32 %v1320, %v1441
      %1443 = vmatmul.f32.gmra.mxu0 %v1201
      %v1444 = vpop.f32.mrf.mxu0
      %v1445 = vadd.f32 %v1323, %v1444
      %1446 = vmatmul.f32.gmra.mxu0 %v1204
      %v1447 = vpop.f32.mrf.mxu0
      %v1448 = vadd.f32 %v1326, %v1447
      %1449 = vmatmul.f32.gmra.mxu0 %v1207
      %v1450 = vpop.f32.mrf.mxu0
      %v1451 = vadd.f32 %v1329, %v1450
      %1452 = vmatmul.f32.gmra.mxu0 %v1210
      %v1453 = vpop.f32.mrf.mxu0
      %v1454 = vadd.f32 %v1332, %v1453
      %1455 = vmatmul.f32.gmra.mxu0 %v1213
      %v1456 = vpop.f32.mrf.mxu0
      %v1457 = vadd.f32 %v1335, %v1456
      %1458 = vmatmul.f32.gmra.mxu0 %v1216
      %v1459 = vpop.f32.mrf.mxu0
      %v1460 = vadd.f32 %v1338, %v1459
      %1461 = vmatmul.f32.gmra.mxu0 %v1219
      %v1462 = vpop.f32.mrf.mxu0
      %v1463 = vadd.f32 %v1341, %v1462
      %1464 = vmatmul.f32.gmra.mxu0 %v1222
      %v1465 = vpop.f32.mrf.mxu0
      %v1466 = vadd.f32 %v1344, %v1465
      %1467 = vmatmul.f32.gmra.mxu0 %v1225
      %v1468 = vpop.f32.mrf.mxu0
      %v1469 = vadd.f32 %v1347, %v1468
      %1470 = vmatmul.f32.gmra.mxu0 %v1228
      %v1471 = vpop.f32.mrf.mxu0
      %v1472 = vadd.f32 %v1350, %v1471
      %1473 = vmatmul.f32.gmra.mxu0 %v1231
      %v1474 = vpop.f32.mrf.mxu0
      %v1475 = vadd.f32 %v1353, %v1474
      %1476 = vmatmul.f32.gmra.mxu0 %v1234
      %v1477 = vpop.f32.mrf.mxu0
      %v1478 = vadd.f32 %v1356, %v1477
      %1479 = vmatmul.f32.gmra.mxu0 %v1237
      %v1480 = vpop.f32.mrf.mxu0
      %v1481 = vadd.f32 %v1359, %v1480
      %1482 = vmatmul.f32.gmra.mxu0 %v1240
      %v1483 = vpop.f32.mrf.mxu0
      %v1484 = vadd.f32 %v1362, %v1483
      %1485 = vmatmul.f32.gmra.mxu0 %v1243
      %v1486 = vpop.f32.mrf.mxu0
      %v1487 = vadd.f32 %v1365, %v1486
      %1488 = vmatmul.f32.gmra.mxu0 %v1246
      %v1489 = vpop.f32.mrf.mxu0
      %v1490 = vadd.f32 %v1368, %v1489
      %1491 = vmatmul.f32.gmra.mxu0 %v1249
      %v1492 = vpop.f32.mrf.mxu0
      %v1493 = vadd.f32 %v1371, %v1492
      %1494 = vmatmul.f32.gmra.mxu0 %v1252
      %v1495 = vpop.f32.mrf.mxu0
      %v1496 = vadd.f32 %v1374, %v1495
      %1497 = vmatmul.f32.gmra.mxu0 %v1255
      %v1498 = vpop.f32.mrf.mxu0
      %v1499 = vadd.f32 %v1377, %v1498
      %1500 = vmatmul.f32.gmra.mxu0 %v1258
      %v1501 = vpop.f32.mrf.mxu0
      %v1502 = vadd.f32 %v1380, %v1501
      %1503 = vdwg.mxu0
      %v1507 = vrot.slane %v612, 1
      %v1508 = vrot.slane %v613, 1
      %v1509 = vsel %vm717, %v1507, %v1508
      %v1510 = vrot.slane %v614, 1
      %v1511 = vsel %vm717, %v1508, %v1510
      %1512 = vrot.lane.b32.xlu0 %v1509, 2
      %v1513 = vpop.permute.xlu0 %1512
      %1514 = vrot.lane.b32.xlu0 %v1511, 2
      %v1515 = vpop.permute.xlu0 %1514
      %v1518 = vrot.slane %v612, 2
      %v1519 = vrot.slane %v613, 2
      %v1520 = vsel %vm894, %v1518, %v1519
      %v1521 = vrot.slane %v614, 2
      %v1522 = vsel %vm894, %v1519, %v1521
      %1523 = vrot.lane.b32.xlu0 %v1520, 4
      %v1524 = vpop.permute.xlu0 %1523
      %1525 = vrot.lane.b32.xlu0 %v1522, 4
      %v1526 = vpop.permute.xlu0 %1525
      %v1529 = vsel %vm1071, %v612, %v1513
      %v1530 = vsel %vm1071, %v613, %v1515
      %v1531 = vsel %vm1104, %v1529, %v1524
      %v1532 = vsel %vm1104, %v1530, %v1526
      %s1533 = scalar_lea.vmem %s4, 16
      %v1534 = vld [vmem:[%s1533] sm:$0x3f]
      %v1536 = vsel %vm1169, %v1531, 0
      %v1539 = vsel %vm1169, %v1532, 0
      %v1542 = vsel %vm894, %v1534, 0
      %1544 = vmatpush.msra.mxu0 0.0
      %1545 = vmatpush.msra.mxu0 0.0
      %1546 = vmatpush.msra.mxu0 0.0
      %1547 = vmatpush.msra.mxu0 0.0
      %1548 = vmatpush.msra.mxu0 0.0
      %1549 = vmatpush.msra.mxu0 0.0
      %1550 = vmatpush.msra.mxu0 0.0
      %1551 = vmatpush.msra.mxu0 0.0
      %1552 = vmatpush.msra.mxu0 0.0
      %1553 = vmatpush.msra.mxu0 0.0
      %1554 = vmatpush.msra.mxu0 0.0
      %1555 = vmatpush.msra.mxu0 0.0
      %1556 = vmatpush.msra.mxu0 0.0
      %1557 = vmatpush.msra.mxu0 0.0
      %1558 = vmatpush.msra.mxu0 0.0
      %1559 = vmatpush.msra.mxu0 %v1542
      %1560 = vmatmul.f32.gmra.mxu0 %v1177
      %v1561 = vpop.f32.mrf.mxu0
      %v1562 = vadd.f32 0.0, %v1561
      %1563 = vmatmul.f32.gmra.mxu0 %v1180
      %v1564 = vpop.f32.mrf.mxu0
      %v1565 = vadd.f32 0.0, %v1564
      %1566 = vmatmul.f32.gmra.mxu0 %v1183
      %v1567 = vpop.f32.mrf.mxu0
      %v1568 = vadd.f32 0.0, %v1567
      %1569 = vmatmul.f32.gmra.mxu0 %v1186
      %v1570 = vpop.f32.mrf.mxu0
      %v1571 = vadd.f32 0.0, %v1570
      %1572 = vmatmul.f32.gmra.mxu0 %v1189
      %v1573 = vpop.f32.mrf.mxu0
      %v1574 = vadd.f32 0.0, %v1573
      %1575 = vmatmul.f32.gmra.mxu0 %v1192
      %v1576 = vpop.f32.mrf.mxu0
      %v1577 = vadd.f32 0.0, %v1576
      %1578 = vmatmul.f32.gmra.mxu0 %v1195
      %v1579 = vpop.f32.mrf.mxu0
      %v1580 = vadd.f32 0.0, %v1579
      %1581 = vmatmul.f32.gmra.mxu0 %v1198
      %v1582 = vpop.f32.mrf.mxu0
      %v1583 = vadd.f32 0.0, %v1582
      %1584 = vmatmul.f32.gmra.mxu0 %v1201
      %v1585 = vpop.f32.mrf.mxu0
      %v1586 = vadd.f32 0.0, %v1585
      %1587 = vmatmul.f32.gmra.mxu0 %v1204
      %v1588 = vpop.f32.mrf.mxu0
      %v1589 = vadd.f32 0.0, %v1588
      %1590 = vmatmul.f32.gmra.mxu0 %v1207
      %v1591 = vpop.f32.mrf.mxu0
      %v1592 = vadd.f32 0.0, %v1591
      %1593 = vmatmul.f32.gmra.mxu0 %v1210
      %v1594 = vpop.f32.mrf.mxu0
      %v1595 = vadd.f32 0.0, %v1594
      %1596 = vmatmul.f32.gmra.mxu0 %v1213
      %v1597 = vpop.f32.mrf.mxu0
      %v1598 = vadd.f32 0.0, %v1597
      %1599 = vmatmul.f32.gmra.mxu0 %v1216
      %v1600 = vpop.f32.mrf.mxu0
      %v1601 = vadd.f32 0.0, %v1600
      %1602 = vmatmul.f32.gmra.mxu0 %v1219
      %v1603 = vpop.f32.mrf.mxu0
      %v1604 = vadd.f32 0.0, %v1603
      %1605 = vmatmul.f32.gmra.mxu0 %v1222
      %v1606 = vpop.f32.mrf.mxu0
      %v1607 = vadd.f32 0.0, %v1606
      %1608 = vmatmul.f32.gmra.mxu0 %v1225
      %v1609 = vpop.f32.mrf.mxu0
      %v1610 = vadd.f32 0.0, %v1609
      %1611 = vmatmul.f32.gmra.mxu0 %v1228
      %v1612 = vpop.f32.mrf.mxu0
      %v1613 = vadd.f32 0.0, %v1612
      %1614 = vmatmul.f32.gmra.mxu0 %v1231
      %v1615 = vpop.f32.mrf.mxu0
      %v1616 = vadd.f32 0.0, %v1615
      %1617 = vmatmul.f32.gmra.mxu0 %v1234
      %v1618 = vpop.f32.mrf.mxu0
      %v1619 = vadd.f32 0.0, %v1618
      %1620 = vmatmul.f32.gmra.mxu0 %v1237
      %v1621 = vpop.f32.mrf.mxu0
      %v1622 = vadd.f32 0.0, %v1621
      %1623 = vmatmul.f32.gmra.mxu0 %v1240
      %v1624 = vpop.f32.mrf.mxu0
      %v1625 = vadd.f32 0.0, %v1624
      %1626 = vmatmul.f32.gmra.mxu0 %v1243
      %v1627 = vpop.f32.mrf.mxu0
      %v1628 = vadd.f32 0.0, %v1627
      %1629 = vmatmul.f32.gmra.mxu0 %v1246
      %v1630 = vpop.f32.mrf.mxu0
      %v1631 = vadd.f32 0.0, %v1630
      %1632 = vmatmul.f32.gmra.mxu0 %v1249
      %v1633 = vpop.f32.mrf.mxu0
      %v1634 = vadd.f32 0.0, %v1633
      %1635 = vmatmul.f32.gmra.mxu0 %v1252
      %v1636 = vpop.f32.mrf.mxu0
      %v1637 = vadd.f32 0.0, %v1636
      %1638 = vmatmul.f32.gmra.mxu0 %v1255
      %v1639 = vpop.f32.mrf.mxu0
      %v1640 = vadd.f32 0.0, %v1639
      %1641 = vmatmul.f32.gmra.mxu0 %v1258
      %v1642 = vpop.f32.mrf.mxu0
      %v1643 = vadd.f32 0.0, %v1642
      %1644 = vmatmul.f32.gmra.mxu0 %v1261
      %v1645 = vpop.f32.mrf.mxu0
      %v1646 = vadd.f32 0.0, %v1645
      %1647 = vmatmul.f32.gmra.mxu0 %v1264
      %v1648 = vpop.f32.mrf.mxu0
      %v1649 = vadd.f32 0.0, %v1648
      %1650 = vmatmul.f32.gmra.mxu0 %v1536
      %v1651 = vpop.f32.mrf.mxu0
      %v1652 = vadd.f32 0.0, %v1651
      %1653 = vmatmul.f32.gmra.mxu0 %v1539
      %v1654 = vpop.f32.mrf.mxu0
      %v1655 = vadd.f32 0.0, %v1654
      %1656 = vdwg.mxu0
      %v1657 = vadd.f32 %v1409, %v1562
      %v1658 = vadd.f32 %v1412, %v1565
      %v1659 = vadd.f32 %v1415, %v1568
      %v1660 = vadd.f32 %v1418, %v1571
      %v1661 = vadd.f32 %v1421, %v1574
      %v1662 = vadd.f32 %v1424, %v1577
      %v1663 = vadd.f32 %v1427, %v1580
      %v1664 = vadd.f32 %v1430, %v1583
      %v1665 = vadd.f32 %v1433, %v1586
      %v1666 = vadd.f32 %v1436, %v1589
      %v1667 = vadd.f32 %v1439, %v1592
      %v1668 = vadd.f32 %v1442, %v1595
      %v1669 = vadd.f32 %v1445, %v1598
      %v1670 = vadd.f32 %v1448, %v1601
      %v1671 = vadd.f32 %v1451, %v1604
      %v1672 = vadd.f32 %v1454, %v1607
      %v1673 = vadd.f32 %v1457, %v1610
      %v1674 = vadd.f32 %v1460, %v1613
      %v1675 = vadd.f32 %v1463, %v1616
      %v1676 = vadd.f32 %v1466, %v1619
      %v1677 = vadd.f32 %v1469, %v1622
      %v1678 = vadd.f32 %v1472, %v1625
      %v1679 = vadd.f32 %v1475, %v1628
      %v1680 = vadd.f32 %v1478, %v1631
      %v1681 = vadd.f32 %v1481, %v1634
      %v1682 = vadd.f32 %v1484, %v1637
      %v1683 = vadd.f32 %v1487, %v1640
      %v1684 = vadd.f32 %v1490, %v1643
      %v1685 = vadd.f32 %v1493, %v1646
      %v1686 = vadd.f32 %v1496, %v1649
      %v1687 = vadd.f32 %v1499, %v1652
      %v1688 = vadd.f32 %v1502, %v1655
      %v1737 = vrot.slane %v615, 1
      %v1738 = vrot.slane %v616, 1
      %v1739 = vsel %vm717, %v1737, %v1738
      %v1740 = vrot.slane %v617, 1
      %v1741 = vsel %vm717, %v1738, %v1740
      %v1742 = vrot.slane %v618, 1
      %v1743 = vrot.slane %v619, 1
      %v1744 = vsel %vm717, %v1742, %v1743
      %v1745 = vrot.slane %v620, 1
      %v1746 = vsel %vm717, %v1743, %v1745
      %v1747 = vrot.slane %v621, 1
      %v1748 = vrot.slane %v622, 1
      %v1749 = vsel %vm717, %v1747, %v1748
      %v1750 = vrot.slane %v623, 1
      %v1751 = vsel %vm717, %v1748, %v1750
      %v1752 = vrot.slane %v624, 1
      %v1753 = vrot.slane %v625, 1
      %v1754 = vsel %vm717, %v1752, %v1753
      %v1755 = vrot.slane %v626, 1
      %v1756 = vsel %vm717, %v1753, %v1755
      %v1757 = vrot.slane %v627, 1
      %v1758 = vrot.slane %v628, 1
      %v1759 = vsel %vm717, %v1757, %v1758
      %v1760 = vrot.slane %v629, 1
      %v1761 = vsel %vm717, %v1758, %v1760
      %v1762 = vrot.slane %v630, 1
      %v1763 = vrot.slane %v631, 1
      %v1764 = vsel %vm717, %v1762, %v1763
      %v1765 = vrot.slane %v632, 1
      %v1766 = vsel %vm717, %v1763, %v1765
      %v1767 = vrot.slane %v633, 1
      %v1768 = vrot.slane %v634, 1
      %v1769 = vsel %vm717, %v1767, %v1768
      %v1770 = vrot.slane %v635, 1
      %v1771 = vsel %vm717, %v1768, %v1770
      %v1772 = vrot.slane %v636, 1
      %v1773 = vrot.slane %v637, 1
      %v1774 = vsel %vm717, %v1772, %v1773
      %v1775 = vrot.slane %v638, 1
      %v1776 = vsel %vm717, %v1773, %v1775
      %v1777 = vrot.slane %v639, 1
      %v1778 = vrot.slane %v640, 1
      %v1779 = vsel %vm717, %v1777, %v1778
      %v1780 = vrot.slane %v641, 1
      %v1781 = vsel %vm717, %v1778, %v1780
      %v1782 = vrot.slane %v642, 1
      %v1783 = vrot.slane %v643, 1
      %v1784 = vsel %vm717, %v1782, %v1783
      %v1785 = vrot.slane %v644, 1
      %v1786 = vsel %vm717, %v1783, %v1785
      %v1787 = vrot.slane %v645, 1
      %v1788 = vrot.slane %v646, 1
      %v1789 = vsel %vm717, %v1787, %v1788
      %v1790 = vrot.slane %v647, 1
      %v1791 = vsel %vm717, %v1788, %v1790
      %v1792 = vrot.slane %v648, 1
      %v1793 = vrot.slane %v649, 1
      %v1794 = vsel %vm717, %v1792, %v1793
      %v1795 = vrot.slane %v650, 1
      %v1796 = vsel %vm717, %v1793, %v1795
      %v1797 = vrot.slane %v651, 1
      %v1798 = vrot.slane %v652, 1
      %v1799 = vsel %vm717, %v1797, %v1798
      %v1800 = vrot.slane %v653, 1
      %v1801 = vsel %vm717, %v1798, %v1800
      %v1802 = vrot.slane %v654, 1
      %v1803 = vrot.slane %v655, 1
      %v1804 = vsel %vm717, %v1802, %v1803
      %v1805 = vrot.slane %v656, 1
      %v1806 = vsel %vm717, %v1803, %v1805
      %v1807 = vrot.slane %v657, 1
      %v1808 = vrot.slane %v658, 1
      %v1809 = vsel %vm717, %v1807, %v1808
      %v1810 = vrot.slane %v659, 1
      %v1811 = vsel %vm717, %v1808, %v1810
      %v1812 = vrot.slane %v660, 1
      %v1813 = vrot.slane %v661, 1
      %v1814 = vsel %vm717, %v1812, %v1813
      %v1815 = vrot.slane %v662, 1
      %v1816 = vsel %vm717, %v1813, %v1815
      %1817 = vrot.lane.b32.xlu0 %v1739, 2
      %v1818 = vpop.permute.xlu0 %1817
      %1819 = vrot.lane.b32.xlu0 %v1741, 2
      %v1820 = vpop.permute.xlu0 %1819
      %1821 = vrot.lane.b32.xlu0 %v1744, 2
      %v1822 = vpop.permute.xlu0 %1821
      %1823 = vrot.lane.b32.xlu0 %v1746, 2
      %v1824 = vpop.permute.xlu0 %1823
      %1825 = vrot.lane.b32.xlu0 %v1749, 2
      %v1826 = vpop.permute.xlu0 %1825
      %1827 = vrot.lane.b32.xlu0 %v1751, 2
      %v1828 = vpop.permute.xlu0 %1827
      %1829 = vrot.lane.b32.xlu0 %v1754, 2
      %v1830 = vpop.permute.xlu0 %1829
      %1831 = vrot.lane.b32.xlu0 %v1756, 2
      %v1832 = vpop.permute.xlu0 %1831
      %1833 = vrot.lane.b32.xlu0 %v1759, 2
      %v1834 = vpop.permute.xlu0 %1833
      %1835 = vrot.lane.b32.xlu0 %v1761, 2
      %v1836 = vpop.permute.xlu0 %1835
      %1837 = vrot.lane.b32.xlu0 %v1764, 2
      %v1838 = vpop.permute.xlu0 %1837
      %1839 = vrot.lane.b32.xlu0 %v1766, 2
      %v1840 = vpop.permute.xlu0 %1839
      %1841 = vrot.lane.b32.xlu0 %v1769, 2
      %v1842 = vpop.permute.xlu0 %1841
      %1843 = vrot.lane.b32.xlu0 %v1771, 2
      %v1844 = vpop.permute.xlu0 %1843
      %1845 = vrot.lane.b32.xlu0 %v1774, 2
      %v1846 = vpop.permute.xlu0 %1845
      %1847 = vrot.lane.b32.xlu0 %v1776, 2
      %v1848 = vpop.permute.xlu0 %1847
      %1849 = vrot.lane.b32.xlu0 %v1779, 2
      %v1850 = vpop.permute.xlu0 %1849
      %1851 = vrot.lane.b32.xlu0 %v1781, 2
      %v1852 = vpop.permute.xlu0 %1851
      %1853 = vrot.lane.b32.xlu0 %v1784, 2
      %v1854 = vpop.permute.xlu0 %1853
      %1855 = vrot.lane.b32.xlu0 %v1786, 2
      %v1856 = vpop.permute.xlu0 %1855
      %1857 = vrot.lane.b32.xlu0 %v1789, 2
      %v1858 = vpop.permute.xlu0 %1857
      %1859 = vrot.lane.b32.xlu0 %v1791, 2
      %v1860 = vpop.permute.xlu0 %1859
      %1861 = vrot.lane.b32.xlu0 %v1794, 2
      %v1862 = vpop.permute.xlu0 %1861
      %1863 = vrot.lane.b32.xlu0 %v1796, 2
      %v1864 = vpop.permute.xlu0 %1863
      %1865 = vrot.lane.b32.xlu0 %v1799, 2
      %v1866 = vpop.permute.xlu0 %1865
      %1867 = vrot.lane.b32.xlu0 %v1801, 2
      %v1868 = vpop.permute.xlu0 %1867
      %1869 = vrot.lane.b32.xlu0 %v1804, 2
      %v1870 = vpop.permute.xlu0 %1869
      %1871 = vrot.lane.b32.xlu0 %v1806, 2
      %v1872 = vpop.permute.xlu0 %1871
      %1873 = vrot.lane.b32.xlu0 %v1809, 2
      %v1874 = vpop.permute.xlu0 %1873
      %1875 = vrot.lane.b32.xlu0 %v1811, 2
      %v1876 = vpop.permute.xlu0 %1875
      %1877 = vrot.lane.b32.xlu0 %v1814, 2
      %v1878 = vpop.permute.xlu0 %1877
      %1879 = vrot.lane.b32.xlu0 %v1816, 2
      %v1880 = vpop.permute.xlu0 %1879
      %v1913 = vrot.slane %v615, 2
      %v1914 = vrot.slane %v616, 2
      %v1915 = vsel %vm894, %v1913, %v1914
      %v1916 = vrot.slane %v617, 2
      %v1917 = vsel %vm894, %v1914, %v1916
      %v1918 = vrot.slane %v618, 2
      %v1919 = vrot.slane %v619, 2
      %v1920 = vsel %vm894, %v1918, %v1919
      %v1921 = vrot.slane %v620, 2
      %v1922 = vsel %vm894, %v1919, %v1921
      %v1923 = vrot.slane %v621, 2
      %v1924 = vrot.slane %v622, 2
      %v1925 = vsel %vm894, %v1923, %v1924
      %v1926 = vrot.slane %v623, 2
      %v1927 = vsel %vm894, %v1924, %v1926
      %v1928 = vrot.slane %v624, 2
      %v1929 = vrot.slane %v625, 2
      %v1930 = vsel %vm894, %v1928, %v1929
      %v1931 = vrot.slane %v626, 2
      %v1932 = vsel %vm894, %v1929, %v1931
      %v1933 = vrot.slane %v627, 2
      %v1934 = vrot.slane %v628, 2
      %v1935 = vsel %vm894, %v1933, %v1934
      %v1936 = vrot.slane %v629, 2
      %v1937 = vsel %vm894, %v1934, %v1936
      %v1938 = vrot.slane %v630, 2
      %v1939 = vrot.slane %v631, 2
      %v1940 = vsel %vm894, %v1938, %v1939
      %v1941 = vrot.slane %v632, 2
      %v1942 = vsel %vm894, %v1939, %v1941
      %v1943 = vrot.slane %v633, 2
      %v1944 = vrot.slane %v634, 2
      %v1945 = vsel %vm894, %v1943, %v1944
      %v1946 = vrot.slane %v635, 2
      %v1947 = vsel %vm894, %v1944, %v1946
      %v1948 = vrot.slane %v636, 2
      %v1949 = vrot.slane %v637, 2
      %v1950 = vsel %vm894, %v1948, %v1949
      %v1951 = vrot.slane %v638, 2
      %v1952 = vsel %vm894, %v1949, %v1951
      %v1953 = vrot.slane %v639, 2
      %v1954 = vrot.slane %v640, 2
      %v1955 = vsel %vm894, %v1953, %v1954
      %v1956 = vrot.slane %v641, 2
      %v1957 = vsel %vm894, %v1954, %v1956
      %v1958 = vrot.slane %v642, 2
      %v1959 = vrot.slane %v643, 2
      %v1960 = vsel %vm894, %v1958, %v1959
      %v1961 = vrot.slane %v644, 2
      %v1962 = vsel %vm894, %v1959, %v1961
      %v1963 = vrot.slane %v645, 2
      %v1964 = vrot.slane %v646, 2
      %v1965 = vsel %vm894, %v1963, %v1964
      %v1966 = vrot.slane %v647, 2
      %v1967 = vsel %vm894, %v1964, %v1966
      %v1968 = vrot.slane %v648, 2
      %v1969 = vrot.slane %v649, 2
      %v1970 = vsel %vm894, %v1968, %v1969
      %v1971 = vrot.slane %v650, 2
      %v1972 = vsel %vm894, %v1969, %v1971
      %v1973 = vrot.slane %v651, 2
      %v1974 = vrot.slane %v652, 2
      %v1975 = vsel %vm894, %v1973, %v1974
      %v1976 = vrot.slane %v653, 2
      %v1977 = vsel %vm894, %v1974, %v1976
      %v1978 = vrot.slane %v654, 2
      %v1979 = vrot.slane %v655, 2
      %v1980 = vsel %vm894, %v1978, %v1979
      %v1981 = vrot.slane %v656, 2
      %v1982 = vsel %vm894, %v1979, %v1981
      %v1983 = vrot.slane %v657, 2
      %v1984 = vrot.slane %v658, 2
      %v1985 = vsel %vm894, %v1983, %v1984
      %v1986 = vrot.slane %v659, 2
      %v1987 = vsel %vm894, %v1984, %v1986
      %v1988 = vrot.slane %v660, 2
      %v1989 = vrot.slane %v661, 2
      %v1990 = vsel %vm894, %v1988, %v1989
      %v1991 = vrot.slane %v662, 2
      %v1992 = vsel %vm894, %v1989, %v1991
      %1993 = vrot.lane.b32.xlu0 %v1915, 4
      %v1994 = vpop.permute.xlu0 %1993
      %1995 = vrot.lane.b32.xlu0 %v1917, 4
      %v1996 = vpop.permute.xlu0 %1995
      %1997 = vrot.lane.b32.xlu0 %v1920, 4
      %v1998 = vpop.permute.xlu0 %1997
      %1999 = vrot.lane.b32.xlu0 %v1922, 4
      %v2000 = vpop.permute.xlu0 %1999
      %2001 = vrot.lane.b32.xlu0 %v1925, 4
      %v2002 = vpop.permute.xlu0 %2001
      %2003 = vrot.lane.b32.xlu0 %v1927, 4
      %v2004 = vpop.permute.xlu0 %2003
      %2005 = vrot.lane.b32.xlu0 %v1930, 4
      %v2006 = vpop.permute.xlu0 %2005
      %2007 = vrot.lane.b32.xlu0 %v1932, 4
      %v2008 = vpop.permute.xlu0 %2007
      %2009 = vrot.lane.b32.xlu0 %v1935, 4
      %v2010 = vpop.permute.xlu0 %2009
      %2011 = vrot.lane.b32.xlu0 %v1937, 4
      %v2012 = vpop.permute.xlu0 %2011
      %2013 = vrot.lane.b32.xlu0 %v1940, 4
      %v2014 = vpop.permute.xlu0 %2013
      %2015 = vrot.lane.b32.xlu0 %v1942, 4
      %v2016 = vpop.permute.xlu0 %2015
      %2017 = vrot.lane.b32.xlu0 %v1945, 4
      %v2018 = vpop.permute.xlu0 %2017
      %2019 = vrot.lane.b32.xlu0 %v1947, 4
      %v2020 = vpop.permute.xlu0 %2019
      %2021 = vrot.lane.b32.xlu0 %v1950, 4
      %v2022 = vpop.permute.xlu0 %2021
      %2023 = vrot.lane.b32.xlu0 %v1952, 4
      %v2024 = vpop.permute.xlu0 %2023
      %2025 = vrot.lane.b32.xlu0 %v1955, 4
      %v2026 = vpop.permute.xlu0 %2025
      %2027 = vrot.lane.b32.xlu0 %v1957, 4
      %v2028 = vpop.permute.xlu0 %2027
      %2029 = vrot.lane.b32.xlu0 %v1960, 4
      %v2030 = vpop.permute.xlu0 %2029
      %2031 = vrot.lane.b32.xlu0 %v1962, 4
      %v2032 = vpop.permute.xlu0 %2031
      %2033 = vrot.lane.b32.xlu0 %v1965, 4
      %v2034 = vpop.permute.xlu0 %2033
      %2035 = vrot.lane.b32.xlu0 %v1967, 4
      %v2036 = vpop.permute.xlu0 %2035
      %2037 = vrot.lane.b32.xlu0 %v1970, 4
      %v2038 = vpop.permute.xlu0 %2037
      %2039 = vrot.lane.b32.xlu0 %v1972, 4
      %v2040 = vpop.permute.xlu0 %2039
      %2041 = vrot.lane.b32.xlu0 %v1975, 4
      %v2042 = vpop.permute.xlu0 %2041
      %2043 = vrot.lane.b32.xlu0 %v1977, 4
      %v2044 = vpop.permute.xlu0 %2043
      %2045 = vrot.lane.b32.xlu0 %v1980, 4
      %v2046 = vpop.permute.xlu0 %2045
      %2047 = vrot.lane.b32.xlu0 %v1982, 4
      %v2048 = vpop.permute.xlu0 %2047
      %2049 = vrot.lane.b32.xlu0 %v1985, 4
      %v2050 = vpop.permute.xlu0 %2049
      %2051 = vrot.lane.b32.xlu0 %v1987, 4
      %v2052 = vpop.permute.xlu0 %2051
      %2053 = vrot.lane.b32.xlu0 %v1990, 4
      %v2054 = vpop.permute.xlu0 %2053
      %2055 = vrot.lane.b32.xlu0 %v1992, 4
      %v2056 = vpop.permute.xlu0 %2055
      %v2089 = vsel %vm1071, %v615, %v1818
      %v2090 = vsel %vm1071, %v616, %v1820
      %v2091 = vsel %vm1071, %v618, %v1822
      %v2092 = vsel %vm1071, %v619, %v1824
      %v2093 = vsel %vm1071, %v621, %v1826
      %v2094 = vsel %vm1071, %v622, %v1828
      %v2095 = vsel %vm1071, %v624, %v1830
      %v2096 = vsel %vm1071, %v625, %v1832
      %v2097 = vsel %vm1071, %v627, %v1834
      %v2098 = vsel %vm1071, %v628, %v1836
      %v2099 = vsel %vm1071, %v630, %v1838
      %v2100 = vsel %vm1071, %v631, %v1840
      %v2101 = vsel %vm1071, %v633, %v1842
      %v2102 = vsel %vm1071, %v634, %v1844
      %v2103 = vsel %vm1071, %v636, %v1846
      %v2104 = vsel %vm1071, %v637, %v1848
      %v2105 = vsel %vm1071, %v639, %v1850
      %v2106 = vsel %vm1071, %v640, %v1852
      %v2107 = vsel %vm1071, %v642, %v1854
      %v2108 = vsel %vm1071, %v643, %v1856
      %v2109 = vsel %vm1071, %v645, %v1858
      %v2110 = vsel %vm1071, %v646, %v1860
      %v2111 = vsel %vm1071, %v648, %v1862
      %v2112 = vsel %vm1071, %v649, %v1864
      %v2113 = vsel %vm1071, %v651, %v1866
      %v2114 = vsel %vm1071, %v652, %v1868
      %v2115 = vsel %vm1071, %v654, %v1870
      %v2116 = vsel %vm1071, %v655, %v1872
      %v2117 = vsel %vm1071, %v657, %v1874
      %v2118 = vsel %vm1071, %v658, %v1876
      %v2119 = vsel %vm1071, %v660, %v1878
      %v2120 = vsel %vm1071, %v661, %v1880
      %v2121 = vsel %vm1104, %v2089, %v1994
      %v2122 = vsel %vm1104, %v2090, %v1996
      %v2123 = vsel %vm1104, %v2091, %v1998
      %v2124 = vsel %vm1104, %v2092, %v2000
      %v2125 = vsel %vm1104, %v2093, %v2002
      %v2126 = vsel %vm1104, %v2094, %v2004
      %v2127 = vsel %vm1104, %v2095, %v2006
      %v2128 = vsel %vm1104, %v2096, %v2008
      %v2129 = vsel %vm1104, %v2097, %v2010
      %v2130 = vsel %vm1104, %v2098, %v2012
      %v2131 = vsel %vm1104, %v2099, %v2014
      %v2132 = vsel %vm1104, %v2100, %v2016
      %v2133 = vsel %vm1104, %v2101, %v2018
      %v2134 = vsel %vm1104, %v2102, %v2020
      %v2135 = vsel %vm1104, %v2103, %v2022
      %v2136 = vsel %vm1104, %v2104, %v2024
      %v2137 = vsel %vm1104, %v2105, %v2026
      %v2138 = vsel %vm1104, %v2106, %v2028
      %v2139 = vsel %vm1104, %v2107, %v2030
      %v2140 = vsel %vm1104, %v2108, %v2032
      %v2141 = vsel %vm1104, %v2109, %v2034
      %v2142 = vsel %vm1104, %v2110, %v2036
      %v2143 = vsel %vm1104, %v2111, %v2038
      %v2144 = vsel %vm1104, %v2112, %v2040
      %v2145 = vsel %vm1104, %v2113, %v2042
      %v2146 = vsel %vm1104, %v2114, %v2044
      %v2147 = vsel %vm1104, %v2115, %v2046
      %v2148 = vsel %vm1104, %v2116, %v2048
      %v2149 = vsel %vm1104, %v2117, %v2050
      %v2150 = vsel %vm1104, %v2118, %v2052
      %v2151 = vsel %vm1104, %v2119, %v2054
      %v2152 = vsel %vm1104, %v2120, %v2056
      %v2153 = vld [vmem:[%s5] sm:$0x3f]
      %v2155 = vsel %vm1169, %v2121, 0
      %v2158 = vsel %vm1169, %v2122, 0
      %v2161 = vsel %vm1169, %v2123, 0
      %v2164 = vsel %vm1169, %v2124, 0
      %v2167 = vsel %vm1169, %v2125, 0
      %v2170 = vsel %vm1169, %v2126, 0
      %v2173 = vsel %vm1169, %v2127, 0
      %v2176 = vsel %vm1169, %v2128, 0
      %v2179 = vsel %vm1169, %v2129, 0
      %v2182 = vsel %vm1169, %v2130, 0
      %v2185 = vsel %vm1169, %v2131, 0
      %v2188 = vsel %vm1169, %v2132, 0
      %v2191 = vsel %vm1169, %v2133, 0
      %v2194 = vsel %vm1169, %v2134, 0
      %v2197 = vsel %vm1169, %v2135, 0
      %v2200 = vsel %vm1169, %v2136, 0
      %v2203 = vsel %vm1169, %v2137, 0
      %v2206 = vsel %vm1169, %v2138, 0
      %v2209 = vsel %vm1169, %v2139, 0
      %v2212 = vsel %vm1169, %v2140, 0
      %v2215 = vsel %vm1169, %v2141, 0
      %v2218 = vsel %vm1169, %v2142, 0
      %v2221 = vsel %vm1169, %v2143, 0
      %v2224 = vsel %vm1169, %v2144, 0
      %v2227 = vsel %vm1169, %v2145, 0
      %v2230 = vsel %vm1169, %v2146, 0
      %v2233 = vsel %vm1169, %v2147, 0
      %v2236 = vsel %vm1169, %v2148, 0
      %v2239 = vsel %vm1169, %v2149, 0
      %v2242 = vsel %vm1169, %v2150, 0
      %v2245 = vsel %vm1169, %v2151, 0
      %v2248 = vsel %vm1169, %v2152, 0
      %v2251 = vsel %vm894, %v2153, 0
      %2253 = vmatpush.msra.mxu0 0.0
      %2254 = vmatpush.msra.mxu0 0.0
      %2255 = vmatpush.msra.mxu0 0.0
      %2256 = vmatpush.msra.mxu0 0.0
      %2257 = vmatpush.msra.mxu0 0.0
      %2258 = vmatpush.msra.mxu0 0.0
      %2259 = vmatpush.msra.mxu0 0.0
      %2260 = vmatpush.msra.mxu0 0.0
      %2261 = vmatpush.msra.mxu0 0.0
      %2262 = vmatpush.msra.mxu0 0.0
      %2263 = vmatpush.msra.mxu0 0.0
      %2264 = vmatpush.msra.mxu0 0.0
      %2265 = vmatpush.msra.mxu0 0.0
      %2266 = vmatpush.msra.mxu0 0.0
      %2267 = vmatpush.msra.mxu0 0.0
      %2268 = vmatpush.msra.mxu0 %v2251
      %2269 = vmatmul.f32.gmra.mxu0 %v2155
      %v2270 = vpop.f32.mrf.mxu0
      %v2271 = vadd.f32 0.0, %v2270
      %2272 = vmatmul.f32.gmra.mxu0 %v2158
      %v2273 = vpop.f32.mrf.mxu0
      %v2274 = vadd.f32 0.0, %v2273
      %2275 = vmatmul.f32.gmra.mxu0 %v2161
      %v2276 = vpop.f32.mrf.mxu0
      %v2277 = vadd.f32 0.0, %v2276
      %2278 = vmatmul.f32.gmra.mxu0 %v2164
      %v2279 = vpop.f32.mrf.mxu0
      %v2280 = vadd.f32 0.0, %v2279
      %2281 = vmatmul.f32.gmra.mxu0 %v2167
      %v2282 = vpop.f32.mrf.mxu0
      %v2283 = vadd.f32 0.0, %v2282
      %2284 = vmatmul.f32.gmra.mxu0 %v2170
      %v2285 = vpop.f32.mrf.mxu0
      %v2286 = vadd.f32 0.0, %v2285
      %2287 = vmatmul.f32.gmra.mxu0 %v2173
      %v2288 = vpop.f32.mrf.mxu0
      %v2289 = vadd.f32 0.0, %v2288
      %2290 = vmatmul.f32.gmra.mxu0 %v2176
      %v2291 = vpop.f32.mrf.mxu0
      %v2292 = vadd.f32 0.0, %v2291
      %2293 = vmatmul.f32.gmra.mxu0 %v2179
      %v2294 = vpop.f32.mrf.mxu0
      %v2295 = vadd.f32 0.0, %v2294
      %2296 = vmatmul.f32.gmra.mxu0 %v2182
      %v2297 = vpop.f32.mrf.mxu0
      %v2298 = vadd.f32 0.0, %v2297
      %2299 = vmatmul.f32.gmra.mxu0 %v2185
      %v2300 = vpop.f32.mrf.mxu0
      %v2301 = vadd.f32 0.0, %v2300
      %2302 = vmatmul.f32.gmra.mxu0 %v2188
      %v2303 = vpop.f32.mrf.mxu0
      %v2304 = vadd.f32 0.0, %v2303
      %2305 = vmatmul.f32.gmra.mxu0 %v2191
      %v2306 = vpop.f32.mrf.mxu0
      %v2307 = vadd.f32 0.0, %v2306
      %2308 = vmatmul.f32.gmra.mxu0 %v2194
      %v2309 = vpop.f32.mrf.mxu0
      %v2310 = vadd.f32 0.0, %v2309
      %2311 = vmatmul.f32.gmra.mxu0 %v2197
      %v2312 = vpop.f32.mrf.mxu0
      %v2313 = vadd.f32 0.0, %v2312
      %2314 = vmatmul.f32.gmra.mxu0 %v2200
      %v2315 = vpop.f32.mrf.mxu0
      %v2316 = vadd.f32 0.0, %v2315
      %2317 = vmatmul.f32.gmra.mxu0 %v2203
      %v2318 = vpop.f32.mrf.mxu0
      %v2319 = vadd.f32 0.0, %v2318
      %2320 = vmatmul.f32.gmra.mxu0 %v2206
      %v2321 = vpop.f32.mrf.mxu0
      %v2322 = vadd.f32 0.0, %v2321
      %2323 = vmatmul.f32.gmra.mxu0 %v2209
      %v2324 = vpop.f32.mrf.mxu0
      %v2325 = vadd.f32 0.0, %v2324
      %2326 = vmatmul.f32.gmra.mxu0 %v2212
      %v2327 = vpop.f32.mrf.mxu0
      %v2328 = vadd.f32 0.0, %v2327
      %2329 = vmatmul.f32.gmra.mxu0 %v2215
      %v2330 = vpop.f32.mrf.mxu0
      %v2331 = vadd.f32 0.0, %v2330
      %2332 = vmatmul.f32.gmra.mxu0 %v2218
      %v2333 = vpop.f32.mrf.mxu0
      %v2334 = vadd.f32 0.0, %v2333
      %2335 = vmatmul.f32.gmra.mxu0 %v2221
      %v2336 = vpop.f32.mrf.mxu0
      %v2337 = vadd.f32 0.0, %v2336
      %2338 = vmatmul.f32.gmra.mxu0 %v2224
      %v2339 = vpop.f32.mrf.mxu0
      %v2340 = vadd.f32 0.0, %v2339
      %2341 = vmatmul.f32.gmra.mxu0 %v2227
      %v2342 = vpop.f32.mrf.mxu0
      %v2343 = vadd.f32 0.0, %v2342
      %2344 = vmatmul.f32.gmra.mxu0 %v2230
      %v2345 = vpop.f32.mrf.mxu0
      %v2346 = vadd.f32 0.0, %v2345
      %2347 = vmatmul.f32.gmra.mxu0 %v2233
      %v2348 = vpop.f32.mrf.mxu0
      %v2349 = vadd.f32 0.0, %v2348
      %2350 = vmatmul.f32.gmra.mxu0 %v2236
      %v2351 = vpop.f32.mrf.mxu0
      %v2352 = vadd.f32 0.0, %v2351
      %2353 = vmatmul.f32.gmra.mxu0 %v2239
      %v2354 = vpop.f32.mrf.mxu0
      %v2355 = vadd.f32 0.0, %v2354
      %2356 = vmatmul.f32.gmra.mxu0 %v2242
      %v2357 = vpop.f32.mrf.mxu0
      %v2358 = vadd.f32 0.0, %v2357
      %2359 = vmatmul.f32.gmra.mxu0 %v2245
      %v2360 = vpop.f32.mrf.mxu0
      %v2361 = vadd.f32 0.0, %v2360
      %2362 = vmatmul.f32.gmra.mxu0 %v2248
      %v2363 = vpop.f32.mrf.mxu0
      %v2364 = vadd.f32 0.0, %v2363
      %2365 = vdwg.mxu0
      %v2366 = vadd.f32 %v1657, %v2271
      %v2367 = vadd.f32 %v1658, %v2274
      %v2368 = vadd.f32 %v1659, %v2277
      %v2369 = vadd.f32 %v1660, %v2280
      %v2370 = vadd.f32 %v1661, %v2283
      %v2371 = vadd.f32 %v1662, %v2286
      %v2372 = vadd.f32 %v1663, %v2289
      %v2373 = vadd.f32 %v1664, %v2292
      %v2374 = vadd.f32 %v1665, %v2295
      %v2375 = vadd.f32 %v1666, %v2298
      %v2376 = vadd.f32 %v1667, %v2301
      %v2377 = vadd.f32 %v1668, %v2304
      %v2378 = vadd.f32 %v1669, %v2307
      %v2379 = vadd.f32 %v1670, %v2310
      %v2380 = vadd.f32 %v1671, %v2313
      %v2381 = vadd.f32 %v1672, %v2316
      %v2382 = vadd.f32 %v1673, %v2319
      %v2383 = vadd.f32 %v1674, %v2322
      %v2384 = vadd.f32 %v1675, %v2325
      %v2385 = vadd.f32 %v1676, %v2328
      %v2386 = vadd.f32 %v1677, %v2331
      %v2387 = vadd.f32 %v1678, %v2334
      %v2388 = vadd.f32 %v1679, %v2337
      %v2389 = vadd.f32 %v1680, %v2340
      %v2390 = vadd.f32 %v1681, %v2343
      %v2391 = vadd.f32 %v1682, %v2346
      %v2392 = vadd.f32 %v1683, %v2349
      %v2393 = vadd.f32 %v1684, %v2352
      %v2394 = vadd.f32 %v1685, %v2355
      %v2395 = vadd.f32 %v1686, %v2358
      %v2396 = vadd.f32 %v1687, %v2361
      %v2397 = vadd.f32 %v1688, %v2364
      %v2401 = vrot.slane %v663, 1
      %v2402 = vrot.slane %v664, 1
      %v2403 = vsel %vm717, %v2401, %v2402
      %v2404 = vrot.slane %v665, 1
      %v2405 = vsel %vm717, %v2402, %v2404
      %2406 = vrot.lane.b32.xlu0 %v2403, 2
      %v2407 = vpop.permute.xlu0 %2406
      %2408 = vrot.lane.b32.xlu0 %v2405, 2
      %v2409 = vpop.permute.xlu0 %2408
      %v2412 = vrot.slane %v663, 2
      %v2413 = vrot.slane %v664, 2
      %v2414 = vsel %vm894, %v2412, %v2413
      %v2415 = vrot.slane %v665, 2
      %v2416 = vsel %vm894, %v2413, %v2415
      %2417 = vrot.lane.b32.xlu0 %v2414, 4
      %v2418 = vpop.permute.xlu0 %2417
      %2419 = vrot.lane.b32.xlu0 %v2416, 4
      %v2420 = vpop.permute.xlu0 %2419
      %v2423 = vsel %vm1071, %v663, %v2407
      %v2424 = vsel %vm1071, %v664, %v2409
      %v2425 = vsel %vm1104, %v2423, %v2418
      %v2426 = vsel %vm1104, %v2424, %v2420
      %s2427 = scalar_lea.vmem %s5, 8
      %v2428 = vld [vmem:[%s2427] sm:$0x3f]
      %v2430 = vsel %vm1169, %v2425, 0
      %v2433 = vsel %vm1169, %v2426, 0
      %v2436 = vsel %vm894, %v2428, 0
      %2438 = vmatpush.msra.mxu0 0.0
      %2439 = vmatpush.msra.mxu0 0.0
      %2440 = vmatpush.msra.mxu0 0.0
      %2441 = vmatpush.msra.mxu0 0.0
      %2442 = vmatpush.msra.mxu0 0.0
      %2443 = vmatpush.msra.mxu0 0.0
      %2444 = vmatpush.msra.mxu0 0.0
      %2445 = vmatpush.msra.mxu0 0.0
      %2446 = vmatpush.msra.mxu0 0.0
      %2447 = vmatpush.msra.mxu0 0.0
      %2448 = vmatpush.msra.mxu0 0.0
      %2449 = vmatpush.msra.mxu0 0.0
      %2450 = vmatpush.msra.mxu0 0.0
      %2451 = vmatpush.msra.mxu0 0.0
      %2452 = vmatpush.msra.mxu0 0.0
      %2453 = vmatpush.msra.mxu0 %v2436
      %2454 = vmatmul.f32.gmra.mxu0 %v2161
      %v2455 = vpop.f32.mrf.mxu0
      %v2456 = vadd.f32 0.0, %v2455
      %2457 = vmatmul.f32.gmra.mxu0 %v2164
      %v2458 = vpop.f32.mrf.mxu0
      %v2459 = vadd.f32 0.0, %v2458
      %2460 = vmatmul.f32.gmra.mxu0 %v2167
      %v2461 = vpop.f32.mrf.mxu0
      %v2462 = vadd.f32 0.0, %v2461
      %2463 = vmatmul.f32.gmra.mxu0 %v2170
      %v2464 = vpop.f32.mrf.mxu0
      %v2465 = vadd.f32 0.0, %v2464
      %2466 = vmatmul.f32.gmra.mxu0 %v2173
      %v2467 = vpop.f32.mrf.mxu0
      %v2468 = vadd.f32 0.0, %v2467
      %2469 = vmatmul.f32.gmra.mxu0 %v2176
      %v2470 = vpop.f32.mrf.mxu0
      %v2471 = vadd.f32 0.0, %v2470
      %2472 = vmatmul.f32.gmra.mxu0 %v2179
      %v2473 = vpop.f32.mrf.mxu0
      %v2474 = vadd.f32 0.0, %v2473
      %2475 = vmatmul.f32.gmra.mxu0 %v2182
      %v2476 = vpop.f32.mrf.mxu0
      %v2477 = vadd.f32 0.0, %v2476
      %2478 = vmatmul.f32.gmra.mxu0 %v2185
      %v2479 = vpop.f32.mrf.mxu0
      %v2480 = vadd.f32 0.0, %v2479
      %2481 = vmatmul.f32.gmra.mxu0 %v2188
      %v2482 = vpop.f32.mrf.mxu0
      %v2483 = vadd.f32 0.0, %v2482
      %2484 = vmatmul.f32.gmra.mxu0 %v2191
      %v2485 = vpop.f32.mrf.mxu0
      %v2486 = vadd.f32 0.0, %v2485
      %2487 = vmatmul.f32.gmra.mxu0 %v2194
      %v2488 = vpop.f32.mrf.mxu0
      %v2489 = vadd.f32 0.0, %v2488
      %2490 = vmatmul.f32.gmra.mxu0 %v2197
      %v2491 = vpop.f32.mrf.mxu0
      %v2492 = vadd.f32 0.0, %v2491
      %2493 = vmatmul.f32.gmra.mxu0 %v2200
      %v2494 = vpop.f32.mrf.mxu0
      %v2495 = vadd.f32 0.0, %v2494
      %2496 = vmatmul.f32.gmra.mxu0 %v2203
      %v2497 = vpop.f32.mrf.mxu0
      %v2498 = vadd.f32 0.0, %v2497
      %2499 = vmatmul.f32.gmra.mxu0 %v2206
      %v2500 = vpop.f32.mrf.mxu0
      %v2501 = vadd.f32 0.0, %v2500
      %2502 = vmatmul.f32.gmra.mxu0 %v2209
      %v2503 = vpop.f32.mrf.mxu0
      %v2504 = vadd.f32 0.0, %v2503
      %2505 = vmatmul.f32.gmra.mxu0 %v2212
      %v2506 = vpop.f32.mrf.mxu0
      %v2507 = vadd.f32 0.0, %v2506
      %2508 = vmatmul.f32.gmra.mxu0 %v2215
      %v2509 = vpop.f32.mrf.mxu0
      %v2510 = vadd.f32 0.0, %v2509
      %2511 = vmatmul.f32.gmra.mxu0 %v2218
      %v2512 = vpop.f32.mrf.mxu0
      %v2513 = vadd.f32 0.0, %v2512
      %2514 = vmatmul.f32.gmra.mxu0 %v2221
      %v2515 = vpop.f32.mrf.mxu0
      %v2516 = vadd.f32 0.0, %v2515
      %2517 = vmatmul.f32.gmra.mxu0 %v2224
      %v2518 = vpop.f32.mrf.mxu0
      %v2519 = vadd.f32 0.0, %v2518
      %2520 = vmatmul.f32.gmra.mxu0 %v2227
      %v2521 = vpop.f32.mrf.mxu0
      %v2522 = vadd.f32 0.0, %v2521
      %2523 = vmatmul.f32.gmra.mxu0 %v2230
      %v2524 = vpop.f32.mrf.mxu0
      %v2525 = vadd.f32 0.0, %v2524
      %2526 = vmatmul.f32.gmra.mxu0 %v2233
      %v2527 = vpop.f32.mrf.mxu0
      %v2528 = vadd.f32 0.0, %v2527
      %2529 = vmatmul.f32.gmra.mxu0 %v2236
      %v2530 = vpop.f32.mrf.mxu0
      %v2531 = vadd.f32 0.0, %v2530
      %2532 = vmatmul.f32.gmra.mxu0 %v2239
      %v2533 = vpop.f32.mrf.mxu0
      %v2534 = vadd.f32 0.0, %v2533
      %2535 = vmatmul.f32.gmra.mxu0 %v2242
      %v2536 = vpop.f32.mrf.mxu0
      %v2537 = vadd.f32 0.0, %v2536
      %2538 = vmatmul.f32.gmra.mxu0 %v2245
      %v2539 = vpop.f32.mrf.mxu0
      %v2540 = vadd.f32 0.0, %v2539
      %2541 = vmatmul.f32.gmra.mxu0 %v2248
      %v2542 = vpop.f32.mrf.mxu0
      %v2543 = vadd.f32 0.0, %v2542
      %2544 = vmatmul.f32.gmra.mxu0 %v2430
      %v2545 = vpop.f32.mrf.mxu0
      %v2546 = vadd.f32 0.0, %v2545
      %2547 = vmatmul.f32.gmra.mxu0 %v2433
      %v2548 = vpop.f32.mrf.mxu0
      %v2549 = vadd.f32 0.0, %v2548
      %2550 = vdwg.mxu0
      %v2551 = vadd.f32 %v2366, %v2456
      %v2552 = vadd.f32 %v2367, %v2459
      %v2553 = vadd.f32 %v2368, %v2462
      %v2554 = vadd.f32 %v2369, %v2465
      %v2555 = vadd.f32 %v2370, %v2468
      %v2556 = vadd.f32 %v2371, %v2471
      %v2557 = vadd.f32 %v2372, %v2474
      %v2558 = vadd.f32 %v2373, %v2477
      %v2559 = vadd.f32 %v2374, %v2480
      %v2560 = vadd.f32 %v2375, %v2483
      %v2561 = vadd.f32 %v2376, %v2486
      %v2562 = vadd.f32 %v2377, %v2489
      %v2563 = vadd.f32 %v2378, %v2492
      %v2564 = vadd.f32 %v2379, %v2495
      %v2565 = vadd.f32 %v2380, %v2498
      %v2566 = vadd.f32 %v2381, %v2501
      %v2567 = vadd.f32 %v2382, %v2504
      %v2568 = vadd.f32 %v2383, %v2507
      %v2569 = vadd.f32 %v2384, %v2510
      %v2570 = vadd.f32 %v2385, %v2513
      %v2571 = vadd.f32 %v2386, %v2516
      %v2572 = vadd.f32 %v2387, %v2519
      %v2573 = vadd.f32 %v2388, %v2522
      %v2574 = vadd.f32 %v2389, %v2525
      %v2575 = vadd.f32 %v2390, %v2528
      %v2576 = vadd.f32 %v2391, %v2531
      %v2577 = vadd.f32 %v2392, %v2534
      %v2578 = vadd.f32 %v2393, %v2537
      %v2579 = vadd.f32 %v2394, %v2540
      %v2580 = vadd.f32 %v2395, %v2543
      %v2581 = vadd.f32 %v2396, %v2546
      %v2582 = vadd.f32 %v2397, %v2549
      %v2586 = vrot.slane %v666, 1
      %v2587 = vrot.slane %v667, 1
      %v2588 = vsel %vm717, %v2586, %v2587
      %v2589 = vrot.slane %v668, 1
      %v2590 = vsel %vm717, %v2587, %v2589
      %2591 = vrot.lane.b32.xlu0 %v2588, 2
      %v2592 = vpop.permute.xlu0 %2591
      %2593 = vrot.lane.b32.xlu0 %v2590, 2
      %v2594 = vpop.permute.xlu0 %2593
      %v2597 = vrot.slane %v666, 2
      %v2598 = vrot.slane %v667, 2
      %v2599 = vsel %vm894, %v2597, %v2598
      %v2600 = vrot.slane %v668, 2
      %v2601 = vsel %vm894, %v2598, %v2600
      %2602 = vrot.lane.b32.xlu0 %v2599, 4
      %v2603 = vpop.permute.xlu0 %2602
      %2604 = vrot.lane.b32.xlu0 %v2601, 4
      %v2605 = vpop.permute.xlu0 %2604
      %v2608 = vsel %vm1071, %v666, %v2592
      %v2609 = vsel %vm1071, %v667, %v2594
      %v2610 = vsel %vm1104, %v2608, %v2603
      %v2611 = vsel %vm1104, %v2609, %v2605
      %s2612 = scalar_lea.vmem %s5, 16
      %v2613 = vld [vmem:[%s2612] sm:$0x3f]
      %v2615 = vsel %vm1169, %v2610, 0
      %v2618 = vsel %vm1169, %v2611, 0
      %v2621 = vsel %vm894, %v2613, 0
      %2623 = vmatpush.msra.mxu0 0.0
      %2624 = vmatpush.msra.mxu0 0.0
      %2625 = vmatpush.msra.mxu0 0.0
      %2626 = vmatpush.msra.mxu0 0.0
      %2627 = vmatpush.msra.mxu0 0.0
      %2628 = vmatpush.msra.mxu0 0.0
      %2629 = vmatpush.msra.mxu0 0.0
      %2630 = vmatpush.msra.mxu0 0.0
      %2631 = vmatpush.msra.mxu0 0.0
      %2632 = vmatpush.msra.mxu0 0.0
      %2633 = vmatpush.msra.mxu0 0.0
      %2634 = vmatpush.msra.mxu0 0.0
      %2635 = vmatpush.msra.mxu0 0.0
      %2636 = vmatpush.msra.mxu0 0.0
      %2637 = vmatpush.msra.mxu0 0.0
      %2638 = vmatpush.msra.mxu0 %v2621
      %2639 = vmatmul.f32.gmra.mxu0 %v2167
      %v2640 = vpop.f32.mrf.mxu0
      %v2641 = vadd.f32 0.0, %v2640
      %2642 = vmatmul.f32.gmra.mxu0 %v2170
      %v2643 = vpop.f32.mrf.mxu0
      %v2644 = vadd.f32 0.0, %v2643
      %2645 = vmatmul.f32.gmra.mxu0 %v2173
      %v2646 = vpop.f32.mrf.mxu0
      %v2647 = vadd.f32 0.0, %v2646
      %2648 = vmatmul.f32.gmra.mxu0 %v2176
      %v2649 = vpop.f32.mrf.mxu0
      %v2650 = vadd.f32 0.0, %v2649
      %2651 = vmatmul.f32.gmra.mxu0 %v2179
      %v2652 = vpop.f32.mrf.mxu0
      %v2653 = vadd.f32 0.0, %v2652
      %2654 = vmatmul.f32.gmra.mxu0 %v2182
      %v2655 = vpop.f32.mrf.mxu0
      %v2656 = vadd.f32 0.0, %v2655
      %2657 = vmatmul.f32.gmra.mxu0 %v2185
      %v2658 = vpop.f32.mrf.mxu0
      %v2659 = vadd.f32 0.0, %v2658
      %2660 = vmatmul.f32.gmra.mxu0 %v2188
      %v2661 = vpop.f32.mrf.mxu0
      %v2662 = vadd.f32 0.0, %v2661
      %2663 = vmatmul.f32.gmra.mxu0 %v2191
      %v2664 = vpop.f32.mrf.mxu0
      %v2665 = vadd.f32 0.0, %v2664
      %2666 = vmatmul.f32.gmra.mxu0 %v2194
      %v2667 = vpop.f32.mrf.mxu0
      %v2668 = vadd.f32 0.0, %v2667
      %2669 = vmatmul.f32.gmra.mxu0 %v2197
      %v2670 = vpop.f32.mrf.mxu0
      %v2671 = vadd.f32 0.0, %v2670
      %2672 = vmatmul.f32.gmra.mxu0 %v2200
      %v2673 = vpop.f32.mrf.mxu0
      %v2674 = vadd.f32 0.0, %v2673
      %2675 = vmatmul.f32.gmra.mxu0 %v2203
      %v2676 = vpop.f32.mrf.mxu0
      %v2677 = vadd.f32 0.0, %v2676
      %2678 = vmatmul.f32.gmra.mxu0 %v2206
      %v2679 = vpop.f32.mrf.mxu0
      %v2680 = vadd.f32 0.0, %v2679
      %2681 = vmatmul.f32.gmra.mxu0 %v2209
      %v2682 = vpop.f32.mrf.mxu0
      %v2683 = vadd.f32 0.0, %v2682
      %2684 = vmatmul.f32.gmra.mxu0 %v2212
      %v2685 = vpop.f32.mrf.mxu0
      %v2686 = vadd.f32 0.0, %v2685
      %2687 = vmatmul.f32.gmra.mxu0 %v2215
      %v2688 = vpop.f32.mrf.mxu0
      %v2689 = vadd.f32 0.0, %v2688
      %2690 = vmatmul.f32.gmra.mxu0 %v2218
      %v2691 = vpop.f32.mrf.mxu0
      %v2692 = vadd.f32 0.0, %v2691
      %2693 = vmatmul.f32.gmra.mxu0 %v2221
      %v2694 = vpop.f32.mrf.mxu0
      %v2695 = vadd.f32 0.0, %v2694
      %2696 = vmatmul.f32.gmra.mxu0 %v2224
      %v2697 = vpop.f32.mrf.mxu0
      %v2698 = vadd.f32 0.0, %v2697
      %2699 = vmatmul.f32.gmra.mxu0 %v2227
      %v2700 = vpop.f32.mrf.mxu0
      %v2701 = vadd.f32 0.0, %v2700
      %2702 = vmatmul.f32.gmra.mxu0 %v2230
      %v2703 = vpop.f32.mrf.mxu0
      %v2704 = vadd.f32 0.0, %v2703
      %2705 = vmatmul.f32.gmra.mxu0 %v2233
      %v2706 = vpop.f32.mrf.mxu0
      %v2707 = vadd.f32 0.0, %v2706
      %2708 = vmatmul.f32.gmra.mxu0 %v2236
      %v2709 = vpop.f32.mrf.mxu0
      %v2710 = vadd.f32 0.0, %v2709
      %2711 = vmatmul.f32.gmra.mxu0 %v2239
      %v2712 = vpop.f32.mrf.mxu0
      %v2713 = vadd.f32 0.0, %v2712
      %2714 = vmatmul.f32.gmra.mxu0 %v2242
      %v2715 = vpop.f32.mrf.mxu0
      %v2716 = vadd.f32 0.0, %v2715
      %2717 = vmatmul.f32.gmra.mxu0 %v2245
      %v2718 = vpop.f32.mrf.mxu0
      %v2719 = vadd.f32 0.0, %v2718
      %2720 = vmatmul.f32.gmra.mxu0 %v2248
      %v2721 = vpop.f32.mrf.mxu0
      %v2722 = vadd.f32 0.0, %v2721
      %2723 = vmatmul.f32.gmra.mxu0 %v2430
      %v2724 = vpop.f32.mrf.mxu0
      %v2725 = vadd.f32 0.0, %v2724
      %2726 = vmatmul.f32.gmra.mxu0 %v2433
      %v2727 = vpop.f32.mrf.mxu0
      %v2728 = vadd.f32 0.0, %v2727
      %2729 = vmatmul.f32.gmra.mxu0 %v2615
      %v2730 = vpop.f32.mrf.mxu0
      %v2731 = vadd.f32 0.0, %v2730
      %2732 = vmatmul.f32.gmra.mxu0 %v2618
      %v2733 = vpop.f32.mrf.mxu0
      %v2734 = vadd.f32 0.0, %v2733
      %2735 = vdwg.mxu0
      %v2736 = vadd.f32 %v2551, %v2641
      %v2737 = vadd.f32 %v2552, %v2644
      %v2738 = vadd.f32 %v2553, %v2647
      %v2739 = vadd.f32 %v2554, %v2650
      %v2740 = vadd.f32 %v2555, %v2653
      %v2741 = vadd.f32 %v2556, %v2656
      %v2742 = vadd.f32 %v2557, %v2659
      %v2743 = vadd.f32 %v2558, %v2662
      %v2744 = vadd.f32 %v2559, %v2665
      %v2745 = vadd.f32 %v2560, %v2668
      %v2746 = vadd.f32 %v2561, %v2671
      %v2747 = vadd.f32 %v2562, %v2674
      %v2748 = vadd.f32 %v2563, %v2677
      %v2749 = vadd.f32 %v2564, %v2680
      %v2750 = vadd.f32 %v2565, %v2683
      %v2751 = vadd.f32 %v2566, %v2686
      %v2752 = vadd.f32 %v2567, %v2689
      %v2753 = vadd.f32 %v2568, %v2692
      %v2754 = vadd.f32 %v2569, %v2695
      %v2755 = vadd.f32 %v2570, %v2698
      %v2756 = vadd.f32 %v2571, %v2701
      %v2757 = vadd.f32 %v2572, %v2704
      %v2758 = vadd.f32 %v2573, %v2707
      %v2759 = vadd.f32 %v2574, %v2710
      %v2760 = vadd.f32 %v2575, %v2713
      %v2761 = vadd.f32 %v2576, %v2716
      %v2762 = vadd.f32 %v2577, %v2719
      %v2763 = vadd.f32 %v2578, %v2722
      %v2764 = vadd.f32 %v2579, %v2725
      %v2765 = vadd.f32 %v2580, %v2728
      %v2766 = vadd.f32 %v2581, %v2731
      %v2767 = vadd.f32 %v2582, %v2734
      %v2768 = vld [vmem:[%s6] sm:$0x1]
      %v2770 = vperm.slane %v2768, 0
      %v2772 = vadd.f32 %v2736, %v2770
      %v2773 = vadd.f32 %v2737, %v2770
      %v2774 = vadd.f32 %v2738, %v2770
      %v2775 = vadd.f32 %v2739, %v2770
      %v2776 = vadd.f32 %v2740, %v2770
      %v2777 = vadd.f32 %v2741, %v2770
      %v2778 = vadd.f32 %v2742, %v2770
      %v2779 = vadd.f32 %v2743, %v2770
      %v2780 = vadd.f32 %v2744, %v2770
      %v2781 = vadd.f32 %v2745, %v2770
      %v2782 = vadd.f32 %v2746, %v2770
      %v2783 = vadd.f32 %v2747, %v2770
      %v2784 = vadd.f32 %v2748, %v2770
      %v2785 = vadd.f32 %v2749, %v2770
      %v2786 = vadd.f32 %v2750, %v2770
      %v2787 = vadd.f32 %v2751, %v2770
      %v2788 = vadd.f32 %v2752, %v2770
      %v2789 = vadd.f32 %v2753, %v2770
      %v2790 = vadd.f32 %v2754, %v2770
      %v2791 = vadd.f32 %v2755, %v2770
      %v2792 = vadd.f32 %v2756, %v2770
      %v2793 = vadd.f32 %v2757, %v2770
      %v2794 = vadd.f32 %v2758, %v2770
      %v2795 = vadd.f32 %v2759, %v2770
      %v2796 = vadd.f32 %v2760, %v2770
      %v2797 = vadd.f32 %v2761, %v2770
      %v2798 = vadd.f32 %v2762, %v2770
      %v2799 = vadd.f32 %v2763, %v2770
      %v2800 = vadd.f32 %v2764, %v2770
      %v2801 = vadd.f32 %v2765, %v2770
      %v2802 = vadd.f32 %v2766, %v2770
      %v2803 = vadd.f32 %v2767, %v2770
      %2804 = vst.msk [vmem:[%s553] sm:$0xff] %vm1104, %v2772
      %2805 = vst.msk [vmem:[%s553 + $0x8] sm:$0xff] %vm1104, %v2773
      %2806 = vst.msk [vmem:[%s553 + $0x10] sm:$0xff] %vm1104, %v2774
      %2807 = vst.msk [vmem:[%s553 + $0x18] sm:$0xff] %vm1104, %v2775
      %2808 = vst.msk [vmem:[%s553 + $0x20] sm:$0xff] %vm1104, %v2776
      %2809 = vst.msk [vmem:[%s553 + $0x28] sm:$0xff] %vm1104, %v2777
      %2810 = vst.msk [vmem:[%s553 + $0x30] sm:$0xff] %vm1104, %v2778
      %2811 = vst.msk [vmem:[%s553 + $0x38] sm:$0xff] %vm1104, %v2779
      %2812 = vst.msk [vmem:[%s553 + $0x40] sm:$0xff] %vm1104, %v2780
      %2813 = vst.msk [vmem:[%s553 + $0x48] sm:$0xff] %vm1104, %v2781
      %2814 = vst.msk [vmem:[%s553 + $0x50] sm:$0xff] %vm1104, %v2782
      %2815 = vst.msk [vmem:[%s553 + $0x58] sm:$0xff] %vm1104, %v2783
      %2816 = vst.msk [vmem:[%s553 + $0x60] sm:$0xff] %vm1104, %v2784
      %2817 = vst.msk [vmem:[%s553 + $0x68] sm:$0xff] %vm1104, %v2785
      %2818 = vst.msk [vmem:[%s553 + $0x70] sm:$0xff] %vm1104, %v2786
      %2819 = vst.msk [vmem:[%s553 + $0x78] sm:$0xff] %vm1104, %v2787
      %2820 = vst.msk [vmem:[%s553 + $0x80] sm:$0xff] %vm1104, %v2788
      %2821 = vst.msk [vmem:[%s553 + $0x88] sm:$0xff] %vm1104, %v2789
      %2822 = vst.msk [vmem:[%s553 + $0x90] sm:$0xff] %vm1104, %v2790
      %2823 = vst.msk [vmem:[%s553 + $0x98] sm:$0xff] %vm1104, %v2791
      %2824 = vst.msk [vmem:[%s553 + $0xa0] sm:$0xff] %vm1104, %v2792
      %2825 = vst.msk [vmem:[%s553 + $0xa8] sm:$0xff] %vm1104, %v2793
      %2826 = vst.msk [vmem:[%s553 + $0xb0] sm:$0xff] %vm1104, %v2794
      %2827 = vst.msk [vmem:[%s553 + $0xb8] sm:$0xff] %vm1104, %v2795
      %2828 = vst.msk [vmem:[%s553 + $0xc0] sm:$0xff] %vm1104, %v2796
      %2829 = vst.msk [vmem:[%s553 + $0xc8] sm:$0xff] %vm1104, %v2797
      %2830 = vst.msk [vmem:[%s553 + $0xd0] sm:$0xff] %vm1104, %v2798
      %2831 = vst.msk [vmem:[%s553 + $0xd8] sm:$0xff] %vm1104, %v2799
      %2832 = vst.msk [vmem:[%s553 + $0xe0] sm:$0xff] %vm1104, %v2800
      %2833 = vst.msk [vmem:[%s553 + $0xe8] sm:$0xff] %vm1104, %v2801
      %2834 = vst.msk [vmem:[%s553 + $0xf0] sm:$0xff] %vm1104, %v2802
      %2835 = vst.msk [vmem:[%s553 + $0xf8] sm:$0xff] %vm1104, %v2803
      %v2836 = vsel %vm1104, %v2772, 0.0
      %v2837 = vsel %vm1104, %v2773, 0.0
      %v2838 = vadd.f32 %v2836, %v2837
      %v2839 = vsel %vm1104, %v2774, 0.0
      %v2840 = vadd.f32 %v2838, %v2839
      %v2841 = vsel %vm1104, %v2775, 0.0
      %v2842 = vadd.f32 %v2840, %v2841
      %v2843 = vsel %vm1104, %v2776, 0.0
      %v2844 = vadd.f32 %v2842, %v2843
      %v2845 = vsel %vm1104, %v2777, 0.0
      %v2846 = vadd.f32 %v2844, %v2845
      %v2847 = vsel %vm1104, %v2778, 0.0
      %v2848 = vadd.f32 %v2846, %v2847
      %v2849 = vsel %vm1104, %v2779, 0.0
      %v2850 = vadd.f32 %v2848, %v2849
      %v2851 = vsel %vm1104, %v2780, 0.0
      %v2852 = vadd.f32 %v2850, %v2851
      %v2853 = vsel %vm1104, %v2781, 0.0
      %v2854 = vadd.f32 %v2852, %v2853
      %v2855 = vsel %vm1104, %v2782, 0.0
      %v2856 = vadd.f32 %v2854, %v2855
      %v2857 = vsel %vm1104, %v2783, 0.0
      %v2858 = vadd.f32 %v2856, %v2857
      %v2859 = vsel %vm1104, %v2784, 0.0
      %v2860 = vadd.f32 %v2858, %v2859
      %v2861 = vsel %vm1104, %v2785, 0.0
      %v2862 = vadd.f32 %v2860, %v2861
      %v2863 = vsel %vm1104, %v2786, 0.0
      %v2864 = vadd.f32 %v2862, %v2863
      %v2865 = vsel %vm1104, %v2787, 0.0
      %v2866 = vadd.f32 %v2864, %v2865
      %v2867 = vsel %vm1104, %v2788, 0.0
      %v2868 = vadd.f32 %v2866, %v2867
      %v2869 = vsel %vm1104, %v2789, 0.0
      %v2870 = vadd.f32 %v2868, %v2869
      %v2871 = vsel %vm1104, %v2790, 0.0
      %v2872 = vadd.f32 %v2870, %v2871
      %v2873 = vsel %vm1104, %v2791, 0.0
      %v2874 = vadd.f32 %v2872, %v2873
      %v2875 = vsel %vm1104, %v2792, 0.0
      %v2876 = vadd.f32 %v2874, %v2875
      %v2877 = vsel %vm1104, %v2793, 0.0
      %v2878 = vadd.f32 %v2876, %v2877
      %v2879 = vsel %vm1104, %v2794, 0.0
      %v2880 = vadd.f32 %v2878, %v2879
      %v2881 = vsel %vm1104, %v2795, 0.0
      %v2882 = vadd.f32 %v2880, %v2881
      %v2883 = vsel %vm1104, %v2796, 0.0
      %v2884 = vadd.f32 %v2882, %v2883
      %v2885 = vsel %vm1104, %v2797, 0.0
      %v2886 = vadd.f32 %v2884, %v2885
      %v2887 = vsel %vm1104, %v2798, 0.0
      %v2888 = vadd.f32 %v2886, %v2887
      %v2889 = vsel %vm1104, %v2799, 0.0
      %v2890 = vadd.f32 %v2888, %v2889
      %v2891 = vsel %vm1104, %v2800, 0.0
      %v2892 = vadd.f32 %v2890, %v2891
      %v2893 = vsel %vm1104, %v2801, 0.0
      %v2894 = vadd.f32 %v2892, %v2893
      %v2895 = vsel %vm1104, %v2802, 0.0
      %v2896 = vadd.f32 %v2894, %v2895
      %v2897 = vsel %vm1104, %v2803, 0.0
      %v2898 = vadd.f32 %v2896, %v2897
      %v2899 = vrot.slane %v2898, 4
      %v2900 = vadd.f32 %v2898, %v2899
      %v2901 = vrot.slane %v2900, 2
      %v2902 = vadd.f32 %v2900, %v2901
      %v2903 = vrot.slane %v2902, 1
      %v2904 = vadd.f32 %v2902, %v2903
      %v2905 = vmul.f32 %v2772, %v2772
      %v2906 = vmul.f32 %v2773, %v2773
      %v2907 = vmul.f32 %v2774, %v2774
      %v2908 = vmul.f32 %v2775, %v2775
      %v2909 = vmul.f32 %v2776, %v2776
      %v2910 = vmul.f32 %v2777, %v2777
      %v2911 = vmul.f32 %v2778, %v2778
      %v2912 = vmul.f32 %v2779, %v2779
      %v2913 = vmul.f32 %v2780, %v2780
      %v2914 = vmul.f32 %v2781, %v2781
      %v2915 = vmul.f32 %v2782, %v2782
      %v2916 = vmul.f32 %v2783, %v2783
      %v2917 = vmul.f32 %v2784, %v2784
      %v2918 = vmul.f32 %v2785, %v2785
      %v2919 = vmul.f32 %v2786, %v2786
      %v2920 = vmul.f32 %v2787, %v2787
      %v2921 = vmul.f32 %v2788, %v2788
      %v2922 = vmul.f32 %v2789, %v2789
      %v2923 = vmul.f32 %v2790, %v2790
      %v2924 = vmul.f32 %v2791, %v2791
      %v2925 = vmul.f32 %v2792, %v2792
      %v2926 = vmul.f32 %v2793, %v2793
      %v2927 = vmul.f32 %v2794, %v2794
      %v2928 = vmul.f32 %v2795, %v2795
      %v2929 = vmul.f32 %v2796, %v2796
      %v2930 = vmul.f32 %v2797, %v2797
      %v2931 = vmul.f32 %v2798, %v2798
      %v2932 = vmul.f32 %v2799, %v2799
      %v2933 = vmul.f32 %v2800, %v2800
      %v2934 = vmul.f32 %v2801, %v2801
      %v2935 = vmul.f32 %v2802, %v2802
      %v2936 = vmul.f32 %v2803, %v2803
      %v2937 = vsel %vm1104, %v2905, 0.0
      %v2938 = vsel %vm1104, %v2906, 0.0
      %v2939 = vadd.f32 %v2937, %v2938
      %v2940 = vsel %vm1104, %v2907, 0.0
      %v2941 = vadd.f32 %v2939, %v2940
      %v2942 = vsel %vm1104, %v2908, 0.0
      %v2943 = vadd.f32 %v2941, %v2942
      %v2944 = vsel %vm1104, %v2909, 0.0
      %v2945 = vadd.f32 %v2943, %v2944
      %v2946 = vsel %vm1104, %v2910, 0.0
      %v2947 = vadd.f32 %v2945, %v2946
      %v2948 = vsel %vm1104, %v2911, 0.0
      %v2949 = vadd.f32 %v2947, %v2948
      %v2950 = vsel %vm1104, %v2912, 0.0
      %v2951 = vadd.f32 %v2949, %v2950
      %v2952 = vsel %vm1104, %v2913, 0.0
      %v2953 = vadd.f32 %v2951, %v2952
      %v2954 = vsel %vm1104, %v2914, 0.0
      %v2955 = vadd.f32 %v2953, %v2954
      %v2956 = vsel %vm1104, %v2915, 0.0
      %v2957 = vadd.f32 %v2955, %v2956
      %v2958 = vsel %vm1104, %v2916, 0.0
      %v2959 = vadd.f32 %v2957, %v2958
      %v2960 = vsel %vm1104, %v2917, 0.0
      %v2961 = vadd.f32 %v2959, %v2960
      %v2962 = vsel %vm1104, %v2918, 0.0
      %v2963 = vadd.f32 %v2961, %v2962
      %v2964 = vsel %vm1104, %v2919, 0.0
      %v2965 = vadd.f32 %v2963, %v2964
      %v2966 = vsel %vm1104, %v2920, 0.0
      %v2967 = vadd.f32 %v2965, %v2966
      %v2968 = vsel %vm1104, %v2921, 0.0
      %v2969 = vadd.f32 %v2967, %v2968
      %v2970 = vsel %vm1104, %v2922, 0.0
      %v2971 = vadd.f32 %v2969, %v2970
      %v2972 = vsel %vm1104, %v2923, 0.0
      %v2973 = vadd.f32 %v2971, %v2972
      %v2974 = vsel %vm1104, %v2924, 0.0
      %v2975 = vadd.f32 %v2973, %v2974
      %v2976 = vsel %vm1104, %v2925, 0.0
      %v2977 = vadd.f32 %v2975, %v2976
      %v2978 = vsel %vm1104, %v2926, 0.0
      %v2979 = vadd.f32 %v2977, %v2978
      %v2980 = vsel %vm1104, %v2927, 0.0
      %v2981 = vadd.f32 %v2979, %v2980
      %v2982 = vsel %vm1104, %v2928, 0.0
      %v2983 = vadd.f32 %v2981, %v2982
      %v2984 = vsel %vm1104, %v2929, 0.0
      %v2985 = vadd.f32 %v2983, %v2984
      %v2986 = vsel %vm1104, %v2930, 0.0
      %v2987 = vadd.f32 %v2985, %v2986
      %v2988 = vsel %vm1104, %v2931, 0.0
      %v2989 = vadd.f32 %v2987, %v2988
      %v2990 = vsel %vm1104, %v2932, 0.0
      %v2991 = vadd.f32 %v2989, %v2990
      %v2992 = vsel %vm1104, %v2933, 0.0
      %v2993 = vadd.f32 %v2991, %v2992
      %v2994 = vsel %vm1104, %v2934, 0.0
      %v2995 = vadd.f32 %v2993, %v2994
      %v2996 = vsel %vm1104, %v2935, 0.0
      %v2997 = vadd.f32 %v2995, %v2996
      %v2998 = vsel %vm1104, %v2936, 0.0
      %v2999 = vadd.f32 %v2997, %v2998
      %v3000 = vrot.slane %v2999, 4
      %v3001 = vadd.f32 %v2999, %v3000
      %v3002 = vrot.slane %v3001, 2
      %v3003 = vadd.f32 %v3001, %v3002
      %v3004 = vrot.slane %v3003, 1
      %v3005 = vadd.f32 %v3003, %v3004
      %vm3006 = vcmask 1040384
      %v3007 = vsel %vm3006, %v2904, %v3005
      %vm3008 = vcmask 25600
      %3009 = vst.msk [vmem:[%s559] sm:$0x3] %vm3008, %v3007
      %s3010 = smul.u32 16, %s25
      %p3011 = scmp.lt.s32.totalorder %s24, 1
      %s3012 = scalar_select %p3011, %s24, 1
      %p3013 = scmp.lt.s32.totalorder %s3010, 15
      %s3014 = scalar_select %p3013, %s3010, 15
      %s3015 = smul.addr %s3014, 2
      %s3016 = smul.addr %s3012, 32
      %s3017 = sadd.s32 %s3015, %s3016
      %s3018 = smul.addr %s3017, 8
      %s3019 = scalar_lea.vmem %s7, %s3018
      %s3020 = sadd.s32 %s24, %s25
      %p3021 = scmp.lt.s32.totalorder %s3020, 1
      %s3022 = scalar_select %p3021, %s3020, 1
      %s3023 = smul.addr %s3022, 2
      %s3024 = scalar_lea.vmem %s8, %s3023
      // Predicated region
      $region49: #{up_forward.5} parent=47 // pred_check
        %p3025 = pneg %p235
      $region50: #{up_forward.5} parent=47 // pred_check_branch
        %3027 = sbr.rel (%p3025) target = $region52
      $region51: #{up_forward.5} parent=47 // pred_region
        %s3028 = smul.u32 16, %s25
      $region52: #{up_forward.5} parent=47 // pred_fallthru
        _
      // Predicated region
      $region53: #{up_forward.5} parent=47 // pred_check
        %p3029 = pneg %p263
      $region54: #{up_forward.5} parent=47 // pred_check_branch
        %3031 = sbr.rel (%p3029) target = $region56
      $region55: #{up_forward.5} parent=47 // pred_region
        %s3032 = sadd.s32 %s24, %s25
      $region56: #{up_forward.5} parent=47 // pred_fallthru
        _
    $region48: #{up_forward.5} parent=5 // pred_fallthru
      _
    %p3033 = scmp.le.s32.totalorder 2, %s15
    // Predicated region
    $region57: #{up_forward.5} parent=5 // pred_check
      %p3034 = pneg %p3033
    $region58: #{up_forward.5} parent=5 // pred_check_branch
      %3036 = sbr.rel (%p3034) target = $region60
    $region59: #{up_forward.5} parent=5 // pred_region
      %s3037 = ssub.s32 %s15, 2
      // Predicated region
      $region61: #{up_forward.5} parent=59 // pred_check
        %p3038 = pneg %p241
      $region62: #{up_forward.5} parent=59 // pred_check_branch
        %3040 = sbr.rel (%p3038) target = $region64
      $region63: #{up_forward.5} parent=59 // pred_region
        %s3041 = smul.u32 16, %s27
        %p3042 = scmp.lt.s32.totalorder %s26, 1
        %s3043 = scalar_select %p3042, %s26, 1
        %p3044 = scmp.lt.s32.totalorder %s3041, 15
        %s3045 = scalar_select %p3044, %s3041, 15
        %s3046 = smul.addr %s3045, 2
        %s3047 = smul.addr %s3043, 32
        %s3048 = sadd.s32 %s3046, %s3047
        %s3049 = smul.addr %s3048, 8
        %s3050 = scalar_lea.vmem %s7, %s3049
      $region64: #{up_forward.5} parent=59 // pred_fallthru
        _
      // Predicated region
      $region65: #{up_forward.5} parent=59 // pred_check
        %p3051 = pneg %p269
      $region66: #{up_forward.5} parent=59 // pred_check_branch
        %3053 = sbr.rel (%p3051) target = $region68
      $region67: #{up_forward.5} parent=59 // pred_region
        %s3054 = sadd.s32 %s26, %s27
        %p3055 = scmp.lt.s32.totalorder %s3054, 1
        %s3056 = scalar_select %p3055, %s3054, 1
        %s3057 = smul.addr %s3056, 2
        %s3058 = scalar_lea.vmem %s8, %s3057
      $region68: #{up_forward.5} parent=59 // pred_fallthru
        _
    $region60: #{up_forward.5} parent=5 // pred_fallthru
      _
  $region6: #{up_forward.5} parent=0 // loop_footer
    %s19 = sadd.s32 1, %s15
  $region7: #{up_forward.5} parent=0 // loop_footer_branch
    %14 = sbr.rel target = $region3
  $region8: #{up_forward.5} parent=0 // loop_exit
    _

</llo_original>
